<compile_context>
chip_gen: v7x
topology: tpu7x:2x2x1
jax: 0.10.0
libtpu: 0.0.40
codegen_flags: <defaults>
</compile_context>

<pallas_src>
import functools

import numpy as np
import jax
import jax.numpy as jnp
from jax import lax
from jax.experimental import pallas as pl
from jax.experimental.pallas import tpu as pltpu


# ---------------------------------------------------------------------------
# Wrapper-side weight packing: HWIO conv weights -> lane-dense band matrices.
# ---------------------------------------------------------------------------
def _band_matrix(w_hwio, W, out_pad=0):
    """(K,K,Cin,Cout) -> (K, W*Cin, (W+2*out_pad)*Cout) band matrices.

    band[r, wi*Cin+ci, wo*Cout+co] = w[r, wi - (wo - out_pad) + p, ci, co]
    (zero when the W-tap index is out of range or the virtual output column
    wo - out_pad lies outside the image).  This turns the W-axis of a SAME
    conv into a plain matmul on lane-dense (H, W*Cin) activation rows; the
    H-axis is handled by K row-shifted reads of an H-padded VMEM buffer.
    """
    K, _, Cin, Cout = w_hwio.shape
    p = (K - 1) // 2
    Wout = W + 2 * out_pad
    wi = np.arange(W)[:, None]                   # input column
    wo = np.arange(Wout)[None, :] - out_pad      # virtual output column
    s = wi - wo + p                              # W-axis tap index
    valid = (s >= 0) & (s < K) & (wo >= 0) & (wo < W)
    s_c = np.clip(s, 0, K - 1)
    band = w_hwio[:, s_c, :, :]                  # (K, W, Wout, Cin, Cout)
    band = band * jnp.asarray(valid[None, :, :, None, None],
                              dtype=w_hwio.dtype)
    band = jnp.transpose(band, (0, 1, 3, 2, 4))  # (K, wi, Cin, wo, Cout)
    return band.reshape(K, W * Cin, Wout * Cout)


def _band_bias(b, W, out_pad=0):
    Cout = b.shape[0]
    Wout = W + 2 * out_pad
    wo = np.arange(Wout) - out_pad
    m = jnp.asarray(((wo >= 0) & (wo < W)).astype(np.float32))
    return (jnp.tile(b, (Wout, 1)) * m[:, None]).reshape(1, Wout * Cout)


def _expand_conv_band(w_hwio, b, W):
    """Band for the AdaConv inner conv that emits, for every W-axis tap kw,
    the kw-shifted (zero at borders) output slab:
        out[h, kw*(W*C) + w*C + c] = conv(x)[h, w + kw - p, c]
    so the unfold() taps become aligned 128-lane slices inside the kernel."""
    K, C = w_hwio.shape[0], w_hwio.shape[3]
    p = (K - 1) // 2
    band_p = _band_matrix(w_hwio, W, out_pad=p)          # (K, W*Cin, (W+2p)*C)
    bias_p = _band_bias(b, W, out_pad=p)                 # (1, (W+2p)*C)
    WC = W * C
    band = jnp.concatenate(
        [band_p[:, :, kw * C: kw * C + WC] for kw in range(K)], axis=-1)
    bias = jnp.concatenate(
        [bias_p[:, kw * C: kw * C + WC] for kw in range(K)], axis=-1)
    return band, bias


def _expand_aw2(w_hwio, b, W, C):
    """1x1 adaptive-weight head, expanded so tap k's per-pixel weight map is
    pre-broadcast over the out_ch lanes:
        out[h, k*(W*C) + w*C + c] = (f @ w2 + b2)[h, w, k]   (same for all c).
    """
    nf, K2 = w_hwio.shape[2], w_hwio.shape[3]
    w2 = w_hwio.reshape(nf, K2)
    eye = jnp.eye(W, dtype=w2.dtype)
    exp = jnp.einsum('fk,iw->ifkw', w2, eye)             # (W_in, nf, K2, W_out)
    exp = jnp.broadcast_to(exp[..., None], (W, nf, K2, W, C))
    band = exp.reshape(W * nf, K2 * W * C)
    bias = jnp.broadcast_to(b[:, None, None], (K2, W, C)).reshape(1, K2 * W * C)
    return band, bias


def pack_conv_block_params(params, H, W):
    """Precompute (once, outside the kernel) all banded bf16 weights."""
    del H
    bf16 = jnp.bfloat16

    def pack_adaconv(p):
        aw0_w, aw0_b = p["aw0"]
        aw2_w, aw2_b = p["aw2"]
        mt_w, mt_b = p["mask_transform"]
        cv_w, cv_b = p["conv"]
        out_ch = cv_w.shape[3]
        aw2_band, aw2_bias = _expand_aw2(aw2_w, aw2_b, W, out_ch)
        cv_band, cv_bias = _expand_conv_band(cv_w, cv_b, W)
        return (_band_matrix(aw0_w, W).astype(bf16), _band_bias(aw0_b, W),
                aw2_band.astype(bf16), aw2_bias,
                _band_matrix(mt_w, W).astype(bf16), _band_bias(mt_b, W),
                cv_band.astype(bf16), cv_bias)

    rw, rb = params["conv_residual"]
    return ((_band_matrix(rw, W).astype(bf16), _band_bias(rb, W))
            + pack_adaconv(params["conv1"])
            + pack_adaconv(params["conv2"]))


# ---------------------------------------------------------------------------
# The fused Pallas kernel: whole conv_block forward for one batch element.
# ---------------------------------------------------------------------------
def _conv_block_kernel(x_ref, m_ref,
                       rw, rb,
                       a1_aw0_w, a1_aw0_b, a1_aw2_w, a1_aw2_b,
                       a1_mt_w, a1_mt_b, a1_cv_w, a1_cv_b,
                       a2_aw0_w, a2_aw0_b, a2_aw2_w, a2_aw2_b,
                       a2_mt_w, a2_mt_b, a2_cv_w, a2_cv_b,
                       ox_ref, om_ref,
                       mbuf1, mbuf2, xbuf1, xbuf2, ybuf, wexp,
                       *, H, W, K, out_ch):
    f32, bf16 = jnp.float32, jnp.bfloat16
    WC = W * out_ch
    p3 = (K - 1) // 2                 # pad of the 3x3 inner convs
    p5 = (2 * K - 1 - 1) // 2         # pad of the (2K-1)x(2K-1) mask convs

    def leaky(v):                     # elementwise kept in f32 (v5e-safe)
        return jnp.where(v >= 0, v, 0.01 * v)

    def band_conv(buf, w_ref, b_ref):
        """SAME conv of the activation staged in `buf` (H-padded, lane-dense):
        one wide bf16 MXU matmul per H-axis tap, f32 accumulation."""
        acc = jnp.zeros((H, w_ref.shape[-1]), f32)
        for r in range(w_ref.shape[0]):
            acc = acc + jnp.dot(buf[r:r + H, :].astype(bf16), w_ref[r],
                                preferred_element_type=f32)
        return acc + b_ref[...]

    def ada_combine(ybuf_ref, wexp_ref):
        """(adaptive_weight * unfold(y)).sum(taps): 9 aligned (H,128) FMAs."""
        acc = jnp.zeros((H, WC), f32)
        for kh in range(K):
            yslab = ybuf_ref[kh:kh + H, :]            # (H, K*W*C)
            for kw in range(K):
                k = kh * K + kw
                acc = acc + (wexp_ref[:, k * WC:(k + 1) * WC]
                             * yslab[:, kw * WC:(kw + 1) * WC])
        return acc

    # Zero the halo buffers once; interiors are overwritten below and the
    # border rows stay zero for the whole kernel invocation.
    mbuf1[...] = jnp.zeros_like(mbuf1)
    mbuf2[...] = jnp.zeros_like(mbuf2)
    xbuf1[...] = jnp.zeros_like(xbuf1)
    xbuf2[...] = jnp.zeros_like(xbuf2)
    ybuf[...] = jnp.zeros_like(ybuf)

    x_v = x_ref[0]                                    # (H, W*in_ch)       f32
    m_v = m_ref[0]                                    # (H, W*mask_in_ch)  f32

    # 1x1 residual conv (no halo needed).
    res = jnp.dot(x_v.astype(bf16), rw[0], preferred_element_type=f32) + rb[...]

    # --------------------------- AdaConv 1 ---------------------------------
    mbuf1[p5:p5 + H, :] = m_v
    f1 = leaky(band_conv(mbuf1, a1_aw0_w, a1_aw0_b))          # (H, W*n_feat)
    wexp[...] = (jnp.dot(f1.astype(bf16), a1_aw2_w[...],
                         preferred_element_type=f32) + a1_aw2_b[...])
    m1 = leaky(band_conv(mbuf1, a1_mt_w, a1_mt_b))            # act by conv_block
    xbuf1[p3:p3 + H, :] = x_v
    ybuf[p3:p3 + H, :] = band_conv(xbuf1, a1_cv_w, a1_cv_b)   # expanded y1
    x1 = leaky(ada_combine(ybuf, wexp))                       # act by conv_block

    # --------------------------- AdaConv 2 ---------------------------------
    mbuf2[p5:p5 + H, :] = m1
    f2 = leaky(band_conv(mbuf2, a2_aw0_w, a2_aw0_b))
    wexp[...] = (jnp.dot(f2.astype(bf16), a2_aw2_w[...],
                         preferred_element_type=f32) + a2_aw2_b[...])
    m2 = leaky(band_conv(mbuf2, a2_mt_w, a2_mt_b))
    xbuf2[p3:p3 + H, :] = x1
    ybuf[p3:p3 + H, :] = band_conv(xbuf2, a2_cv_w, a2_cv_b)   # expanded y2
    x2 = leaky(ada_combine(ybuf, wexp)) + res                 # fused residual

    ox_ref[...] = x2.reshape(1, H, WC).astype(ox_ref.dtype)
    om_ref[...] = m2.reshape(1, H, m2.shape[-1]).astype(om_ref.dtype)


# ---------------------------------------------------------------------------
# Wrapper: NCHW in/out, one pallas_call, grid over batch.
# ---------------------------------------------------------------------------
def conv_block_apply(packed, x_nchw, mask_nchw, kernel_size=3):
    B, in_ch, H, W = x_nchw.shape
    mask_in_ch = mask_nchw.shape[1]
    K = kernel_size
    out_ch = packed[0].shape[-1] // W           # residual band (1,W*in,W*out)
    mask_out_ch = packed[6].shape[-1] // W      # conv1 mask_transform band
    p3 = (K - 1) // 2
    p5 = (2 * K - 1 - 1) // 2

    # NCHW -> lane-dense (B, H, W*C); layout plumbing stays outside the kernel.
    x2d = jnp.transpose(x_nchw, (0, 2, 3, 1)).reshape(B, H, W * in_ch)
    m2d = jnp.transpose(mask_nchw, (0, 2, 3, 1)).reshape(B, H, W * mask_in_ch)

    def act_spec(arr):
        return pl.BlockSpec((1,) + arr.shape[1:], lambda b: (b, 0, 0))

    def w_spec(arr):
        return pl.BlockSpec(tuple(arr.shape), lambda b, n=arr.ndim: (0,) * n)

    in_specs = [act_spec(x2d), act_spec(m2d)] + [w_spec(a) for a in packed]

    scratch = [
        pltpu.VMEM((H + 2 * p5, W * mask_in_ch), jnp.float32),   # padded mask
        pltpu.VMEM((H + 2 * p5, W * mask_out_ch), jnp.float32),  # padded m1
        pltpu.VMEM((H + 2 * p3, W * in_ch), jnp.float32),        # padded x
        pltpu.VMEM((H + 2 * p3, W * out_ch), jnp.float32),       # padded x1
        pltpu.VMEM((H + 2 * p3, K * W * out_ch), jnp.float32),   # expanded y
        pltpu.VMEM((H, K * K * W * out_ch), jnp.float32),        # expanded wada
    ]

    kern = functools.partial(_conv_block_kernel, H=H, W=W, K=K, out_ch=out_ch)

    ox2d, om2d = pl.pallas_call(
        kern,
        out_shape=(jax.ShapeDtypeStruct((B, H, W * out_ch), jnp.float32),
                   jax.ShapeDtypeStruct((B, H, W * mask_out_ch), jnp.float32)),
        grid=(B,),
        in_specs=in_specs,
        out_specs=(pl.BlockSpec((1, H, W * out_ch), lambda b: (b, 0, 0)),
                   pl.BlockSpec((1, H, W * mask_out_ch), lambda b: (b, 0, 0))),
        scratch_shapes=scratch,
        compiler_params=pltpu.CompilerParams(
            dimension_semantics=("parallel",)),   # one image per TC on v7x
    )(x2d, m2d, *packed)

    x_out = jnp.transpose(ox2d.reshape(B, H, W, out_ch), (0, 3, 1, 2))
    m_out = jnp.transpose(om2d.reshape(B, H, W, mask_out_ch), (0, 3, 1, 2))
    return x_out, m_out


# ---------------------------------------------------------------------------
# Parameter construction (deterministic, synthetic — matches module shapes)
# ---------------------------------------------------------------------------
def _init_conv(key, k, cin, cout, scale=0.1):
    kw_, kb_ = jax.random.split(key)
    w = scale * jax.random.normal(kw_, (k, k, cin, cout), jnp.float32)
    b = scale * jax.random.normal(kb_, (cout,), jnp.float32)
    return w, b


def init_adaconv(key, in_ch, out_ch, mask_in_ch, mask_out_ch,
                 kernel_size=3, n_feat=6):
    k0, k1, k2, k3 = jax.random.split(key, 4)
    # groups = out_ch // groups_channels == 1 in this module
    return {
        "aw0": _init_conv(k0, 2 * kernel_size - 1, mask_in_ch, n_feat),
        "aw2": _init_conv(k1, 1, n_feat, kernel_size ** 2),
        "mask_transform": _init_conv(k2, 2 * kernel_size - 1, mask_in_ch,
                                     mask_out_ch),
        "conv": _init_conv(k3, kernel_size, in_ch, out_ch),
    }


def init_conv_block(key, in_ch, out_ch, mask_in_ch, mask_out_ch):
    k0, k1, k2 = jax.random.split(key, 3)
    return {
        "conv1": init_adaconv(k0, in_ch, out_ch, mask_in_ch, mask_out_ch),
        "conv2": init_adaconv(k1, out_ch, out_ch, mask_out_ch, mask_out_ch),
        "conv_residual": _init_conv(k2, 1, in_ch, out_ch),
    }


# ---------------------------------------------------------------------------
# Pure-JAX reference (lax.conv) for the in-script correctness check
# ---------------------------------------------------------------------------
def _ref_conv(x, w, b, leaky=False):
    out = lax.conv_general_dilated(
        x, w, (1, 1), "SAME",
        dimension_numbers=("NHWC", "HWIO", "NHWC")) + b
    return jnp.where(out >= 0, out, 0.01 * out) if leaky else out


def _ref_ada(y, wada, res=None, leaky=False):
    B, H, W, C = y.shape
    K = 3
    yp = jnp.pad(y, ((0, 0), (1, 1), (1, 1), (0, 0)))
    acc = jnp.zeros_like(y)
    for kh in range(K):
        for kw in range(K):
            k = kh * K + kw
            acc = acc + yp[:, kh:kh + H, kw:kw + W, :] * wada[:, :, :, k:k + 1]
    if leaky:
        acc = jnp.where(acc >= 0, acc, 0.01 * acc)
    if res is not None:
        acc = acc + res
    return acc


def _ref_adaconv(p, x, mask, act=False, res=None):
    f = _ref_conv(mask, *p["aw0"], leaky=True)
    wada = _ref_conv(f, *p["aw2"])
    y = _ref_conv(x, *p["conv"])
    return (_ref_ada(y, wada, res=res, leaky=act),
            _ref_conv(mask, *p["mask_transform"], leaky=act))


def _ref_block(params, x_nchw, mask_nchw):
    x = jnp.transpose(x_nchw, (0, 2, 3, 1))
    mask = jnp.transpose(mask_nchw, (0, 2, 3, 1))
    res = _ref_conv(x, *params["conv_residual"])
    x1, m1 = _ref_adaconv(params["conv1"], x, mask, act=True)
    x2, m2 = _ref_adaconv(params["conv2"], x1, m1, act=True, res=res)
    return jnp.transpose(x2, (0, 3, 1, 2)), jnp.transpose(m2, (0, 3, 1, 2))


# ---------------------------------------------------------------------------
if __name__ == "__main__":
    B, in_ch, out_ch = 2, 4, 8
    mask_in_ch, mask_out_ch = 2, 4
    H = W = 16

    key = jax.random.PRNGKey(0)
    kx, km, kp = jax.random.split(key, 3)
    x = jax.random.normal(kx, (B, in_ch, H, W), jnp.float32)       # NCHW input
    mask = jax.random.normal(km, (B, mask_in_ch, H, W), jnp.float32)
    params = init_conv_block(kp, in_ch, out_ch, mask_in_ch, mask_out_ch)

    packed = pack_conv_block_params(params, H, W)                  # once, host
    fwd = jax.jit(functools.partial(conv_block_apply, packed))
    out_x, out_mask = fwd(x, mask)
    jax.block_until_ready((out_x, out_mask))

    assert out_x.shape == (B, out_ch, H, W)
    assert out_mask.shape == (B, mask_out_ch, H, W)

    ref_x, ref_mask = _ref_block(params, x, mask)
    if not (jnp.allclose(out_x, ref_x, rtol=5e-2, atol=5e-2) and
            jnp.allclose(out_mask, ref_mask, rtol=5e-2, atol=5e-2)):
        raise AssertionError("Pallas conv_block output mismatch vs reference")

    print("KERNEL_OK")
</pallas_src>

<mosaic_0001>
module attributes {stable_mosaic.version = 11 : i64} {
  func.func @_conv_block_kernel(%arg0: i32, %arg1: memref<1x16x64xf32, #tpu.memory_space<vmem>>, %arg2: memref<1x16x32xf32, #tpu.memory_space<vmem>>, %arg3: memref<1x64x128xbf16, #tpu.memory_space<vmem>>, %arg4: memref<1x128xf32, #tpu.memory_space<vmem>>, %arg5: memref<5x32x96xbf16, #tpu.memory_space<vmem>>, %arg6: memref<1x96xf32, #tpu.memory_space<vmem>>, %arg7: memref<96x1152xbf16, #tpu.memory_space<vmem>>, %arg8: memref<1x1152xf32, #tpu.memory_space<vmem>>, %arg9: memref<5x32x64xbf16, #tpu.memory_space<vmem>>, %arg10: memref<1x64xf32, #tpu.memory_space<vmem>>, %arg11: memref<3x64x384xbf16, #tpu.memory_space<vmem>>, %arg12: memref<1x384xf32, #tpu.memory_space<vmem>>, %arg13: memref<5x64x96xbf16, #tpu.memory_space<vmem>>, %arg14: memref<1x96xf32, #tpu.memory_space<vmem>>, %arg15: memref<96x1152xbf16, #tpu.memory_space<vmem>>, %arg16: memref<1x1152xf32, #tpu.memory_space<vmem>>, %arg17: memref<5x64x64xbf16, #tpu.memory_space<vmem>>, %arg18: memref<1x64xf32, #tpu.memory_space<vmem>>, %arg19: memref<3x128x384xbf16, #tpu.memory_space<vmem>>, %arg20: memref<1x384xf32, #tpu.memory_space<vmem>>, %arg21: memref<1x16x128xf32, #tpu.memory_space<vmem>>, %arg22: memref<1x16x64xf32, #tpu.memory_space<vmem>>, %arg23: memref<20x32xf32, #tpu.memory_space<vmem>>, %arg24: memref<20x64xf32, #tpu.memory_space<vmem>>, %arg25: memref<18x64xf32, #tpu.memory_space<vmem>>, %arg26: memref<18x128xf32, #tpu.memory_space<vmem>>, %arg27: memref<18x384xf32, #tpu.memory_space<vmem>>, %arg28: memref<16x1152xf32, #tpu.memory_space<vmem>>) attributes {dimension_semantics = [#tpu.dimension_semantics<parallel>], iteration_bounds = array<i64: 2>, scalar_prefetch = 0 : i64, scratch_operands = 6 : i64, tpu.core_type = #tpu.core_type<tc>, window_params = [{transform_indices = @transform_0, window_bounds = array<i64: 1, 16, 64>}, {transform_indices = @transform_1, window_bounds = array<i64: 1, 16, 32>}, {pipeline_mode = #tpu.pipeline_mode<synchronous>, transform_indices = @transform_2, window_bounds = array<i64: 1, 64, 128>}, {pipeline_mode = #tpu.pipeline_mode<synchronous>, transform_indices = @transform_3, window_bounds = array<i64: 1, 128>}, {pipeline_mode = #tpu.pipeline_mode<synchronous>, transform_indices = @transform_4, window_bounds = array<i64: 5, 32, 96>}, {pipeline_mode = #tpu.pipeline_mode<synchronous>, transform_indices = @transform_5, window_bounds = array<i64: 1, 96>}, {pipeline_mode = #tpu.pipeline_mode<synchronous>, transform_indices = @transform_6, window_bounds = array<i64: 96, 1152>}, {pipeline_mode = #tpu.pipeline_mode<synchronous>, transform_indices = @transform_7, window_bounds = array<i64: 1, 1152>}, {pipeline_mode = #tpu.pipeline_mode<synchronous>, transform_indices = @transform_8, window_bounds = array<i64: 5, 32, 64>}, {pipeline_mode = #tpu.pipeline_mode<synchronous>, transform_indices = @transform_9, window_bounds = array<i64: 1, 64>}, {pipeline_mode = #tpu.pipeline_mode<synchronous>, transform_indices = @transform_10, window_bounds = array<i64: 3, 64, 384>}, {pipeline_mode = #tpu.pipeline_mode<synchronous>, transform_indices = @transform_11, window_bounds = array<i64: 1, 384>}, {pipeline_mode = #tpu.pipeline_mode<synchronous>, transform_indices = @transform_12, window_bounds = array<i64: 5, 64, 96>}, {pipeline_mode = #tpu.pipeline_mode<synchronous>, transform_indices = @transform_13, window_bounds = array<i64: 1, 96>}, {pipeline_mode = #tpu.pipeline_mode<synchronous>, transform_indices = @transform_14, window_bounds = array<i64: 96, 1152>}, {pipeline_mode = #tpu.pipeline_mode<synchronous>, transform_indices = @transform_15, window_bounds = array<i64: 1, 1152>}, {pipeline_mode = #tpu.pipeline_mode<synchronous>, transform_indices = @transform_16, window_bounds = array<i64: 5, 64, 64>}, {pipeline_mode = #tpu.pipeline_mode<synchronous>, transform_indices = @transform_17, window_bounds = array<i64: 1, 64>}, {pipeline_mode = #tpu.pipeline_mode<synchronous>, transform_indices = @transform_18, window_bounds = array<i64: 3, 128, 384>}, {pipeline_mode = #tpu.pipeline_mode<synchronous>, transform_indices = @transform_19, window_bounds = array<i64: 1, 384>}, {transform_indices = @transform_20, window_bounds = array<i64: 1, 16, 128>}, {transform_indices = @transform_21, window_bounds = array<i64: 1, 16, 64>}]} {
    %cst = arith.constant 0.000000e+00 : f32
    %0 = vector.broadcast %cst : f32 to vector<20x32xf32>
    %c0 = arith.constant 0 : index
    %c0_0 = arith.constant 0 : index
    %1 = vector.load %arg23[%c0, %c0_0] : memref<20x32xf32, #tpu.memory_space<vmem>>, vector<20x32xf32>
    tpu.vector_store %arg23[%c0, %c0_0], %0 {strides = array<i32>} : memref<20x32xf32, #tpu.memory_space<vmem>>, vector<20x32xf32>,
    %cst_1 = arith.constant 0.000000e+00 : f32
    %2 = vector.broadcast %cst_1 : f32 to vector<20x64xf32>
    %c0_2 = arith.constant 0 : index
    %c0_3 = arith.constant 0 : index
    %3 = vector.load %arg24[%c0_2, %c0_3] : memref<20x64xf32, #tpu.memory_space<vmem>>, vector<20x64xf32>
    tpu.vector_store %arg24[%c0_2, %c0_3], %2 {strides = array<i32>} : memref<20x64xf32, #tpu.memory_space<vmem>>, vector<20x64xf32>,
    %cst_4 = arith.constant 0.000000e+00 : f32
    %4 = vector.broadcast %cst_4 : f32 to vector<18x64xf32>
    %c0_5 = arith.constant 0 : index
    %c0_6 = arith.constant 0 : index
    %5 = vector.load %arg25[%c0_5, %c0_6] : memref<18x64xf32, #tpu.memory_space<vmem>>, vector<18x64xf32>
    tpu.vector_store %arg25[%c0_5, %c0_6], %4 {strides = array<i32>} : memref<18x64xf32, #tpu.memory_space<vmem>>, vector<18x64xf32>,
    %cst_7 = arith.constant 0.000000e+00 : f32
    %6 = vector.broadcast %cst_7 : f32 to vector<18x128xf32>
    %c0_8 = arith.constant 0 : index
    %c0_9 = arith.constant 0 : index
    %7 = vector.load %arg26[%c0_8, %c0_9] : memref<18x128xf32, #tpu.memory_space<vmem>>, vector<18x128xf32>
    tpu.vector_store %arg26[%c0_8, %c0_9], %6 {strides = array<i32>} : memref<18x128xf32, #tpu.memory_space<vmem>>, vector<18x128xf32>,
    %cst_10 = arith.constant 0.000000e+00 : f32
    %8 = vector.broadcast %cst_10 : f32 to vector<18x384xf32>
    %c0_11 = arith.constant 0 : index
    %c0_12 = arith.constant 0 : index
    %9 = vector.load %arg27[%c0_11, %c0_12] : memref<18x384xf32, #tpu.memory_space<vmem>>, vector<18x384xf32>
    tpu.vector_store %arg27[%c0_11, %c0_12], %8 {strides = array<i32>} : memref<18x384xf32, #tpu.memory_space<vmem>>, vector<18x384xf32>,
    %c0_13 = arith.constant 0 : index
    %c0_14 = arith.constant 0 : index
    %c0_15 = arith.constant 0 : index
    %10 = vector.load %arg1[%c0_13, %c0_14, %c0_15] : memref<1x16x64xf32, #tpu.memory_space<vmem>>, vector<1x16x64xf32>
    %11 = vector.shape_cast %10 : vector<1x16x64xf32> to vector<16x64xf32>
    %c0_16 = arith.constant 0 : index
    %c0_17 = arith.constant 0 : index
    %c0_18 = arith.constant 0 : index
    %12 = vector.load %arg2[%c0_16, %c0_17, %c0_18] : memref<1x16x32xf32, #tpu.memory_space<vmem>>, vector<1x16x32xf32>
    %13 = vector.shape_cast %12 : vector<1x16x32xf32> to vector<16x32xf32>
    %14 = arith.truncf %11 : vector<16x64xf32> to vector<16x64xbf16>
    %c0_19 = arith.constant 0 : index
    %c0_20 = arith.constant 0 : index
    %c0_21 = arith.constant 0 : index
    %15 = vector.load %arg3[%c0_19, %c0_20, %c0_21] : memref<1x64x128xbf16, #tpu.memory_space<vmem>>, vector<1x64x128xbf16>
    %16 = vector.shape_cast %15 : vector<1x64x128xbf16> to vector<64x128xbf16>
    %cst_22 = arith.constant dense<0.000000e+00> : vector<16x128xf32>
    %17 = tpu.matmul %14, %16, %cst_22 {dimension_numbers = #tpu.dot_dimension_numbers<[1], [0], [0], [1], [0, 0, 1, 1], [], []>} : vector<16x64xbf16>, vector<64x128xbf16>, vector<16x128xf32> -> vector<16x128xf32>
    %c0_23 = arith.constant 0 : index
    %c0_24 = arith.constant 0 : index
    %18 = vector.load %arg4[%c0_23, %c0_24] : memref<1x128xf32, #tpu.memory_space<vmem>>, vector<1x128xf32>
    %19 = vector.broadcast %18 : vector<1x128xf32> to vector<16x128xf32>
    %20 = arith.addf %17, %19 : vector<16x128xf32>
    %c2 = arith.constant 2 : index
    %c0_25 = arith.constant 0 : index
    %21 = vector.load %arg23[%c2, %c0_25] : memref<20x32xf32, #tpu.memory_space<vmem>>, vector<16x32xf32>
    tpu.vector_store %arg23[%c2, %c0_25], %13 {strides = array<i32>} : memref<20x32xf32, #tpu.memory_space<vmem>>, vector<16x32xf32>,
    %cst_26 = arith.constant 0.000000e+00 : f32
    %22 = vector.broadcast %cst_26 : f32 to vector<16x96xf32>
    %c0_27 = arith.constant 0 : index
    %c0_28 = arith.constant 0 : index
    %23 = vector.load %arg23[%c0_27, %c0_28] : memref<20x32xf32, #tpu.memory_space<vmem>>, vector<16x32xf32>
    %24 = arith.truncf %23 : vector<16x32xf32> to vector<16x32xbf16>
    %c0_29 = arith.constant 0 : index
    %c0_30 = arith.constant 0 : index
    %c0_31 = arith.constant 0 : index
    %25 = vector.load %arg5[%c0_29, %c0_30, %c0_31] : memref<5x32x96xbf16, #tpu.memory_space<vmem>>, vector<1x32x96xbf16>
    %26 = vector.shape_cast %25 : vector<1x32x96xbf16> to vector<32x96xbf16>
    %cst_32 = arith.constant dense<0.000000e+00> : vector<16x96xf32>
    %27 = tpu.matmul %24, %26, %cst_32 {dimension_numbers = #tpu.dot_dimension_numbers<[1], [0], [0], [1], [0, 0, 1, 1], [], []>} : vector<16x32xbf16>, vector<32x96xbf16>, vector<16x96xf32> -> vector<16x96xf32>
    %28 = arith.addf %22, %27 : vector<16x96xf32>
    %c1 = arith.constant 1 : index
    %c0_33 = arith.constant 0 : index
    %29 = vector.load %arg23[%c1, %c0_33] : memref<20x32xf32, #tpu.memory_space<vmem>>, vector<16x32xf32>
    %30 = arith.truncf %29 : vector<16x32xf32> to vector<16x32xbf16>
    %c1_34 = arith.constant 1 : index
    %c0_35 = arith.constant 0 : index
    %c0_36 = arith.constant 0 : index
    %31 = vector.load %arg5[%c1_34, %c0_35, %c0_36] : memref<5x32x96xbf16, #tpu.memory_space<vmem>>, vector<1x32x96xbf16>
    %32 = vector.shape_cast %31 : vector<1x32x96xbf16> to vector<32x96xbf16>
    %cst_37 = arith.constant dense<0.000000e+00> : vector<16x96xf32>
    %33 = tpu.matmul %30, %32, %cst_37 {dimension_numbers = #tpu.dot_dimension_numbers<[1], [0], [0], [1], [0, 0, 1, 1], [], []>} : vector<16x32xbf16>, vector<32x96xbf16>, vector<16x96xf32> -> vector<16x96xf32>
    %34 = arith.addf %28, %33 : vector<16x96xf32>
    %c2_38 = arith.constant 2 : index
    %c0_39 = arith.constant 0 : index
    %35 = vector.load %arg23[%c2_38, %c0_39] : memref<20x32xf32, #tpu.memory_space<vmem>>, vector<16x32xf32>
    %36 = arith.truncf %35 : vector<16x32xf32> to vector<16x32xbf16>
    %c2_40 = arith.constant 2 : index
    %c0_41 = arith.constant 0 : index
    %c0_42 = arith.constant 0 : index
    %37 = vector.load %arg5[%c2_40, %c0_41, %c0_42] : memref<5x32x96xbf16, #tpu.memory_space<vmem>>, vector<1x32x96xbf16>
    %38 = vector.shape_cast %37 : vector<1x32x96xbf16> to vector<32x96xbf16>
    %cst_43 = arith.constant dense<0.000000e+00> : vector<16x96xf32>
    %39 = tpu.matmul %36, %38, %cst_43 {dimension_numbers = #tpu.dot_dimension_numbers<[1], [0], [0], [1], [0, 0, 1, 1], [], []>} : vector<16x32xbf16>, vector<32x96xbf16>, vector<16x96xf32> -> vector<16x96xf32>
    %40 = arith.addf %34, %39 : vector<16x96xf32>
    %c3 = arith.constant 3 : index
    %c0_44 = arith.constant 0 : index
    %41 = vector.load %arg23[%c3, %c0_44] : memref<20x32xf32, #tpu.memory_space<vmem>>, vector<16x32xf32>
    %42 = arith.truncf %41 : vector<16x32xf32> to vector<16x32xbf16>
    %c3_45 = arith.constant 3 : index
    %c0_46 = arith.constant 0 : index
    %c0_47 = arith.constant 0 : index
    %43 = vector.load %arg5[%c3_45, %c0_46, %c0_47] : memref<5x32x96xbf16, #tpu.memory_space<vmem>>, vector<1x32x96xbf16>
    %44 = vector.shape_cast %43 : vector<1x32x96xbf16> to vector<32x96xbf16>
    %cst_48 = arith.constant dense<0.000000e+00> : vector<16x96xf32>
    %45 = tpu.matmul %42, %44, %cst_48 {dimension_numbers = #tpu.dot_dimension_numbers<[1], [0], [0], [1], [0, 0, 1, 1], [], []>} : vector<16x32xbf16>, vector<32x96xbf16>, vector<16x96xf32> -> vector<16x96xf32>
    %46 = arith.addf %40, %45 : vector<16x96xf32>
    %c4 = arith.constant 4 : index
    %c0_49 = arith.constant 0 : index
    %47 = vector.load %arg23[%c4, %c0_49] : memref<20x32xf32, #tpu.memory_space<vmem>>, vector<16x32xf32>
    %48 = arith.truncf %47 : vector<16x32xf32> to vector<16x32xbf16>
    %c4_50 = arith.constant 4 : index
    %c0_51 = arith.constant 0 : index
    %c0_52 = arith.constant 0 : index
    %49 = vector.load %arg5[%c4_50, %c0_51, %c0_52] : memref<5x32x96xbf16, #tpu.memory_space<vmem>>, vector<1x32x96xbf16>
    %50 = vector.shape_cast %49 : vector<1x32x96xbf16> to vector<32x96xbf16>
    %cst_53 = arith.constant dense<0.000000e+00> : vector<16x96xf32>
    %51 = tpu.matmul %48, %50, %cst_53 {dimension_numbers = #tpu.dot_dimension_numbers<[1], [0], [0], [1], [0, 0, 1, 1], [], []>} : vector<16x32xbf16>, vector<32x96xbf16>, vector<16x96xf32> -> vector<16x96xf32>
    %52 = arith.addf %46, %51 : vector<16x96xf32>
    %c0_54 = arith.constant 0 : index
    %c0_55 = arith.constant 0 : index
    %53 = vector.load %arg6[%c0_54, %c0_55] : memref<1x96xf32, #tpu.memory_space<vmem>>, vector<1x96xf32>
    %54 = vector.broadcast %53 : vector<1x96xf32> to vector<16x96xf32>
    %55 = arith.addf %52, %54 : vector<16x96xf32>
    %cst_56 = arith.constant 0.000000e+00 : f32
    %56 = vector.broadcast %cst_56 : f32 to vector<16x96xf32>
    %57 = arith.cmpf oge, %55, %56 : vector<16x96xf32>
    %cst_57 = arith.constant 0.00999999977 : f32
    %58 = vector.broadcast %cst_57 : f32 to vector<16x96xf32>
    %59 = arith.mulf %58, %55 : vector<16x96xf32>
    %60 = arith.select %57, %55, %59 : vector<16x96xi1>, vector<16x96xf32>
    %61 = arith.truncf %60 : vector<16x96xf32> to vector<16x96xbf16>
    %c0_58 = arith.constant 0 : index
    %c0_59 = arith.constant 0 : index
    %62 = vector.load %arg7[%c0_58, %c0_59] : memref<96x1152xbf16, #tpu.memory_space<vmem>>, vector<96x1152xbf16>
    %cst_60 = arith.constant dense<0.000000e+00> : vector<16x1152xf32>
    %63 = tpu.matmul %61, %62, %cst_60 {dimension_numbers = #tpu.dot_dimension_numbers<[1], [0], [0], [1], [0, 0, 1, 1], [], []>} : vector<16x96xbf16>, vector<96x1152xbf16>, vector<16x1152xf32> -> vector<16x1152xf32>
    %c0_61 = arith.constant 0 : index
    %c0_62 = arith.constant 0 : index
    %64 = vector.load %arg8[%c0_61, %c0_62] : memref<1x1152xf32, #tpu.memory_space<vmem>>, vector<1x1152xf32>
    %65 = vector.broadcast %64 : vector<1x1152xf32> to vector<16x1152xf32>
    %66 = arith.addf %63, %65 : vector<16x1152xf32>
    %c0_63 = arith.constant 0 : index
    %c0_64 = arith.constant 0 : index
    %67 = vector.load %arg28[%c0_63, %c0_64] : memref<16x1152xf32, #tpu.memory_space<vmem>>, vector<16x1152xf32>
    tpu.vector_store %arg28[%c0_63, %c0_64], %66 {strides = array<i32>} : memref<16x1152xf32, #tpu.memory_space<vmem>>, vector<16x1152xf32>,
    %cst_65 = arith.constant 0.000000e+00 : f32
    %68 = vector.broadcast %cst_65 : f32 to vector<16x64xf32>
    %c0_66 = arith.constant 0 : index
    %c0_67 = arith.constant 0 : index
    %69 = vector.load %arg23[%c0_66, %c0_67] : memref<20x32xf32, #tpu.memory_space<vmem>>, vector<16x32xf32>
    %70 = arith.truncf %69 : vector<16x32xf32> to vector<16x32xbf16>
    %c0_68 = arith.constant 0 : index
    %c0_69 = arith.constant 0 : index
    %c0_70 = arith.constant 0 : index
    %71 = vector.load %arg9[%c0_68, %c0_69, %c0_70] : memref<5x32x64xbf16, #tpu.memory_space<vmem>>, vector<1x32x64xbf16>
    %72 = vector.shape_cast %71 : vector<1x32x64xbf16> to vector<32x64xbf16>
    %cst_71 = arith.constant dense<0.000000e+00> : vector<16x64xf32>
    %73 = tpu.matmul %70, %72, %cst_71 {dimension_numbers = #tpu.dot_dimension_numbers<[1], [0], [0], [1], [0, 0, 1, 1], [], []>} : vector<16x32xbf16>, vector<32x64xbf16>, vector<16x64xf32> -> vector<16x64xf32>
    %74 = arith.addf %68, %73 : vector<16x64xf32>
    %c1_72 = arith.constant 1 : index
    %c0_73 = arith.constant 0 : index
    %75 = vector.load %arg23[%c1_72, %c0_73] : memref<20x32xf32, #tpu.memory_space<vmem>>, vector<16x32xf32>
    %76 = arith.truncf %75 : vector<16x32xf32> to vector<16x32xbf16>
    %c1_74 = arith.constant 1 : index
    %c0_75 = arith.constant 0 : index
    %c0_76 = arith.constant 0 : index
    %77 = vector.load %arg9[%c1_74, %c0_75, %c0_76] : memref<5x32x64xbf16, #tpu.memory_space<vmem>>, vector<1x32x64xbf16>
    %78 = vector.shape_cast %77 : vector<1x32x64xbf16> to vector<32x64xbf16>
    %cst_77 = arith.constant dense<0.000000e+00> : vector<16x64xf32>
    %79 = tpu.matmul %76, %78, %cst_77 {dimension_numbers = #tpu.dot_dimension_numbers<[1], [0], [0], [1], [0, 0, 1, 1], [], []>} : vector<16x32xbf16>, vector<32x64xbf16>, vector<16x64xf32> -> vector<16x64xf32>
    %80 = arith.addf %74, %79 : vector<16x64xf32>
    %c2_78 = arith.constant 2 : index
    %c0_79 = arith.constant 0 : index
    %81 = vector.load %arg23[%c2_78, %c0_79] : memref<20x32xf32, #tpu.memory_space<vmem>>, vector<16x32xf32>
    %82 = arith.truncf %81 : vector<16x32xf32> to vector<16x32xbf16>
    %c2_80 = arith.constant 2 : index
    %c0_81 = arith.constant 0 : index
    %c0_82 = arith.constant 0 : index
    %83 = vector.load %arg9[%c2_80, %c0_81, %c0_82] : memref<5x32x64xbf16, #tpu.memory_space<vmem>>, vector<1x32x64xbf16>
    %84 = vector.shape_cast %83 : vector<1x32x64xbf16> to vector<32x64xbf16>
    %cst_83 = arith.constant dense<0.000000e+00> : vector<16x64xf32>
    %85 = tpu.matmul %82, %84, %cst_83 {dimension_numbers = #tpu.dot_dimension_numbers<[1], [0], [0], [1], [0, 0, 1, 1], [], []>} : vector<16x32xbf16>, vector<32x64xbf16>, vector<16x64xf32> -> vector<16x64xf32>
    %86 = arith.addf %80, %85 : vector<16x64xf32>
    %c3_84 = arith.constant 3 : index
    %c0_85 = arith.constant 0 : index
    %87 = vector.load %arg23[%c3_84, %c0_85] : memref<20x32xf32, #tpu.memory_space<vmem>>, vector<16x32xf32>
    %88 = arith.truncf %87 : vector<16x32xf32> to vector<16x32xbf16>
    %c3_86 = arith.constant 3 : index
    %c0_87 = arith.constant 0 : index
    %c0_88 = arith.constant 0 : index
    %89 = vector.load %arg9[%c3_86, %c0_87, %c0_88] : memref<5x32x64xbf16, #tpu.memory_space<vmem>>, vector<1x32x64xbf16>
    %90 = vector.shape_cast %89 : vector<1x32x64xbf16> to vector<32x64xbf16>
    %cst_89 = arith.constant dense<0.000000e+00> : vector<16x64xf32>
    %91 = tpu.matmul %88, %90, %cst_89 {dimension_numbers = #tpu.dot_dimension_numbers<[1], [0], [0], [1], [0, 0, 1, 1], [], []>} : vector<16x32xbf16>, vector<32x64xbf16>, vector<16x64xf32> -> vector<16x64xf32>
    %92 = arith.addf %86, %91 : vector<16x64xf32>
    %c4_90 = arith.constant 4 : index
    %c0_91 = arith.constant 0 : index
    %93 = vector.load %arg23[%c4_90, %c0_91] : memref<20x32xf32, #tpu.memory_space<vmem>>, vector<16x32xf32>
    %94 = arith.truncf %93 : vector<16x32xf32> to vector<16x32xbf16>
    %c4_92 = arith.constant 4 : index
    %c0_93 = arith.constant 0 : index
    %c0_94 = arith.constant 0 : index
    %95 = vector.load %arg9[%c4_92, %c0_93, %c0_94] : memref<5x32x64xbf16, #tpu.memory_space<vmem>>, vector<1x32x64xbf16>
    %96 = vector.shape_cast %95 : vector<1x32x64xbf16> to vector<32x64xbf16>
    %cst_95 = arith.constant dense<0.000000e+00> : vector<16x64xf32>
    %97 = tpu.matmul %94, %96, %cst_95 {dimension_numbers = #tpu.dot_dimension_numbers<[1], [0], [0], [1], [0, 0, 1, 1], [], []>} : vector<16x32xbf16>, vector<32x64xbf16>, vector<16x64xf32> -> vector<16x64xf32>
    %98 = arith.addf %92, %97 : vector<16x64xf32>
    %c0_96 = arith.constant 0 : index
    %c0_97 = arith.constant 0 : index
    %99 = vector.load %arg10[%c0_96, %c0_97] : memref<1x64xf32, #tpu.memory_space<vmem>>, vector<1x64xf32>
    %100 = vector.broadcast %99 : vector<1x64xf32> to vector<16x64xf32>
    %101 = arith.addf %98, %100 : vector<16x64xf32>
    %cst_98 = arith.constant 0.000000e+00 : f32
    %102 = vector.broadcast %cst_98 : f32 to vector<16x64xf32>
    %103 = arith.cmpf oge, %101, %102 : vector<16x64xf32>
    %cst_99 = arith.constant 0.00999999977 : f32
    %104 = vector.broadcast %cst_99 : f32 to vector<16x64xf32>
    %105 = arith.mulf %104, %101 : vector<16x64xf32>
    %106 = arith.select %103, %101, %105 : vector<16x64xi1>, vector<16x64xf32>
    %c1_100 = arith.constant 1 : index
    %c0_101 = arith.constant 0 : index
    %107 = vector.load %arg25[%c1_100, %c0_101] : memref<18x64xf32, #tpu.memory_space<vmem>>, vector<16x64xf32>
    tpu.vector_store %arg25[%c1_100, %c0_101], %11 {strides = array<i32>} : memref<18x64xf32, #tpu.memory_space<vmem>>, vector<16x64xf32>,
    %cst_102 = arith.constant 0.000000e+00 : f32
    %108 = vector.broadcast %cst_102 : f32 to vector<16x384xf32>
    %c0_103 = arith.constant 0 : index
    %c0_104 = arith.constant 0 : index
    %109 = vector.load %arg25[%c0_103, %c0_104] : memref<18x64xf32, #tpu.memory_space<vmem>>, vector<16x64xf32>
    %110 = arith.truncf %109 : vector<16x64xf32> to vector<16x64xbf16>
    %c0_105 = arith.constant 0 : index
    %c0_106 = arith.constant 0 : index
    %c0_107 = arith.constant 0 : index
    %111 = vector.load %arg11[%c0_105, %c0_106, %c0_107] : memref<3x64x384xbf16, #tpu.memory_space<vmem>>, vector<1x64x384xbf16>
    %112 = vector.shape_cast %111 : vector<1x64x384xbf16> to vector<64x384xbf16>
    %cst_108 = arith.constant dense<0.000000e+00> : vector<16x384xf32>
    %113 = tpu.matmul %110, %112, %cst_108 {dimension_numbers = #tpu.dot_dimension_numbers<[1], [0], [0], [1], [0, 0, 1, 1], [], []>} : vector<16x64xbf16>, vector<64x384xbf16>, vector<16x384xf32> -> vector<16x384xf32>
    %114 = arith.addf %108, %113 : vector<16x384xf32>
    %c1_109 = arith.constant 1 : index
    %c0_110 = arith.constant 0 : index
    %115 = vector.load %arg25[%c1_109, %c0_110] : memref<18x64xf32, #tpu.memory_space<vmem>>, vector<16x64xf32>
    %116 = arith.truncf %115 : vector<16x64xf32> to vector<16x64xbf16>
    %c1_111 = arith.constant 1 : index
    %c0_112 = arith.constant 0 : index
    %c0_113 = arith.constant 0 : index
    %117 = vector.load %arg11[%c1_111, %c0_112, %c0_113] : memref<3x64x384xbf16, #tpu.memory_space<vmem>>, vector<1x64x384xbf16>
    %118 = vector.shape_cast %117 : vector<1x64x384xbf16> to vector<64x384xbf16>
    %cst_114 = arith.constant dense<0.000000e+00> : vector<16x384xf32>
    %119 = tpu.matmul %116, %118, %cst_114 {dimension_numbers = #tpu.dot_dimension_numbers<[1], [0], [0], [1], [0, 0, 1, 1], [], []>} : vector<16x64xbf16>, vector<64x384xbf16>, vector<16x384xf32> -> vector<16x384xf32>
    %120 = arith.addf %114, %119 : vector<16x384xf32>
    %c2_115 = arith.constant 2 : index
    %c0_116 = arith.constant 0 : index
    %121 = vector.load %arg25[%c2_115, %c0_116] : memref<18x64xf32, #tpu.memory_space<vmem>>, vector<16x64xf32>
    %122 = arith.truncf %121 : vector<16x64xf32> to vector<16x64xbf16>
    %c2_117 = arith.constant 2 : index
    %c0_118 = arith.constant 0 : index
    %c0_119 = arith.constant 0 : index
    %123 = vector.load %arg11[%c2_117, %c0_118, %c0_119] : memref<3x64x384xbf16, #tpu.memory_space<vmem>>, vector<1x64x384xbf16>
    %124 = vector.shape_cast %123 : vector<1x64x384xbf16> to vector<64x384xbf16>
    %cst_120 = arith.constant dense<0.000000e+00> : vector<16x384xf32>
    %125 = tpu.matmul %122, %124, %cst_120 {dimension_numbers = #tpu.dot_dimension_numbers<[1], [0], [0], [1], [0, 0, 1, 1], [], []>} : vector<16x64xbf16>, vector<64x384xbf16>, vector<16x384xf32> -> vector<16x384xf32>
    %126 = arith.addf %120, %125 : vector<16x384xf32>
    %c0_121 = arith.constant 0 : index
    %c0_122 = arith.constant 0 : index
    %127 = vector.load %arg12[%c0_121, %c0_122] : memref<1x384xf32, #tpu.memory_space<vmem>>, vector<1x384xf32>
    %128 = vector.broadcast %127 : vector<1x384xf32> to vector<16x384xf32>
    %129 = arith.addf %126, %128 : vector<16x384xf32>
    %c1_123 = arith.constant 1 : index
    %c0_124 = arith.constant 0 : index
    %130 = vector.load %arg27[%c1_123, %c0_124] : memref<18x384xf32, #tpu.memory_space<vmem>>, vector<16x384xf32>
    tpu.vector_store %arg27[%c1_123, %c0_124], %129 {strides = array<i32>} : memref<18x384xf32, #tpu.memory_space<vmem>>, vector<16x384xf32>,
    %cst_125 = arith.constant 0.000000e+00 : f32
    %131 = vector.broadcast %cst_125 : f32 to vector<16x128xf32>
    %c0_126 = arith.constant 0 : index
    %c0_127 = arith.constant 0 : index
    %132 = vector.load %arg27[%c0_126, %c0_127] : memref<18x384xf32, #tpu.memory_space<vmem>>, vector<16x384xf32>
    %c0_128 = arith.constant 0 : index
    %c0_129 = arith.constant 0 : index
    %133 = vector.load %arg28[%c0_128, %c0_129] : memref<16x1152xf32, #tpu.memory_space<vmem>>, vector<16x128xf32>
    %134 = vector.extract_strided_slice %132 {offsets = [0, 0], sizes = [16, 128], strides = [1, 1]} : vector<16x384xf32> to vector<16x128xf32>
    %135 = arith.mulf %133, %134 : vector<16x128xf32>
    %136 = arith.addf %131, %135 : vector<16x128xf32>
    %c0_130 = arith.constant 0 : index
    %c128 = arith.constant 128 : index
    %137 = vector.load %arg28[%c0_130, %c128] : memref<16x1152xf32, #tpu.memory_space<vmem>>, vector<16x128xf32>
    %138 = vector.extract_strided_slice %132 {offsets = [0, 128], sizes = [16, 128], strides = [1, 1]} : vector<16x384xf32> to vector<16x128xf32>
    %139 = arith.mulf %137, %138 : vector<16x128xf32>
    %140 = arith.addf %136, %139 : vector<16x128xf32>
    %c0_131 = arith.constant 0 : index
    %c256 = arith.constant 256 : index
    %141 = vector.load %arg28[%c0_131, %c256] : memref<16x1152xf32, #tpu.memory_space<vmem>>, vector<16x128xf32>
    %142 = vector.extract_strided_slice %132 {offsets = [0, 256], sizes = [16, 128], strides = [1, 1]} : vector<16x384xf32> to vector<16x128xf32>
    %143 = arith.mulf %141, %142 : vector<16x128xf32>
    %144 = arith.addf %140, %143 : vector<16x128xf32>
    %c1_132 = arith.constant 1 : index
    %c0_133 = arith.constant 0 : index
    %145 = vector.load %arg27[%c1_132, %c0_133] : memref<18x384xf32, #tpu.memory_space<vmem>>, vector<16x384xf32>
    %c0_134 = arith.constant 0 : index
    %c384 = arith.constant 384 : index
    %146 = vector.load %arg28[%c0_134, %c384] : memref<16x1152xf32, #tpu.memory_space<vmem>>, vector<16x128xf32>
    %147 = vector.extract_strided_slice %145 {offsets = [0, 0], sizes = [16, 128], strides = [1, 1]} : vector<16x384xf32> to vector<16x128xf32>
    %148 = arith.mulf %146, %147 : vector<16x128xf32>
    %149 = arith.addf %144, %148 : vector<16x128xf32>
    %c0_135 = arith.constant 0 : index
    %c512 = arith.constant 512 : index
    %150 = vector.load %arg28[%c0_135, %c512] : memref<16x1152xf32, #tpu.memory_space<vmem>>, vector<16x128xf32>
    %151 = vector.extract_strided_slice %145 {offsets = [0, 128], sizes = [16, 128], strides = [1, 1]} : vector<16x384xf32> to vector<16x128xf32>
    %152 = arith.mulf %150, %151 : vector<16x128xf32>
    %153 = arith.addf %149, %152 : vector<16x128xf32>
    %c0_136 = arith.constant 0 : index
    %c640 = arith.constant 640 : index
    %154 = vector.load %arg28[%c0_136, %c640] : memref<16x1152xf32, #tpu.memory_space<vmem>>, vector<16x128xf32>
    %155 = vector.extract_strided_slice %145 {offsets = [0, 256], sizes = [16, 128], strides = [1, 1]} : vector<16x384xf32> to vector<16x128xf32>
    %156 = arith.mulf %154, %155 : vector<16x128xf32>
    %157 = arith.addf %153, %156 : vector<16x128xf32>
    %c2_137 = arith.constant 2 : index
    %c0_138 = arith.constant 0 : index
    %158 = vector.load %arg27[%c2_137, %c0_138] : memref<18x384xf32, #tpu.memory_space<vmem>>, vector<16x384xf32>
    %c0_139 = arith.constant 0 : index
    %c768 = arith.constant 768 : index
    %159 = vector.load %arg28[%c0_139, %c768] : memref<16x1152xf32, #tpu.memory_space<vmem>>, vector<16x128xf32>
    %160 = vector.extract_strided_slice %158 {offsets = [0, 0], sizes = [16, 128], strides = [1, 1]} : vector<16x384xf32> to vector<16x128xf32>
    %161 = arith.mulf %159, %160 : vector<16x128xf32>
    %162 = arith.addf %157, %161 : vector<16x128xf32>
    %c0_140 = arith.constant 0 : index
    %c896 = arith.constant 896 : index
    %163 = vector.load %arg28[%c0_140, %c896] : memref<16x1152xf32, #tpu.memory_space<vmem>>, vector<16x128xf32>
    %164 = vector.extract_strided_slice %158 {offsets = [0, 128], sizes = [16, 128], strides = [1, 1]} : vector<16x384xf32> to vector<16x128xf32>
    %165 = arith.mulf %163, %164 : vector<16x128xf32>
    %166 = arith.addf %162, %165 : vector<16x128xf32>
    %c0_141 = arith.constant 0 : index
    %c1024 = arith.constant 1024 : index
    %167 = vector.load %arg28[%c0_141, %c1024] : memref<16x1152xf32, #tpu.memory_space<vmem>>, vector<16x128xf32>
    %168 = vector.extract_strided_slice %158 {offsets = [0, 256], sizes = [16, 128], strides = [1, 1]} : vector<16x384xf32> to vector<16x128xf32>
    %169 = arith.mulf %167, %168 : vector<16x128xf32>
    %170 = arith.addf %166, %169 : vector<16x128xf32>
    %cst_142 = arith.constant 0.000000e+00 : f32
    %171 = vector.broadcast %cst_142 : f32 to vector<16x128xf32>
    %172 = arith.cmpf oge, %170, %171 : vector<16x128xf32>
    %cst_143 = arith.constant 0.00999999977 : f32
    %173 = vector.broadcast %cst_143 : f32 to vector<16x128xf32>
    %174 = arith.mulf %173, %170 : vector<16x128xf32>
    %175 = arith.select %172, %170, %174 : vector<16x128xi1>, vector<16x128xf32>
    %c2_144 = arith.constant 2 : index
    %c0_145 = arith.constant 0 : index
    %176 = vector.load %arg24[%c2_144, %c0_145] : memref<20x64xf32, #tpu.memory_space<vmem>>, vector<16x64xf32>
    tpu.vector_store %arg24[%c2_144, %c0_145], %106 {strides = array<i32>} : memref<20x64xf32, #tpu.memory_space<vmem>>, vector<16x64xf32>,
    %cst_146 = arith.constant 0.000000e+00 : f32
    %177 = vector.broadcast %cst_146 : f32 to vector<16x96xf32>
    %c0_147 = arith.constant 0 : index
    %c0_148 = arith.constant 0 : index
    %178 = vector.load %arg24[%c0_147, %c0_148] : memref<20x64xf32, #tpu.memory_space<vmem>>, vector<16x64xf32>
    %179 = arith.truncf %178 : vector<16x64xf32> to vector<16x64xbf16>
    %c0_149 = arith.constant 0 : index
    %c0_150 = arith.constant 0 : index
    %c0_151 = arith.constant 0 : index
    %180 = vector.load %arg13[%c0_149, %c0_150, %c0_151] : memref<5x64x96xbf16, #tpu.memory_space<vmem>>, vector<1x64x96xbf16>
    %181 = vector.shape_cast %180 : vector<1x64x96xbf16> to vector<64x96xbf16>
    %cst_152 = arith.constant dense<0.000000e+00> : vector<16x96xf32>
    %182 = tpu.matmul %179, %181, %cst_152 {dimension_numbers = #tpu.dot_dimension_numbers<[1], [0], [0], [1], [0, 0, 1, 1], [], []>} : vector<16x64xbf16>, vector<64x96xbf16>, vector<16x96xf32> -> vector<16x96xf32>
    %183 = arith.addf %177, %182 : vector<16x96xf32>
    %c1_153 = arith.constant 1 : index
    %c0_154 = arith.constant 0 : index
    %184 = vector.load %arg24[%c1_153, %c0_154] : memref<20x64xf32, #tpu.memory_space<vmem>>, vector<16x64xf32>
    %185 = arith.truncf %184 : vector<16x64xf32> to vector<16x64xbf16>
    %c1_155 = arith.constant 1 : index
    %c0_156 = arith.constant 0 : index
    %c0_157 = arith.constant 0 : index
    %186 = vector.load %arg13[%c1_155, %c0_156, %c0_157] : memref<5x64x96xbf16, #tpu.memory_space<vmem>>, vector<1x64x96xbf16>
    %187 = vector.shape_cast %186 : vector<1x64x96xbf16> to vector<64x96xbf16>
    %cst_158 = arith.constant dense<0.000000e+00> : vector<16x96xf32>
    %188 = tpu.matmul %185, %187, %cst_158 {dimension_numbers = #tpu.dot_dimension_numbers<[1], [0], [0], [1], [0, 0, 1, 1], [], []>} : vector<16x64xbf16>, vector<64x96xbf16>, vector<16x96xf32> -> vector<16x96xf32>
    %189 = arith.addf %183, %188 : vector<16x96xf32>
    %c2_159 = arith.constant 2 : index
    %c0_160 = arith.constant 0 : index
    %190 = vector.load %arg24[%c2_159, %c0_160] : memref<20x64xf32, #tpu.memory_space<vmem>>, vector<16x64xf32>
    %191 = arith.truncf %190 : vector<16x64xf32> to vector<16x64xbf16>
    %c2_161 = arith.constant 2 : index
    %c0_162 = arith.constant 0 : index
    %c0_163 = arith.constant 0 : index
    %192 = vector.load %arg13[%c2_161, %c0_162, %c0_163] : memref<5x64x96xbf16, #tpu.memory_space<vmem>>, vector<1x64x96xbf16>
    %193 = vector.shape_cast %192 : vector<1x64x96xbf16> to vector<64x96xbf16>
    %cst_164 = arith.constant dense<0.000000e+00> : vector<16x96xf32>
    %194 = tpu.matmul %191, %193, %cst_164 {dimension_numbers = #tpu.dot_dimension_numbers<[1], [0], [0], [1], [0, 0, 1, 1], [], []>} : vector<16x64xbf16>, vector<64x96xbf16>, vector<16x96xf32> -> vector<16x96xf32>
    %195 = arith.addf %189, %194 : vector<16x96xf32>
    %c3_165 = arith.constant 3 : index
    %c0_166 = arith.constant 0 : index
    %196 = vector.load %arg24[%c3_165, %c0_166] : memref<20x64xf32, #tpu.memory_space<vmem>>, vector<16x64xf32>
    %197 = arith.truncf %196 : vector<16x64xf32> to vector<16x64xbf16>
    %c3_167 = arith.constant 3 : index
    %c0_168 = arith.constant 0 : index
    %c0_169 = arith.constant 0 : index
    %198 = vector.load %arg13[%c3_167, %c0_168, %c0_169] : memref<5x64x96xbf16, #tpu.memory_space<vmem>>, vector<1x64x96xbf16>
    %199 = vector.shape_cast %198 : vector<1x64x96xbf16> to vector<64x96xbf16>
    %cst_170 = arith.constant dense<0.000000e+00> : vector<16x96xf32>
    %200 = tpu.matmul %197, %199, %cst_170 {dimension_numbers = #tpu.dot_dimension_numbers<[1], [0], [0], [1], [0, 0, 1, 1], [], []>} : vector<16x64xbf16>, vector<64x96xbf16>, vector<16x96xf32> -> vector<16x96xf32>
    %201 = arith.addf %195, %200 : vector<16x96xf32>
    %c4_171 = arith.constant 4 : index
    %c0_172 = arith.constant 0 : index
    %202 = vector.load %arg24[%c4_171, %c0_172] : memref<20x64xf32, #tpu.memory_space<vmem>>, vector<16x64xf32>
    %203 = arith.truncf %202 : vector<16x64xf32> to vector<16x64xbf16>
    %c4_173 = arith.constant 4 : index
    %c0_174 = arith.constant 0 : index
    %c0_175 = arith.constant 0 : index
    %204 = vector.load %arg13[%c4_173, %c0_174, %c0_175] : memref<5x64x96xbf16, #tpu.memory_space<vmem>>, vector<1x64x96xbf16>
    %205 = vector.shape_cast %204 : vector<1x64x96xbf16> to vector<64x96xbf16>
    %cst_176 = arith.constant dense<0.000000e+00> : vector<16x96xf32>
    %206 = tpu.matmul %203, %205, %cst_176 {dimension_numbers = #tpu.dot_dimension_numbers<[1], [0], [0], [1], [0, 0, 1, 1], [], []>} : vector<16x64xbf16>, vector<64x96xbf16>, vector<16x96xf32> -> vector<16x96xf32>
    %207 = arith.addf %201, %206 : vector<16x96xf32>
    %c0_177 = arith.constant 0 : index
    %c0_178 = arith.constant 0 : index
    %208 = vector.load %arg14[%c0_177, %c0_178] : memref<1x96xf32, #tpu.memory_space<vmem>>, vector<1x96xf32>
    %209 = vector.broadcast %208 : vector<1x96xf32> to vector<16x96xf32>
    %210 = arith.addf %207, %209 : vector<16x96xf32>
    %cst_179 = arith.constant 0.000000e+00 : f32
    %211 = vector.broadcast %cst_179 : f32 to vector<16x96xf32>
    %212 = arith.cmpf oge, %210, %211 : vector<16x96xf32>
    %cst_180 = arith.constant 0.00999999977 : f32
    %213 = vector.broadcast %cst_180 : f32 to vector<16x96xf32>
    %214 = arith.mulf %213, %210 : vector<16x96xf32>
    %215 = arith.select %212, %210, %214 : vector<16x96xi1>, vector<16x96xf32>
    %216 = arith.truncf %215 : vector<16x96xf32> to vector<16x96xbf16>
    %c0_181 = arith.constant 0 : index
    %c0_182 = arith.constant 0 : index
    %217 = vector.load %arg15[%c0_181, %c0_182] : memref<96x1152xbf16, #tpu.memory_space<vmem>>, vector<96x1152xbf16>
    %cst_183 = arith.constant dense<0.000000e+00> : vector<16x1152xf32>
    %218 = tpu.matmul %216, %217, %cst_183 {dimension_numbers = #tpu.dot_dimension_numbers<[1], [0], [0], [1], [0, 0, 1, 1], [], []>} : vector<16x96xbf16>, vector<96x1152xbf16>, vector<16x1152xf32> -> vector<16x1152xf32>
    %c0_184 = arith.constant 0 : index
    %c0_185 = arith.constant 0 : index
    %219 = vector.load %arg16[%c0_184, %c0_185] : memref<1x1152xf32, #tpu.memory_space<vmem>>, vector<1x1152xf32>
    %220 = vector.broadcast %219 : vector<1x1152xf32> to vector<16x1152xf32>
    %221 = arith.addf %218, %220 : vector<16x1152xf32>
    %c0_186 = arith.constant 0 : index
    %c0_187 = arith.constant 0 : index
    %222 = vector.load %arg28[%c0_186, %c0_187] : memref<16x1152xf32, #tpu.memory_space<vmem>>, vector<16x1152xf32>
    tpu.vector_store %arg28[%c0_186, %c0_187], %221 {strides = array<i32>} : memref<16x1152xf32, #tpu.memory_space<vmem>>, vector<16x1152xf32>,
    %cst_188 = arith.constant 0.000000e+00 : f32
    %223 = vector.broadcast %cst_188 : f32 to vector<16x64xf32>
    %c0_189 = arith.constant 0 : index
    %c0_190 = arith.constant 0 : index
    %224 = vector.load %arg24[%c0_189, %c0_190] : memref<20x64xf32, #tpu.memory_space<vmem>>, vector<16x64xf32>
    %225 = arith.truncf %224 : vector<16x64xf32> to vector<16x64xbf16>
    %c0_191 = arith.constant 0 : index
    %c0_192 = arith.constant 0 : index
    %c0_193 = arith.constant 0 : index
    %226 = vector.load %arg17[%c0_191, %c0_192, %c0_193] : memref<5x64x64xbf16, #tpu.memory_space<vmem>>, vector<1x64x64xbf16>
    %227 = vector.shape_cast %226 : vector<1x64x64xbf16> to vector<64x64xbf16>
    %cst_194 = arith.constant dense<0.000000e+00> : vector<16x64xf32>
    %228 = tpu.matmul %225, %227, %cst_194 {dimension_numbers = #tpu.dot_dimension_numbers<[1], [0], [0], [1], [0, 0, 1, 1], [], []>} : vector<16x64xbf16>, vector<64x64xbf16>, vector<16x64xf32> -> vector<16x64xf32>
    %229 = arith.addf %223, %228 : vector<16x64xf32>
    %c1_195 = arith.constant 1 : index
    %c0_196 = arith.constant 0 : index
    %230 = vector.load %arg24[%c1_195, %c0_196] : memref<20x64xf32, #tpu.memory_space<vmem>>, vector<16x64xf32>
    %231 = arith.truncf %230 : vector<16x64xf32> to vector<16x64xbf16>
    %c1_197 = arith.constant 1 : index
    %c0_198 = arith.constant 0 : index
    %c0_199 = arith.constant 0 : index
    %232 = vector.load %arg17[%c1_197, %c0_198, %c0_199] : memref<5x64x64xbf16, #tpu.memory_space<vmem>>, vector<1x64x64xbf16>
    %233 = vector.shape_cast %232 : vector<1x64x64xbf16> to vector<64x64xbf16>
    %cst_200 = arith.constant dense<0.000000e+00> : vector<16x64xf32>
    %234 = tpu.matmul %231, %233, %cst_200 {dimension_numbers = #tpu.dot_dimension_numbers<[1], [0], [0], [1], [0, 0, 1, 1], [], []>} : vector<16x64xbf16>, vector<64x64xbf16>, vector<16x64xf32> -> vector<16x64xf32>
    %235 = arith.addf %229, %234 : vector<16x64xf32>
    %c2_201 = arith.constant 2 : index
    %c0_202 = arith.constant 0 : index
    %236 = vector.load %arg24[%c2_201, %c0_202] : memref<20x64xf32, #tpu.memory_space<vmem>>, vector<16x64xf32>
    %237 = arith.truncf %236 : vector<16x64xf32> to vector<16x64xbf16>
    %c2_203 = arith.constant 2 : index
    %c0_204 = arith.constant 0 : index
    %c0_205 = arith.constant 0 : index
    %238 = vector.load %arg17[%c2_203, %c0_204, %c0_205] : memref<5x64x64xbf16, #tpu.memory_space<vmem>>, vector<1x64x64xbf16>
    %239 = vector.shape_cast %238 : vector<1x64x64xbf16> to vector<64x64xbf16>
    %cst_206 = arith.constant dense<0.000000e+00> : vector<16x64xf32>
    %240 = tpu.matmul %237, %239, %cst_206 {dimension_numbers = #tpu.dot_dimension_numbers<[1], [0], [0], [1], [0, 0, 1, 1], [], []>} : vector<16x64xbf16>, vector<64x64xbf16>, vector<16x64xf32> -> vector<16x64xf32>
    %241 = arith.addf %235, %240 : vector<16x64xf32>
    %c3_207 = arith.constant 3 : index
    %c0_208 = arith.constant 0 : index
    %242 = vector.load %arg24[%c3_207, %c0_208] : memref<20x64xf32, #tpu.memory_space<vmem>>, vector<16x64xf32>
    %243 = arith.truncf %242 : vector<16x64xf32> to vector<16x64xbf16>
    %c3_209 = arith.constant 3 : index
    %c0_210 = arith.constant 0 : index
    %c0_211 = arith.constant 0 : index
    %244 = vector.load %arg17[%c3_209, %c0_210, %c0_211] : memref<5x64x64xbf16, #tpu.memory_space<vmem>>, vector<1x64x64xbf16>
    %245 = vector.shape_cast %244 : vector<1x64x64xbf16> to vector<64x64xbf16>
    %cst_212 = arith.constant dense<0.000000e+00> : vector<16x64xf32>
    %246 = tpu.matmul %243, %245, %cst_212 {dimension_numbers = #tpu.dot_dimension_numbers<[1], [0], [0], [1], [0, 0, 1, 1], [], []>} : vector<16x64xbf16>, vector<64x64xbf16>, vector<16x64xf32> -> vector<16x64xf32>
    %247 = arith.addf %241, %246 : vector<16x64xf32>
    %c4_213 = arith.constant 4 : index
    %c0_214 = arith.constant 0 : index
    %248 = vector.load %arg24[%c4_213, %c0_214] : memref<20x64xf32, #tpu.memory_space<vmem>>, vector<16x64xf32>
    %249 = arith.truncf %248 : vector<16x64xf32> to vector<16x64xbf16>
    %c4_215 = arith.constant 4 : index
    %c0_216 = arith.constant 0 : index
    %c0_217 = arith.constant 0 : index
    %250 = vector.load %arg17[%c4_215, %c0_216, %c0_217] : memref<5x64x64xbf16, #tpu.memory_space<vmem>>, vector<1x64x64xbf16>
    %251 = vector.shape_cast %250 : vector<1x64x64xbf16> to vector<64x64xbf16>
    %cst_218 = arith.constant dense<0.000000e+00> : vector<16x64xf32>
    %252 = tpu.matmul %249, %251, %cst_218 {dimension_numbers = #tpu.dot_dimension_numbers<[1], [0], [0], [1], [0, 0, 1, 1], [], []>} : vector<16x64xbf16>, vector<64x64xbf16>, vector<16x64xf32> -> vector<16x64xf32>
    %253 = arith.addf %247, %252 : vector<16x64xf32>
    %c0_219 = arith.constant 0 : index
    %c0_220 = arith.constant 0 : index
    %254 = vector.load %arg18[%c0_219, %c0_220] : memref<1x64xf32, #tpu.memory_space<vmem>>, vector<1x64xf32>
    %255 = vector.broadcast %254 : vector<1x64xf32> to vector<16x64xf32>
    %256 = arith.addf %253, %255 : vector<16x64xf32>
    %cst_221 = arith.constant 0.000000e+00 : f32
    %257 = vector.broadcast %cst_221 : f32 to vector<16x64xf32>
    %258 = arith.cmpf oge, %256, %257 : vector<16x64xf32>
    %cst_222 = arith.constant 0.00999999977 : f32
    %259 = vector.broadcast %cst_222 : f32 to vector<16x64xf32>
    %260 = arith.mulf %259, %256 : vector<16x64xf32>
    %261 = arith.select %258, %256, %260 : vector<16x64xi1>, vector<16x64xf32>
    %c1_223 = arith.constant 1 : index
    %c0_224 = arith.constant 0 : index
    %262 = vector.load %arg26[%c1_223, %c0_224] : memref<18x128xf32, #tpu.memory_space<vmem>>, vector<16x128xf32>
    tpu.vector_store %arg26[%c1_223, %c0_224], %175 {strides = array<i32>} : memref<18x128xf32, #tpu.memory_space<vmem>>, vector<16x128xf32>,
    %cst_225 = arith.constant 0.000000e+00 : f32
    %263 = vector.broadcast %cst_225 : f32 to vector<16x384xf32>
    %c0_226 = arith.constant 0 : index
    %c0_227 = arith.constant 0 : index
    %264 = vector.load %arg26[%c0_226, %c0_227] : memref<18x128xf32, #tpu.memory_space<vmem>>, vector<16x128xf32>
    %265 = arith.truncf %264 : vector<16x128xf32> to vector<16x128xbf16>
    %c0_228 = arith.constant 0 : index
    %c0_229 = arith.constant 0 : index
    %c0_230 = arith.constant 0 : index
    %266 = vector.load %arg19[%c0_228, %c0_229, %c0_230] : memref<3x128x384xbf16, #tpu.memory_space<vmem>>, vector<1x128x384xbf16>
    %267 = vector.shape_cast %266 : vector<1x128x384xbf16> to vector<128x384xbf16>
    %cst_231 = arith.constant dense<0.000000e+00> : vector<16x384xf32>
    %268 = tpu.matmul %265, %267, %cst_231 {dimension_numbers = #tpu.dot_dimension_numbers<[1], [0], [0], [1], [0, 0, 1, 1], [], []>} : vector<16x128xbf16>, vector<128x384xbf16>, vector<16x384xf32> -> vector<16x384xf32>
    %269 = arith.addf %263, %268 : vector<16x384xf32>
    %c1_232 = arith.constant 1 : index
    %c0_233 = arith.constant 0 : index
    %270 = vector.load %arg26[%c1_232, %c0_233] : memref<18x128xf32, #tpu.memory_space<vmem>>, vector<16x128xf32>
    %271 = arith.truncf %270 : vector<16x128xf32> to vector<16x128xbf16>
    %c1_234 = arith.constant 1 : index
    %c0_235 = arith.constant 0 : index
    %c0_236 = arith.constant 0 : index
    %272 = vector.load %arg19[%c1_234, %c0_235, %c0_236] : memref<3x128x384xbf16, #tpu.memory_space<vmem>>, vector<1x128x384xbf16>
    %273 = vector.shape_cast %272 : vector<1x128x384xbf16> to vector<128x384xbf16>
    %cst_237 = arith.constant dense<0.000000e+00> : vector<16x384xf32>
    %274 = tpu.matmul %271, %273, %cst_237 {dimension_numbers = #tpu.dot_dimension_numbers<[1], [0], [0], [1], [0, 0, 1, 1], [], []>} : vector<16x128xbf16>, vector<128x384xbf16>, vector<16x384xf32> -> vector<16x384xf32>
    %275 = arith.addf %269, %274 : vector<16x384xf32>
    %c2_238 = arith.constant 2 : index
    %c0_239 = arith.constant 0 : index
    %276 = vector.load %arg26[%c2_238, %c0_239] : memref<18x128xf32, #tpu.memory_space<vmem>>, vector<16x128xf32>
    %277 = arith.truncf %276 : vector<16x128xf32> to vector<16x128xbf16>
    %c2_240 = arith.constant 2 : index
    %c0_241 = arith.constant 0 : index
    %c0_242 = arith.constant 0 : index
    %278 = vector.load %arg19[%c2_240, %c0_241, %c0_242] : memref<3x128x384xbf16, #tpu.memory_space<vmem>>, vector<1x128x384xbf16>
    %279 = vector.shape_cast %278 : vector<1x128x384xbf16> to vector<128x384xbf16>
    %cst_243 = arith.constant dense<0.000000e+00> : vector<16x384xf32>
    %280 = tpu.matmul %277, %279, %cst_243 {dimension_numbers = #tpu.dot_dimension_numbers<[1], [0], [0], [1], [0, 0, 1, 1], [], []>} : vector<16x128xbf16>, vector<128x384xbf16>, vector<16x384xf32> -> vector<16x384xf32>
    %281 = arith.addf %275, %280 : vector<16x384xf32>
    %c0_244 = arith.constant 0 : index
    %c0_245 = arith.constant 0 : index
    %282 = vector.load %arg20[%c0_244, %c0_245] : memref<1x384xf32, #tpu.memory_space<vmem>>, vector<1x384xf32>
    %283 = vector.broadcast %282 : vector<1x384xf32> to vector<16x384xf32>
    %284 = arith.addf %281, %283 : vector<16x384xf32>
    %c1_246 = arith.constant 1 : index
    %c0_247 = arith.constant 0 : index
    %285 = vector.load %arg27[%c1_246, %c0_247] : memref<18x384xf32, #tpu.memory_space<vmem>>, vector<16x384xf32>
    tpu.vector_store %arg27[%c1_246, %c0_247], %284 {strides = array<i32>} : memref<18x384xf32, #tpu.memory_space<vmem>>, vector<16x384xf32>,
    %cst_248 = arith.constant 0.000000e+00 : f32
    %286 = vector.broadcast %cst_248 : f32 to vector<16x128xf32>
    %c0_249 = arith.constant 0 : index
    %c0_250 = arith.constant 0 : index
    %287 = vector.load %arg27[%c0_249, %c0_250] : memref<18x384xf32, #tpu.memory_space<vmem>>, vector<16x384xf32>
    %c0_251 = arith.constant 0 : index
    %c0_252 = arith.constant 0 : index
    %288 = vector.load %arg28[%c0_251, %c0_252] : memref<16x1152xf32, #tpu.memory_space<vmem>>, vector<16x128xf32>
    %289 = vector.extract_strided_slice %287 {offsets = [0, 0], sizes = [16, 128], strides = [1, 1]} : vector<16x384xf32> to vector<16x128xf32>
    %290 = arith.mulf %288, %289 : vector<16x128xf32>
    %291 = arith.addf %286, %290 : vector<16x128xf32>
    %c0_253 = arith.constant 0 : index
    %c128_254 = arith.constant 128 : index
    %292 = vector.load %arg28[%c0_253, %c128_254] : memref<16x1152xf32, #tpu.memory_space<vmem>>, vector<16x128xf32>
    %293 = vector.extract_strided_slice %287 {offsets = [0, 128], sizes = [16, 128], strides = [1, 1]} : vector<16x384xf32> to vector<16x128xf32>
    %294 = arith.mulf %292, %293 : vector<16x128xf32>
    %295 = arith.addf %291, %294 : vector<16x128xf32>
    %c0_255 = arith.constant 0 : index
    %c256_256 = arith.constant 256 : index
    %296 = vector.load %arg28[%c0_255, %c256_256] : memref<16x1152xf32, #tpu.memory_space<vmem>>, vector<16x128xf32>
    %297 = vector.extract_strided_slice %287 {offsets = [0, 256], sizes = [16, 128], strides = [1, 1]} : vector<16x384xf32> to vector<16x128xf32>
    %298 = arith.mulf %296, %297 : vector<16x128xf32>
    %299 = arith.addf %295, %298 : vector<16x128xf32>
    %c1_257 = arith.constant 1 : index
    %c0_258 = arith.constant 0 : index
    %300 = vector.load %arg27[%c1_257, %c0_258] : memref<18x384xf32, #tpu.memory_space<vmem>>, vector<16x384xf32>
    %c0_259 = arith.constant 0 : index
    %c384_260 = arith.constant 384 : index
    %301 = vector.load %arg28[%c0_259, %c384_260] : memref<16x1152xf32, #tpu.memory_space<vmem>>, vector<16x128xf32>
    %302 = vector.extract_strided_slice %300 {offsets = [0, 0], sizes = [16, 128], strides = [1, 1]} : vector<16x384xf32> to vector<16x128xf32>
    %303 = arith.mulf %301, %302 : vector<16x128xf32>
    %304 = arith.addf %299, %303 : vector<16x128xf32>
    %c0_261 = arith.constant 0 : index
    %c512_262 = arith.constant 512 : index
    %305 = vector.load %arg28[%c0_261, %c512_262] : memref<16x1152xf32, #tpu.memory_space<vmem>>, vector<16x128xf32>
    %306 = vector.extract_strided_slice %300 {offsets = [0, 128], sizes = [16, 128], strides = [1, 1]} : vector<16x384xf32> to vector<16x128xf32>
    %307 = arith.mulf %305, %306 : vector<16x128xf32>
    %308 = arith.addf %304, %307 : vector<16x128xf32>
    %c0_263 = arith.constant 0 : index
    %c640_264 = arith.constant 640 : index
    %309 = vector.load %arg28[%c0_263, %c640_264] : memref<16x1152xf32, #tpu.memory_space<vmem>>, vector<16x128xf32>
    %310 = vector.extract_strided_slice %300 {offsets = [0, 256], sizes = [16, 128], strides = [1, 1]} : vector<16x384xf32> to vector<16x128xf32>
    %311 = arith.mulf %309, %310 : vector<16x128xf32>
    %312 = arith.addf %308, %311 : vector<16x128xf32>
    %c2_265 = arith.constant 2 : index
    %c0_266 = arith.constant 0 : index
    %313 = vector.load %arg27[%c2_265, %c0_266] : memref<18x384xf32, #tpu.memory_space<vmem>>, vector<16x384xf32>
    %c0_267 = arith.constant 0 : index
    %c768_268 = arith.constant 768 : index
    %314 = vector.load %arg28[%c0_267, %c768_268] : memref<16x1152xf32, #tpu.memory_space<vmem>>, vector<16x128xf32>
    %315 = vector.extract_strided_slice %313 {offsets = [0, 0], sizes = [16, 128], strides = [1, 1]} : vector<16x384xf32> to vector<16x128xf32>
    %316 = arith.mulf %314, %315 : vector<16x128xf32>
    %317 = arith.addf %312, %316 : vector<16x128xf32>
    %c0_269 = arith.constant 0 : index
    %c896_270 = arith.constant 896 : index
    %318 = vector.load %arg28[%c0_269, %c896_270] : memref<16x1152xf32, #tpu.memory_space<vmem>>, vector<16x128xf32>
    %319 = vector.extract_strided_slice %313 {offsets = [0, 128], sizes = [16, 128], strides = [1, 1]} : vector<16x384xf32> to vector<16x128xf32>
    %320 = arith.mulf %318, %319 : vector<16x128xf32>
    %321 = arith.addf %317, %320 : vector<16x128xf32>
    %c0_271 = arith.constant 0 : index
    %c1024_272 = arith.constant 1024 : index
    %322 = vector.load %arg28[%c0_271, %c1024_272] : memref<16x1152xf32, #tpu.memory_space<vmem>>, vector<16x128xf32>
    %323 = vector.extract_strided_slice %313 {offsets = [0, 256], sizes = [16, 128], strides = [1, 1]} : vector<16x384xf32> to vector<16x128xf32>
    %324 = arith.mulf %322, %323 : vector<16x128xf32>
    %325 = arith.addf %321, %324 : vector<16x128xf32>
    %cst_273 = arith.constant 0.000000e+00 : f32
    %326 = vector.broadcast %cst_273 : f32 to vector<16x128xf32>
    %327 = arith.cmpf oge, %325, %326 : vector<16x128xf32>
    %cst_274 = arith.constant 0.00999999977 : f32
    %328 = vector.broadcast %cst_274 : f32 to vector<16x128xf32>
    %329 = arith.mulf %328, %325 : vector<16x128xf32>
    %330 = arith.select %327, %325, %329 : vector<16x128xi1>, vector<16x128xf32>
    %331 = arith.addf %330, %20 : vector<16x128xf32>
    %332 = vector.shape_cast %331 : vector<16x128xf32> to vector<1x16x128xf32>
    %c0_275 = arith.constant 0 : index
    %c0_276 = arith.constant 0 : index
    %c0_277 = arith.constant 0 : index
    %333 = vector.load %arg21[%c0_275, %c0_276, %c0_277] : memref<1x16x128xf32, #tpu.memory_space<vmem>>, vector<1x16x128xf32>
    tpu.vector_store %arg21[%c0_275, %c0_276, %c0_277], %332 {strides = array<i32>} : memref<1x16x128xf32, #tpu.memory_space<vmem>>, vector<1x16x128xf32>,
    %334 = vector.shape_cast %261 : vector<16x64xf32> to vector<1x16x64xf32>
    %c0_278 = arith.constant 0 : index
    %c0_279 = arith.constant 0 : index
    %c0_280 = arith.constant 0 : index
    %335 = vector.load %arg22[%c0_278, %c0_279, %c0_280] : memref<1x16x64xf32, #tpu.memory_space<vmem>>, vector<1x16x64xf32>
    tpu.vector_store %arg22[%c0_278, %c0_279, %c0_280], %334 {strides = array<i32>} : memref<1x16x64xf32, #tpu.memory_space<vmem>>, vector<1x16x64xf32>,
    return
  }
  func.func @transform_0(%arg0: i32) -> (i32, i32, i32) {
    %c0_i32 = arith.constant 0 : i32
    %c0_i32_0 = arith.constant 0 : i32
    %c0_i32_1 = arith.constant 0 : i32
    return %arg0, %c0_i32, %c0_i32_0 : i32, i32, i32
  }
  func.func @transform_1(%arg0: i32) -> (i32, i32, i32) {
    %c0_i32 = arith.constant 0 : i32
    %c0_i32_0 = arith.constant 0 : i32
    %c0_i32_1 = arith.constant 0 : i32
    return %arg0, %c0_i32, %c0_i32_0 : i32, i32, i32
  }
  func.func @transform_2(%arg0: i32) -> (i32, i32, i32) {
    %c0_i32 = arith.constant 0 : i32
    %c0_i32_0 = arith.constant 0 : i32
    %c0_i32_1 = arith.constant 0 : i32
    %c0_i32_2 = arith.constant 0 : i32
    return %c0_i32, %c0_i32_0, %c0_i32_1 : i32, i32, i32
  }
  func.func @transform_3(%arg0: i32) -> (i32, i32) {
    %c0_i32 = arith.constant 0 : i32
    %c0_i32_0 = arith.constant 0 : i32
    %c0_i32_1 = arith.constant 0 : i32
    return %c0_i32, %c0_i32_0 : i32, i32
  }
  func.func @transform_4(%arg0: i32) -> (i32, i32, i32) {
    %c0_i32 = arith.constant 0 : i32
    %c0_i32_0 = arith.constant 0 : i32
    %c0_i32_1 = arith.constant 0 : i32
    %c0_i32_2 = arith.constant 0 : i32
    return %c0_i32, %c0_i32_0, %c0_i32_1 : i32, i32, i32
  }
  func.func @transform_5(%arg0: i32) -> (i32, i32) {
    %c0_i32 = arith.constant 0 : i32
    %c0_i32_0 = arith.constant 0 : i32
    %c0_i32_1 = arith.constant 0 : i32
    return %c0_i32, %c0_i32_0 : i32, i32
  }
  func.func @transform_6(%arg0: i32) -> (i32, i32) {
    %c0_i32 = arith.constant 0 : i32
    %c0_i32_0 = arith.constant 0 : i32
    %c0_i32_1 = arith.constant 0 : i32
    return %c0_i32, %c0_i32_0 : i32, i32
  }
  func.func @transform_7(%arg0: i32) -> (i32, i32) {
    %c0_i32 = arith.constant 0 : i32
    %c0_i32_0 = arith.constant 0 : i32
    %c0_i32_1 = arith.constant 0 : i32
    return %c0_i32, %c0_i32_0 : i32, i32
  }
  func.func @transform_8(%arg0: i32) -> (i32, i32, i32) {
    %c0_i32 = arith.constant 0 : i32
    %c0_i32_0 = arith.constant 0 : i32
    %c0_i32_1 = arith.constant 0 : i32
    %c0_i32_2 = arith.constant 0 : i32
    return %c0_i32, %c0_i32_0, %c0_i32_1 : i32, i32, i32
  }
  func.func @transform_9(%arg0: i32) -> (i32, i32) {
    %c0_i32 = arith.constant 0 : i32
    %c0_i32_0 = arith.constant 0 : i32
    %c0_i32_1 = arith.constant 0 : i32
    return %c0_i32, %c0_i32_0 : i32, i32
  }
  func.func @transform_10(%arg0: i32) -> (i32, i32, i32) {
    %c0_i32 = arith.constant 0 : i32
    %c0_i32_0 = arith.constant 0 : i32
    %c0_i32_1 = arith.constant 0 : i32
    %c0_i32_2 = arith.constant 0 : i32
    return %c0_i32, %c0_i32_0, %c0_i32_1 : i32, i32, i32
  }
  func.func @transform_11(%arg0: i32) -> (i32, i32) {
    %c0_i32 = arith.constant 0 : i32
    %c0_i32_0 = arith.constant 0 : i32
    %c0_i32_1 = arith.constant 0 : i32
    return %c0_i32, %c0_i32_0 : i32, i32
  }
  func.func @transform_12(%arg0: i32) -> (i32, i32, i32) {
    %c0_i32 = arith.constant 0 : i32
    %c0_i32_0 = arith.constant 0 : i32
    %c0_i32_1 = arith.constant 0 : i32
    %c0_i32_2 = arith.constant 0 : i32
    return %c0_i32, %c0_i32_0, %c0_i32_1 : i32, i32, i32
  }
  func.func @transform_13(%arg0: i32) -> (i32, i32) {
    %c0_i32 = arith.constant 0 : i32
    %c0_i32_0 = arith.constant 0 : i32
    %c0_i32_1 = arith.constant 0 : i32
    return %c0_i32, %c0_i32_0 : i32, i32
  }
  func.func @transform_14(%arg0: i32) -> (i32, i32) {
    %c0_i32 = arith.constant 0 : i32
    %c0_i32_0 = arith.constant 0 : i32
    %c0_i32_1 = arith.constant 0 : i32
    return %c0_i32, %c0_i32_0 : i32, i32
  }
  func.func @transform_15(%arg0: i32) -> (i32, i32) {
    %c0_i32 = arith.constant 0 : i32
    %c0_i32_0 = arith.constant 0 : i32
    %c0_i32_1 = arith.constant 0 : i32
    return %c0_i32, %c0_i32_0 : i32, i32
  }
  func.func @transform_16(%arg0: i32) -> (i32, i32, i32) {
    %c0_i32 = arith.constant 0 : i32
    %c0_i32_0 = arith.constant 0 : i32
    %c0_i32_1 = arith.constant 0 : i32
    %c0_i32_2 = arith.constant 0 : i32
    return %c0_i32, %c0_i32_0, %c0_i32_1 : i32, i32, i32
  }
  func.func @transform_17(%arg0: i32) -> (i32, i32) {
    %c0_i32 = arith.constant 0 : i32
    %c0_i32_0 = arith.constant 0 : i32
    %c0_i32_1 = arith.constant 0 : i32
    return %c0_i32, %c0_i32_0 : i32, i32
  }
  func.func @transform_18(%arg0: i32) -> (i32, i32, i32) {
    %c0_i32 = arith.constant 0 : i32
    %c0_i32_0 = arith.constant 0 : i32
    %c0_i32_1 = arith.constant 0 : i32
    %c0_i32_2 = arith.constant 0 : i32
    return %c0_i32, %c0_i32_0, %c0_i32_1 : i32, i32, i32
  }
  func.func @transform_19(%arg0: i32) -> (i32, i32) {
    %c0_i32 = arith.constant 0 : i32
    %c0_i32_0 = arith.constant 0 : i32
    %c0_i32_1 = arith.constant 0 : i32
    return %c0_i32, %c0_i32_0 : i32, i32
  }
  func.func @transform_20(%arg0: i32) -> (i32, i32, i32) {
    %c0_i32 = arith.constant 0 : i32
    %c0_i32_0 = arith.constant 0 : i32
    %c0_i32_1 = arith.constant 0 : i32
    return %arg0, %c0_i32, %c0_i32_0 : i32, i32, i32
  }
  func.func @transform_21(%arg0: i32) -> (i32, i32, i32) {
    %c0_i32 = arith.constant 0 : i32
    %c0_i32_0 = arith.constant 0 : i32
    %c0_i32_1 = arith.constant 0 : i32
    return %arg0, %c0_i32, %c0_i32_0 : i32, i32, i32
  }
}

</mosaic_0001>

<llo_original>
// kernel: conv_block_apply.1
$region0: #{conv_block_apply.1}
  #allocation0 [shape = 'u32[]', space=smem, size = 0x4, offset = 0x4, fixed_abs, tag = 'smem constant byte address 0x4 - core index']
  #allocation1 [shape = 'u32[144,128]{1,0:T(1,128)}', space=vmem, size = 0x12000, scoped, tag = 'internal scratch']
  #allocation2 [shape = 'f32[20,32]{1,0:T(8,128)}', space=vmem, size = 0x3000, scoped, tag = 'scratch operand']
  #allocation3 [shape = 'f32[20,64]{1,0:T(8,128)}', space=vmem, size = 0x3000, scoped, tag = 'scratch operand']
  #allocation4 [shape = 'f32[18,64]{1,0:T(8,128)}', space=vmem, size = 0x3000, scoped, tag = 'scratch operand']
  #allocation5 [shape = 'f32[18,128]{1,0:T(8,128)}', space=vmem, size = 0x3000, scoped, tag = 'scratch operand']
  #allocation6 [shape = 'f32[18,384]{1,0:T(8,128)}', space=vmem, size = 0x9000, scoped, tag = 'scratch operand']
  #allocation7 [shape = 'f32[16,1152]{1,0:T(8,128)}', space=vmem, size = 0x12000, scoped, tag = 'scratch operand']
  %s0 = inlined_call_operand.vmem [shape: f32[2,16,64], index: 0, kind: input, shape index: {}]
  %s1 = inlined_call_operand.vmem [shape: f32[2,16,32], index: 1, kind: input, shape index: {}]
  %s2 = inlined_call_operand.vmem [shape: bf16[1,64,128], index: 2, kind: input, shape index: {}]
  %s3 = inlined_call_operand.vmem [shape: f32[1,128], index: 3, kind: input, shape index: {}]
  %s4 = inlined_call_operand.vmem [shape: bf16[5,32,96], index: 4, kind: input, shape index: {}]
  %s5 = inlined_call_operand.vmem [shape: f32[1,96], index: 5, kind: input, shape index: {}]
  %s6 = inlined_call_operand.vmem [shape: bf16[96,1152], index: 6, kind: input, shape index: {}]
  %s7 = inlined_call_operand.vmem [shape: f32[1,1152], index: 7, kind: input, shape index: {}]
  %s8 = inlined_call_operand.vmem [shape: bf16[5,32,64], index: 8, kind: input, shape index: {}]
  %s9 = inlined_call_operand.vmem [shape: f32[1,64], index: 9, kind: input, shape index: {}]
  %s10 = inlined_call_operand.vmem [shape: bf16[3,64,384], index: 10, kind: input, shape index: {}]
  %s11 = inlined_call_operand.vmem [shape: f32[1,384], index: 11, kind: input, shape index: {}]
  %s12 = inlined_call_operand.vmem [shape: bf16[5,64,96], index: 12, kind: input, shape index: {}]
  %s13 = inlined_call_operand.vmem [shape: f32[1,96], index: 13, kind: input, shape index: {}]
  %s14 = inlined_call_operand.vmem [shape: bf16[96,1152], index: 14, kind: input, shape index: {}]
  %s15 = inlined_call_operand.vmem [shape: f32[1,1152], index: 15, kind: input, shape index: {}]
  %s16 = inlined_call_operand.vmem [shape: bf16[5,64,64], index: 16, kind: input, shape index: {}]
  %s17 = inlined_call_operand.vmem [shape: f32[1,64], index: 17, kind: input, shape index: {}]
  %s18 = inlined_call_operand.vmem [shape: bf16[3,128,384], index: 18, kind: input, shape index: {}]
  %s19 = inlined_call_operand.vmem [shape: f32[1,384], index: 19, kind: input, shape index: {}]
  %s20 = inlined_call_operand.vmem [shape: f32[2,16,128], index: 20, kind: output, shape index: {0}]
  %s21 = inlined_call_operand.vmem [shape: f32[2,16,64], index: 21, kind: output, shape index: {1}]
  %22 = xla_tuple %s20, %s21
  %s23 = sld [smem:[#allocation0]]
  $region121: #{conv_block_apply.1} parent=0
    _
  %s25 = ssub.s32 1, %s23
  %s26 = scalar_select 0, %s25, %s23
  loop: start=0, step=1, limit=4
  $region2: #{conv_block_apply.1} parent=0 // loop_pre_header
    _
  $region3: #{conv_block_apply.1} parent=0 // loop_header
    %s28 = sphi 0, %s32
    %p29 = scmp.ge.s32.totalorder %s28, 4
    %s38 = sphi 0, %s40
    %s41 = sphi 0, %s38
    %s42 = sphi 0, %s41
    %s58 = sphi 0, %s42
    %s64 = sphi 0, %s66
    %s67 = sphi 0, %s64
    %s68 = sphi 0, %s67
    %s84 = sphi 0, %s68
    %s88 = sphi 0, %s88
    %s90 = sphi 0, %s88
    %s91 = sphi 0, %s90
    %s105 = sphi 0, %s91
    %s109 = sphi 0, %s109
    %s111 = sphi 0, %s109
    %s112 = sphi 0, %s111
    %s126 = sphi 0, %s112
    %s130 = sphi 0, %s130
    %s132 = sphi 0, %s130
    %s133 = sphi 0, %s132
    %s147 = sphi 0, %s133
    %s151 = sphi 0, %s151
    %s153 = sphi 0, %s151
    %s154 = sphi 0, %s153
    %s168 = sphi 0, %s154
    %s172 = sphi 0, %s172
    %s174 = sphi 0, %s172
    %s175 = sphi 0, %s174
    %s189 = sphi 0, %s175
    %s193 = sphi 0, %s193
    %s195 = sphi 0, %s193
    %s196 = sphi 0, %s195
    %s210 = sphi 0, %s196
    %s214 = sphi 0, %s214
    %s216 = sphi 0, %s214
    %s217 = sphi 0, %s216
    %s231 = sphi 0, %s217
    %s235 = sphi 0, %s235
    %s237 = sphi 0, %s235
    %s238 = sphi 0, %s237
    %s252 = sphi 0, %s238
    %s256 = sphi 0, %s256
    %s258 = sphi 0, %s256
    %s259 = sphi 0, %s258
    %s273 = sphi 0, %s259
    %s277 = sphi 0, %s277
    %s279 = sphi 0, %s277
    %s280 = sphi 0, %s279
    %s294 = sphi 0, %s280
    %s298 = sphi 0, %s298
    %s300 = sphi 0, %s298
    %s301 = sphi 0, %s300
    %s315 = sphi 0, %s301
    %s319 = sphi 0, %s319
    %s321 = sphi 0, %s319
    %s322 = sphi 0, %s321
    %s336 = sphi 0, %s322
    %s340 = sphi 0, %s340
    %s342 = sphi 0, %s340
    %s343 = sphi 0, %s342
    %s357 = sphi 0, %s343
    %s361 = sphi 0, %s361
    %s363 = sphi 0, %s361
    %s364 = sphi 0, %s363
    %s378 = sphi 0, %s364
    %s382 = sphi 0, %s382
    %s384 = sphi 0, %s382
    %s385 = sphi 0, %s384
    %s399 = sphi 0, %s385
    %s403 = sphi 0, %s403
    %s405 = sphi 0, %s403
    %s406 = sphi 0, %s405
    %s420 = sphi 0, %s406
    %s424 = sphi 0, %s424
    %s426 = sphi 0, %s424
    %s427 = sphi 0, %s426
    %s441 = sphi 0, %s427
    %s445 = sphi 0, %s445
    %s447 = sphi 0, %s445
    %s448 = sphi 0, %s447
    %s462 = sphi 0, %s448
    %s468 = sphi 0, %s470
    %s471 = sphi 0, %s468
    %s472 = sphi 0, %s471
    %s488 = sphi 0, %s472
    %s494 = sphi 0, %s496
    %s497 = sphi 0, %s494
    %s498 = sphi 0, %s497
    %s514 = sphi 0, %s498
  $region4: #{conv_block_apply.1} parent=0 // loop_header_branch
    %31 = sbr.rel (%p29) target = $region8
  $region5: #{conv_block_apply.1} parent=0 // loop_body
    %s33 = ssub.s32 %s28, 1
    %s34 = ssub.s32 %s28, 2
    %s35 = sadd.s32 %s28, 1
    %s36 = ssub.s32 %s28, %s35
    %p37 = scmp.eq.s32.totalorder %s36, 0
    %s39 = sadd.s32 %s38, 1
    %s40 = scalar_select %p37, %s38, %s39
    %p43 = pneg %p37
    %p44 = scmp.eq.s32.totalorder %s28, 1
    %p45 = por %p43, %p44
    %p46 = scmp.ne.s32.totalorder %s38, %s41
    %p47 = scmp.eq.s32.totalorder %s28, 0
    %p48 = por %p46, %p47
    %p49 = scmp.ne.s32.totalorder %s38, %s41
    %p50 = scmp.eq.s32.totalorder %s33, 1
    %p51 = por %p49, %p50
    %p52 = scmp.ne.s32.totalorder %s41, %s42
    %p53 = scmp.eq.s32.totalorder %s33, 0
    %p54 = por %p52, %p53
    %p55 = scmp.ne.s32.totalorder %s41, %s42
    %p56 = scmp.eq.s32.totalorder %s34, 1
    %p57 = por %p55, %p56
    %p59 = scmp.ne.s32.totalorder %s42, %s58
    %p60 = scmp.eq.s32.totalorder %s34, 0
    %p61 = por %p59, %p60
    %s62 = ssub.s32 %s28, %s35
    %p63 = scmp.eq.s32.totalorder %s62, 0
    %s65 = sadd.s32 %s64, 1
    %s66 = scalar_select %p63, %s64, %s65
    %p69 = pneg %p63
    %p70 = scmp.eq.s32.totalorder %s28, 1
    %p71 = por %p69, %p70
    %p72 = scmp.ne.s32.totalorder %s64, %s67
    %p73 = scmp.eq.s32.totalorder %s28, 0
    %p74 = por %p72, %p73
    %p75 = scmp.ne.s32.totalorder %s64, %s67
    %p76 = scmp.eq.s32.totalorder %s33, 1
    %p77 = por %p75, %p76
    %p78 = scmp.ne.s32.totalorder %s67, %s68
    %p79 = scmp.eq.s32.totalorder %s33, 0
    %p80 = por %p78, %p79
    %p81 = scmp.ne.s32.totalorder %s67, %s68
    %p82 = scmp.eq.s32.totalorder %s34, 1
    %p83 = por %p81, %p82
    %p85 = scmp.ne.s32.totalorder %s68, %s84
    %p86 = scmp.eq.s32.totalorder %s34, 0
    %p87 = por %p85, %p86
    %s89 = sadd.s32 %s88, 1
    %p92 = scmp.eq.s32.totalorder %s28, 1
    %p93 = scmp.ne.s32.totalorder %s88, %s90
    %p94 = scmp.eq.s32.totalorder %s28, 0
    %p95 = por %p93, %p94
    %p96 = scmp.ne.s32.totalorder %s88, %s90
    %p97 = scmp.eq.s32.totalorder %s33, 1
    %p98 = por %p96, %p97
    %p99 = scmp.ne.s32.totalorder %s90, %s91
    %p100 = scmp.eq.s32.totalorder %s33, 0
    %p101 = por %p99, %p100
    %p102 = scmp.ne.s32.totalorder %s90, %s91
    %p103 = scmp.eq.s32.totalorder %s34, 1
    %p104 = por %p102, %p103
    %p106 = scmp.ne.s32.totalorder %s91, %s105
    %p107 = scmp.eq.s32.totalorder %s34, 0
    %p108 = por %p106, %p107
    %s110 = sadd.s32 %s109, 1
    %p113 = scmp.eq.s32.totalorder %s28, 1
    %p114 = scmp.ne.s32.totalorder %s109, %s111
    %p115 = scmp.eq.s32.totalorder %s28, 0
    %p116 = por %p114, %p115
    %p117 = scmp.ne.s32.totalorder %s109, %s111
    %p118 = scmp.eq.s32.totalorder %s33, 1
    %p119 = por %p117, %p118
    %p120 = scmp.ne.s32.totalorder %s111, %s112
    %p121 = scmp.eq.s32.totalorder %s33, 0
    %p122 = por %p120, %p121
    %p123 = scmp.ne.s32.totalorder %s111, %s112
    %p124 = scmp.eq.s32.totalorder %s34, 1
    %p125 = por %p123, %p124
    %p127 = scmp.ne.s32.totalorder %s112, %s126
    %p128 = scmp.eq.s32.totalorder %s34, 0
    %p129 = por %p127, %p128
    %s131 = sadd.s32 %s130, 1
    %p134 = scmp.eq.s32.totalorder %s28, 1
    %p135 = scmp.ne.s32.totalorder %s130, %s132
    %p136 = scmp.eq.s32.totalorder %s28, 0
    %p137 = por %p135, %p136
    %p138 = scmp.ne.s32.totalorder %s130, %s132
    %p139 = scmp.eq.s32.totalorder %s33, 1
    %p140 = por %p138, %p139
    %p141 = scmp.ne.s32.totalorder %s132, %s133
    %p142 = scmp.eq.s32.totalorder %s33, 0
    %p143 = por %p141, %p142
    %p144 = scmp.ne.s32.totalorder %s132, %s133
    %p145 = scmp.eq.s32.totalorder %s34, 1
    %p146 = por %p144, %p145
    %p148 = scmp.ne.s32.totalorder %s133, %s147
    %p149 = scmp.eq.s32.totalorder %s34, 0
    %p150 = por %p148, %p149
    %s152 = sadd.s32 %s151, 1
    %p155 = scmp.eq.s32.totalorder %s28, 1
    %p156 = scmp.ne.s32.totalorder %s151, %s153
    %p157 = scmp.eq.s32.totalorder %s28, 0
    %p158 = por %p156, %p157
    %p159 = scmp.ne.s32.totalorder %s151, %s153
    %p160 = scmp.eq.s32.totalorder %s33, 1
    %p161 = por %p159, %p160
    %p162 = scmp.ne.s32.totalorder %s153, %s154
    %p163 = scmp.eq.s32.totalorder %s33, 0
    %p164 = por %p162, %p163
    %p165 = scmp.ne.s32.totalorder %s153, %s154
    %p166 = scmp.eq.s32.totalorder %s34, 1
    %p167 = por %p165, %p166
    %p169 = scmp.ne.s32.totalorder %s154, %s168
    %p170 = scmp.eq.s32.totalorder %s34, 0
    %p171 = por %p169, %p170
    %s173 = sadd.s32 %s172, 1
    %p176 = scmp.eq.s32.totalorder %s28, 1
    %p177 = scmp.ne.s32.totalorder %s172, %s174
    %p178 = scmp.eq.s32.totalorder %s28, 0
    %p179 = por %p177, %p178
    %p180 = scmp.ne.s32.totalorder %s172, %s174
    %p181 = scmp.eq.s32.totalorder %s33, 1
    %p182 = por %p180, %p181
    %p183 = scmp.ne.s32.totalorder %s174, %s175
    %p184 = scmp.eq.s32.totalorder %s33, 0
    %p185 = por %p183, %p184
    %p186 = scmp.ne.s32.totalorder %s174, %s175
    %p187 = scmp.eq.s32.totalorder %s34, 1
    %p188 = por %p186, %p187
    %p190 = scmp.ne.s32.totalorder %s175, %s189
    %p191 = scmp.eq.s32.totalorder %s34, 0
    %p192 = por %p190, %p191
    %s194 = sadd.s32 %s193, 1
    %p197 = scmp.eq.s32.totalorder %s28, 1
    %p198 = scmp.ne.s32.totalorder %s193, %s195
    %p199 = scmp.eq.s32.totalorder %s28, 0
    %p200 = por %p198, %p199
    %p201 = scmp.ne.s32.totalorder %s193, %s195
    %p202 = scmp.eq.s32.totalorder %s33, 1
    %p203 = por %p201, %p202
    %p204 = scmp.ne.s32.totalorder %s195, %s196
    %p205 = scmp.eq.s32.totalorder %s33, 0
    %p206 = por %p204, %p205
    %p207 = scmp.ne.s32.totalorder %s195, %s196
    %p208 = scmp.eq.s32.totalorder %s34, 1
    %p209 = por %p207, %p208
    %p211 = scmp.ne.s32.totalorder %s196, %s210
    %p212 = scmp.eq.s32.totalorder %s34, 0
    %p213 = por %p211, %p212
    %s215 = sadd.s32 %s214, 1
    %p218 = scmp.eq.s32.totalorder %s28, 1
    %p219 = scmp.ne.s32.totalorder %s214, %s216
    %p220 = scmp.eq.s32.totalorder %s28, 0
    %p221 = por %p219, %p220
    %p222 = scmp.ne.s32.totalorder %s214, %s216
    %p223 = scmp.eq.s32.totalorder %s33, 1
    %p224 = por %p222, %p223
    %p225 = scmp.ne.s32.totalorder %s216, %s217
    %p226 = scmp.eq.s32.totalorder %s33, 0
    %p227 = por %p225, %p226
    %p228 = scmp.ne.s32.totalorder %s216, %s217
    %p229 = scmp.eq.s32.totalorder %s34, 1
    %p230 = por %p228, %p229
    %p232 = scmp.ne.s32.totalorder %s217, %s231
    %p233 = scmp.eq.s32.totalorder %s34, 0
    %p234 = por %p232, %p233
    %s236 = sadd.s32 %s235, 1
    %p239 = scmp.eq.s32.totalorder %s28, 1
    %p240 = scmp.ne.s32.totalorder %s235, %s237
    %p241 = scmp.eq.s32.totalorder %s28, 0
    %p242 = por %p240, %p241
    %p243 = scmp.ne.s32.totalorder %s235, %s237
    %p244 = scmp.eq.s32.totalorder %s33, 1
    %p245 = por %p243, %p244
    %p246 = scmp.ne.s32.totalorder %s237, %s238
    %p247 = scmp.eq.s32.totalorder %s33, 0
    %p248 = por %p246, %p247
    %p249 = scmp.ne.s32.totalorder %s237, %s238
    %p250 = scmp.eq.s32.totalorder %s34, 1
    %p251 = por %p249, %p250
    %p253 = scmp.ne.s32.totalorder %s238, %s252
    %p254 = scmp.eq.s32.totalorder %s34, 0
    %p255 = por %p253, %p254
    %s257 = sadd.s32 %s256, 1
    %p260 = scmp.eq.s32.totalorder %s28, 1
    %p261 = scmp.ne.s32.totalorder %s256, %s258
    %p262 = scmp.eq.s32.totalorder %s28, 0
    %p263 = por %p261, %p262
    %p264 = scmp.ne.s32.totalorder %s256, %s258
    %p265 = scmp.eq.s32.totalorder %s33, 1
    %p266 = por %p264, %p265
    %p267 = scmp.ne.s32.totalorder %s258, %s259
    %p268 = scmp.eq.s32.totalorder %s33, 0
    %p269 = por %p267, %p268
    %p270 = scmp.ne.s32.totalorder %s258, %s259
    %p271 = scmp.eq.s32.totalorder %s34, 1
    %p272 = por %p270, %p271
    %p274 = scmp.ne.s32.totalorder %s259, %s273
    %p275 = scmp.eq.s32.totalorder %s34, 0
    %p276 = por %p274, %p275
    %s278 = sadd.s32 %s277, 1
    %p281 = scmp.eq.s32.totalorder %s28, 1
    %p282 = scmp.ne.s32.totalorder %s277, %s279
    %p283 = scmp.eq.s32.totalorder %s28, 0
    %p284 = por %p282, %p283
    %p285 = scmp.ne.s32.totalorder %s277, %s279
    %p286 = scmp.eq.s32.totalorder %s33, 1
    %p287 = por %p285, %p286
    %p288 = scmp.ne.s32.totalorder %s279, %s280
    %p289 = scmp.eq.s32.totalorder %s33, 0
    %p290 = por %p288, %p289
    %p291 = scmp.ne.s32.totalorder %s279, %s280
    %p292 = scmp.eq.s32.totalorder %s34, 1
    %p293 = por %p291, %p292
    %p295 = scmp.ne.s32.totalorder %s280, %s294
    %p296 = scmp.eq.s32.totalorder %s34, 0
    %p297 = por %p295, %p296
    %s299 = sadd.s32 %s298, 1
    %p302 = scmp.eq.s32.totalorder %s28, 1
    %p303 = scmp.ne.s32.totalorder %s298, %s300
    %p304 = scmp.eq.s32.totalorder %s28, 0
    %p305 = por %p303, %p304
    %p306 = scmp.ne.s32.totalorder %s298, %s300
    %p307 = scmp.eq.s32.totalorder %s33, 1
    %p308 = por %p306, %p307
    %p309 = scmp.ne.s32.totalorder %s300, %s301
    %p310 = scmp.eq.s32.totalorder %s33, 0
    %p311 = por %p309, %p310
    %p312 = scmp.ne.s32.totalorder %s300, %s301
    %p313 = scmp.eq.s32.totalorder %s34, 1
    %p314 = por %p312, %p313
    %p316 = scmp.ne.s32.totalorder %s301, %s315
    %p317 = scmp.eq.s32.totalorder %s34, 0
    %p318 = por %p316, %p317
    %s320 = sadd.s32 %s319, 1
    %p323 = scmp.eq.s32.totalorder %s28, 1
    %p324 = scmp.ne.s32.totalorder %s319, %s321
    %p325 = scmp.eq.s32.totalorder %s28, 0
    %p326 = por %p324, %p325
    %p327 = scmp.ne.s32.totalorder %s319, %s321
    %p328 = scmp.eq.s32.totalorder %s33, 1
    %p329 = por %p327, %p328
    %p330 = scmp.ne.s32.totalorder %s321, %s322
    %p331 = scmp.eq.s32.totalorder %s33, 0
    %p332 = por %p330, %p331
    %p333 = scmp.ne.s32.totalorder %s321, %s322
    %p334 = scmp.eq.s32.totalorder %s34, 1
    %p335 = por %p333, %p334
    %p337 = scmp.ne.s32.totalorder %s322, %s336
    %p338 = scmp.eq.s32.totalorder %s34, 0
    %p339 = por %p337, %p338
    %s341 = sadd.s32 %s340, 1
    %p344 = scmp.eq.s32.totalorder %s28, 1
    %p345 = scmp.ne.s32.totalorder %s340, %s342
    %p346 = scmp.eq.s32.totalorder %s28, 0
    %p347 = por %p345, %p346
    %p348 = scmp.ne.s32.totalorder %s340, %s342
    %p349 = scmp.eq.s32.totalorder %s33, 1
    %p350 = por %p348, %p349
    %p351 = scmp.ne.s32.totalorder %s342, %s343
    %p352 = scmp.eq.s32.totalorder %s33, 0
    %p353 = por %p351, %p352
    %p354 = scmp.ne.s32.totalorder %s342, %s343
    %p355 = scmp.eq.s32.totalorder %s34, 1
    %p356 = por %p354, %p355
    %p358 = scmp.ne.s32.totalorder %s343, %s357
    %p359 = scmp.eq.s32.totalorder %s34, 0
    %p360 = por %p358, %p359
    %s362 = sadd.s32 %s361, 1
    %p365 = scmp.eq.s32.totalorder %s28, 1
    %p366 = scmp.ne.s32.totalorder %s361, %s363
    %p367 = scmp.eq.s32.totalorder %s28, 0
    %p368 = por %p366, %p367
    %p369 = scmp.ne.s32.totalorder %s361, %s363
    %p370 = scmp.eq.s32.totalorder %s33, 1
    %p371 = por %p369, %p370
    %p372 = scmp.ne.s32.totalorder %s363, %s364
    %p373 = scmp.eq.s32.totalorder %s33, 0
    %p374 = por %p372, %p373
    %p375 = scmp.ne.s32.totalorder %s363, %s364
    %p376 = scmp.eq.s32.totalorder %s34, 1
    %p377 = por %p375, %p376
    %p379 = scmp.ne.s32.totalorder %s364, %s378
    %p380 = scmp.eq.s32.totalorder %s34, 0
    %p381 = por %p379, %p380
    %s383 = sadd.s32 %s382, 1
    %p386 = scmp.eq.s32.totalorder %s28, 1
    %p387 = scmp.ne.s32.totalorder %s382, %s384
    %p388 = scmp.eq.s32.totalorder %s28, 0
    %p389 = por %p387, %p388
    %p390 = scmp.ne.s32.totalorder %s382, %s384
    %p391 = scmp.eq.s32.totalorder %s33, 1
    %p392 = por %p390, %p391
    %p393 = scmp.ne.s32.totalorder %s384, %s385
    %p394 = scmp.eq.s32.totalorder %s33, 0
    %p395 = por %p393, %p394
    %p396 = scmp.ne.s32.totalorder %s384, %s385
    %p397 = scmp.eq.s32.totalorder %s34, 1
    %p398 = por %p396, %p397
    %p400 = scmp.ne.s32.totalorder %s385, %s399
    %p401 = scmp.eq.s32.totalorder %s34, 0
    %p402 = por %p400, %p401
    %s404 = sadd.s32 %s403, 1
    %p407 = scmp.eq.s32.totalorder %s28, 1
    %p408 = scmp.ne.s32.totalorder %s403, %s405
    %p409 = scmp.eq.s32.totalorder %s28, 0
    %p410 = por %p408, %p409
    %p411 = scmp.ne.s32.totalorder %s403, %s405
    %p412 = scmp.eq.s32.totalorder %s33, 1
    %p413 = por %p411, %p412
    %p414 = scmp.ne.s32.totalorder %s405, %s406
    %p415 = scmp.eq.s32.totalorder %s33, 0
    %p416 = por %p414, %p415
    %p417 = scmp.ne.s32.totalorder %s405, %s406
    %p418 = scmp.eq.s32.totalorder %s34, 1
    %p419 = por %p417, %p418
    %p421 = scmp.ne.s32.totalorder %s406, %s420
    %p422 = scmp.eq.s32.totalorder %s34, 0
    %p423 = por %p421, %p422
    %s425 = sadd.s32 %s424, 1
    %p428 = scmp.eq.s32.totalorder %s28, 1
    %p429 = scmp.ne.s32.totalorder %s424, %s426
    %p430 = scmp.eq.s32.totalorder %s28, 0
    %p431 = por %p429, %p430
    %p432 = scmp.ne.s32.totalorder %s424, %s426
    %p433 = scmp.eq.s32.totalorder %s33, 1
    %p434 = por %p432, %p433
    %p435 = scmp.ne.s32.totalorder %s426, %s427
    %p436 = scmp.eq.s32.totalorder %s33, 0
    %p437 = por %p435, %p436
    %p438 = scmp.ne.s32.totalorder %s426, %s427
    %p439 = scmp.eq.s32.totalorder %s34, 1
    %p440 = por %p438, %p439
    %p442 = scmp.ne.s32.totalorder %s427, %s441
    %p443 = scmp.eq.s32.totalorder %s34, 0
    %p444 = por %p442, %p443
    %s446 = sadd.s32 %s445, 1
    %p449 = scmp.eq.s32.totalorder %s28, 1
    %p450 = scmp.ne.s32.totalorder %s445, %s447
    %p451 = scmp.eq.s32.totalorder %s28, 0
    %p452 = por %p450, %p451
    %p453 = scmp.ne.s32.totalorder %s445, %s447
    %p454 = scmp.eq.s32.totalorder %s33, 1
    %p455 = por %p453, %p454
    %p456 = scmp.ne.s32.totalorder %s447, %s448
    %p457 = scmp.eq.s32.totalorder %s33, 0
    %p458 = por %p456, %p457
    %p459 = scmp.ne.s32.totalorder %s447, %s448
    %p460 = scmp.eq.s32.totalorder %s34, 1
    %p461 = por %p459, %p460
    %p463 = scmp.ne.s32.totalorder %s448, %s462
    %p464 = scmp.eq.s32.totalorder %s34, 0
    %p465 = por %p463, %p464
    %s466 = ssub.s32 %s28, %s35
    %p467 = scmp.eq.s32.totalorder %s466, 0
    %s469 = sadd.s32 %s468, 1
    %s470 = scalar_select %p467, %s468, %s469
    %p473 = pneg %p467
    %p474 = scmp.eq.s32.totalorder %s28, 1
    %p475 = por %p473, %p474
    %p476 = scmp.ne.s32.totalorder %s468, %s471
    %p477 = scmp.eq.s32.totalorder %s28, 0
    %p478 = por %p476, %p477
    %p479 = scmp.ne.s32.totalorder %s468, %s471
    %p480 = scmp.eq.s32.totalorder %s33, 1
    %p481 = por %p479, %p480
    %p482 = scmp.ne.s32.totalorder %s471, %s472
    %p483 = scmp.eq.s32.totalorder %s33, 0
    %p484 = por %p482, %p483
    %p485 = scmp.ne.s32.totalorder %s471, %s472
    %p486 = scmp.eq.s32.totalorder %s34, 1
    %p487 = por %p485, %p486
    %p489 = scmp.ne.s32.totalorder %s472, %s488
    %p490 = scmp.eq.s32.totalorder %s34, 0
    %p491 = por %p489, %p490
    %s492 = ssub.s32 %s28, %s35
    %p493 = scmp.eq.s32.totalorder %s492, 0
    %s495 = sadd.s32 %s494, 1
    %s496 = scalar_select %p493, %s494, %s495
    %p499 = pneg %p493
    %p500 = scmp.eq.s32.totalorder %s28, 1
    %p501 = por %p499, %p500
    %p502 = scmp.ne.s32.totalorder %s494, %s497
    %p503 = scmp.eq.s32.totalorder %s28, 0
    %p504 = por %p502, %p503
    %p505 = scmp.ne.s32.totalorder %s494, %s497
    %p506 = scmp.eq.s32.totalorder %s33, 1
    %p507 = por %p505, %p506
    %p508 = scmp.ne.s32.totalorder %s497, %s498
    %p509 = scmp.eq.s32.totalorder %s33, 0
    %p510 = por %p508, %p509
    %p511 = scmp.ne.s32.totalorder %s497, %s498
    %p512 = scmp.eq.s32.totalorder %s34, 1
    %p513 = por %p511, %p512
    %p515 = scmp.ne.s32.totalorder %s498, %s514
    %p516 = scmp.eq.s32.totalorder %s34, 0
    %p517 = por %p515, %p516
    %p518 = scmp.le.s32.totalorder 1, %s28
    %p519 = scmp.lt.s32.totalorder %s28, 3
    %p520 = pnand %p518, %p519
    %p521 = pneg %p520
    // Predicated region
    $region9: #{conv_block_apply.1} parent=5 // pred_check
      _
    $region10: #{conv_block_apply.1} parent=5 // pred_check_branch
      %523 = sbr.rel (%p520) target = $region12
    $region11: #{conv_block_apply.1} parent=5 // pred_region
      %s524 = ssub.s32 %s28, 1
      // Predicated region
      $region13: #{conv_block_apply.1} parent=11 // pred_check
        %p525 = pneg %p101
      $region14: #{conv_block_apply.1} parent=11 // pred_check_branch
        %527 = sbr.rel (%p525) target = $region16
      $region15: #{conv_block_apply.1} parent=11 // pred_region
        _
      $region16: #{conv_block_apply.1} parent=11 // pred_fallthru
        _
      // Predicated region
      $region17: #{conv_block_apply.1} parent=11 // pred_check
        %p528 = pneg %p122
      $region18: #{conv_block_apply.1} parent=11 // pred_check_branch
        %530 = sbr.rel (%p528) target = $region20
      $region19: #{conv_block_apply.1} parent=11 // pred_region
        _
      $region20: #{conv_block_apply.1} parent=11 // pred_fallthru
        _
      // Predicated region
      $region21: #{conv_block_apply.1} parent=11 // pred_check
        %p531 = pneg %p143
      $region22: #{conv_block_apply.1} parent=11 // pred_check_branch
        %533 = sbr.rel (%p531) target = $region24
      $region23: #{conv_block_apply.1} parent=11 // pred_region
        _
      $region24: #{conv_block_apply.1} parent=11 // pred_fallthru
        _
      // Predicated region
      $region25: #{conv_block_apply.1} parent=11 // pred_check
        %p534 = pneg %p164
      $region26: #{conv_block_apply.1} parent=11 // pred_check_branch
        %536 = sbr.rel (%p534) target = $region28
      $region27: #{conv_block_apply.1} parent=11 // pred_region
        _
      $region28: #{conv_block_apply.1} parent=11 // pred_fallthru
        _
      // Predicated region
      $region29: #{conv_block_apply.1} parent=11 // pred_check
        %p537 = pneg %p185
      $region30: #{conv_block_apply.1} parent=11 // pred_check_branch
        %539 = sbr.rel (%p537) target = $region32
      $region31: #{conv_block_apply.1} parent=11 // pred_region
        _
      $region32: #{conv_block_apply.1} parent=11 // pred_fallthru
        _
      // Predicated region
      $region33: #{conv_block_apply.1} parent=11 // pred_check
        %p540 = pneg %p206
      $region34: #{conv_block_apply.1} parent=11 // pred_check_branch
        %542 = sbr.rel (%p540) target = $region36
      $region35: #{conv_block_apply.1} parent=11 // pred_region
        _
      $region36: #{conv_block_apply.1} parent=11 // pred_fallthru
        _
      // Predicated region
      $region37: #{conv_block_apply.1} parent=11 // pred_check
        %p543 = pneg %p227
      $region38: #{conv_block_apply.1} parent=11 // pred_check_branch
        %545 = sbr.rel (%p543) target = $region40
      $region39: #{conv_block_apply.1} parent=11 // pred_region
        _
      $region40: #{conv_block_apply.1} parent=11 // pred_fallthru
        _
      // Predicated region
      $region41: #{conv_block_apply.1} parent=11 // pred_check
        %p546 = pneg %p248
      $region42: #{conv_block_apply.1} parent=11 // pred_check_branch
        %548 = sbr.rel (%p546) target = $region44
      $region43: #{conv_block_apply.1} parent=11 // pred_region
        _
      $region44: #{conv_block_apply.1} parent=11 // pred_fallthru
        _
      // Predicated region
      $region45: #{conv_block_apply.1} parent=11 // pred_check
        %p549 = pneg %p269
      $region46: #{conv_block_apply.1} parent=11 // pred_check_branch
        %551 = sbr.rel (%p549) target = $region48
      $region47: #{conv_block_apply.1} parent=11 // pred_region
        _
      $region48: #{conv_block_apply.1} parent=11 // pred_fallthru
        _
      // Predicated region
      $region49: #{conv_block_apply.1} parent=11 // pred_check
        %p552 = pneg %p290
      $region50: #{conv_block_apply.1} parent=11 // pred_check_branch
        %554 = sbr.rel (%p552) target = $region52
      $region51: #{conv_block_apply.1} parent=11 // pred_region
        _
      $region52: #{conv_block_apply.1} parent=11 // pred_fallthru
        _
      // Predicated region
      $region53: #{conv_block_apply.1} parent=11 // pred_check
        %p555 = pneg %p311
      $region54: #{conv_block_apply.1} parent=11 // pred_check_branch
        %557 = sbr.rel (%p555) target = $region56
      $region55: #{conv_block_apply.1} parent=11 // pred_region
        _
      $region56: #{conv_block_apply.1} parent=11 // pred_fallthru
        _
      // Predicated region
      $region57: #{conv_block_apply.1} parent=11 // pred_check
        %p558 = pneg %p332
      $region58: #{conv_block_apply.1} parent=11 // pred_check_branch
        %560 = sbr.rel (%p558) target = $region60
      $region59: #{conv_block_apply.1} parent=11 // pred_region
        _
      $region60: #{conv_block_apply.1} parent=11 // pred_fallthru
        _
      // Predicated region
      $region61: #{conv_block_apply.1} parent=11 // pred_check
        %p561 = pneg %p353
      $region62: #{conv_block_apply.1} parent=11 // pred_check_branch
        %563 = sbr.rel (%p561) target = $region64
      $region63: #{conv_block_apply.1} parent=11 // pred_region
        _
      $region64: #{conv_block_apply.1} parent=11 // pred_fallthru
        _
      // Predicated region
      $region65: #{conv_block_apply.1} parent=11 // pred_check
        %p564 = pneg %p374
      $region66: #{conv_block_apply.1} parent=11 // pred_check_branch
        %566 = sbr.rel (%p564) target = $region68
      $region67: #{conv_block_apply.1} parent=11 // pred_region
        _
      $region68: #{conv_block_apply.1} parent=11 // pred_fallthru
        _
      // Predicated region
      $region69: #{conv_block_apply.1} parent=11 // pred_check
        %p567 = pneg %p395
      $region70: #{conv_block_apply.1} parent=11 // pred_check_branch
        %569 = sbr.rel (%p567) target = $region72
      $region71: #{conv_block_apply.1} parent=11 // pred_region
        _
      $region72: #{conv_block_apply.1} parent=11 // pred_fallthru
        _
      // Predicated region
      $region73: #{conv_block_apply.1} parent=11 // pred_check
        %p570 = pneg %p416
      $region74: #{conv_block_apply.1} parent=11 // pred_check_branch
        %572 = sbr.rel (%p570) target = $region76
      $region75: #{conv_block_apply.1} parent=11 // pred_region
        _
      $region76: #{conv_block_apply.1} parent=11 // pred_fallthru
        _
      // Predicated region
      $region77: #{conv_block_apply.1} parent=11 // pred_check
        %p573 = pneg %p437
      $region78: #{conv_block_apply.1} parent=11 // pred_check_branch
        %575 = sbr.rel (%p573) target = $region80
      $region79: #{conv_block_apply.1} parent=11 // pred_region
        _
      $region80: #{conv_block_apply.1} parent=11 // pred_fallthru
        _
      // Predicated region
      $region81: #{conv_block_apply.1} parent=11 // pred_check
        %p576 = pneg %p458
      $region82: #{conv_block_apply.1} parent=11 // pred_check_branch
        %578 = sbr.rel (%p576) target = $region84
      $region83: #{conv_block_apply.1} parent=11 // pred_region
        _
      $region84: #{conv_block_apply.1} parent=11 // pred_fallthru
        _
    $region12: #{conv_block_apply.1} parent=5 // pred_fallthru
      _
    %p579 = scmp.lt.s32.totalorder %s28, 2
    // Predicated region
    $region85: #{conv_block_apply.1} parent=5 // pred_check
      %p580 = pneg %p579
    $region86: #{conv_block_apply.1} parent=5 // pred_check_branch
      %582 = sbr.rel (%p580) target = $region88
    $region87: #{conv_block_apply.1} parent=5 // pred_region
      // Predicated region
      $region89: #{conv_block_apply.1} parent=87 // pred_check
        %p583 = pneg %p48
      $region90: #{conv_block_apply.1} parent=87 // pred_check_branch
        %585 = sbr.rel (%p583) target = $region92
      $region91: #{conv_block_apply.1} parent=87 // pred_region
        %p586 = scmp.lt.s32.totalorder %s28, 1
        %s587 = scalar_select %p586, %s28, 1
        %s588 = smul.addr %s587, 2
        %s589 = smul.addr %s588, 8
        %s590 = scalar_lea.vmem %s0, %s589
      $region92: #{conv_block_apply.1} parent=87 // pred_fallthru
        _
      // Predicated region
      $region93: #{conv_block_apply.1} parent=87 // pred_check
        %p591 = pneg %p74
      $region94: #{conv_block_apply.1} parent=87 // pred_check_branch
        %593 = sbr.rel (%p591) target = $region96
      $region95: #{conv_block_apply.1} parent=87 // pred_region
        %p594 = scmp.lt.s32.totalorder %s28, 1
        %s595 = scalar_select %p594, %s28, 1
        %s596 = smul.addr %s595, 2
        %s597 = smul.addr %s596, 8
        %s598 = scalar_lea.vmem %s1, %s597
      $region96: #{conv_block_apply.1} parent=87 // pred_fallthru
        _
    $region88: #{conv_block_apply.1} parent=5 // pred_fallthru
      _
    %p599 = scmp.le.s32.totalorder 1, %s28
    %p600 = scmp.lt.s32.totalorder %s28, 3
    %p601 = pnand %p599, %p600
    %p602 = pneg %p601
    // Predicated region
    $region97: #{conv_block_apply.1} parent=5 // pred_check
      _
    $region98: #{conv_block_apply.1} parent=5 // pred_check_branch
      %604 = sbr.rel (%p601) target = $region100
    $region99: #{conv_block_apply.1} parent=5 // pred_region
      %s605 = ssub.s32 %s28, 1
      %p606 = scmp.lt.s32.totalorder %s33, 1
      %s607 = scalar_select %p606, %s33, 1
      %s608 = smul.addr %s607, 2
      %s609 = smul.addr %s608, 8
      %s610 = scalar_lea.vmem %s0, %s609
      %p611 = pneg %p54
      %p612 = pneg %p51
      %p613 = scmp.lt.s32.totalorder %s33, 1
      %s614 = scalar_select %p613, %s33, 1
      %s615 = smul.addr %s614, 2
      %s616 = smul.addr %s615, 8
      %s617 = scalar_lea.vmem %s1, %s616
      %p618 = pneg %p80
      %p619 = pneg %p77
      %p620 = pneg %p101
      %p621 = pneg %p98
      %p622 = pneg %p122
      %p623 = pneg %p119
      %p624 = pneg %p143
      %p625 = pneg %p140
      %p626 = pneg %p164
      %p627 = pneg %p161
      %p628 = pneg %p185
      %p629 = pneg %p182
      %p630 = pneg %p206
      %p631 = pneg %p203
      %p632 = pneg %p227
      %p633 = pneg %p224
      %p634 = pneg %p248
      %p635 = pneg %p245
      %p636 = pneg %p269
      %p637 = pneg %p266
      %p638 = pneg %p290
      %p639 = pneg %p287
      %p640 = pneg %p311
      %p641 = pneg %p308
      %p642 = pneg %p332
      %p643 = pneg %p329
      %p644 = pneg %p353
      %p645 = pneg %p350
      %p646 = pneg %p374
      %p647 = pneg %p371
      %p648 = pneg %p395
      %p649 = pneg %p392
      %p650 = pneg %p416
      %p651 = pneg %p413
      %p652 = pneg %p437
      %p653 = pneg %p434
      %p654 = pneg %p458
      %p655 = pneg %p455
      %p656 = pneg %p484
      %p657 = pneg %p481
      %p658 = scmp.lt.s32.totalorder %s33, 1
      %s659 = scalar_select %p658, %s33, 1
      %s660 = smul.addr %s659, 2
      %s661 = smul.addr %s660, 8
      %s662 = scalar_lea.vmem %s20, %s661
      %p663 = pneg %p510
      %p664 = pneg %p507
      %p665 = scmp.lt.s32.totalorder %s33, 1
      %s666 = scalar_select %p665, %s33, 1
      %s667 = smul.addr %s666, 2
      %s668 = smul.addr %s667, 8
      %s669 = scalar_lea.vmem %s21, %s668
      %p670 = scmp.lt.s32.totalorder %s33, 1
      %s671 = scalar_select %p670, %s33, 1
      %s672 = smul.addr %s671, 2
      %s673 = smul.addr %s672, 8
      %s674 = scalar_lea.vmem %s0, %s673
      %p675 = scmp.lt.s32.totalorder %s33, 1
      %s676 = scalar_select %p675, %s33, 1
      %s677 = smul.addr %s676, 2
      %s678 = smul.addr %s677, 8
      %s679 = scalar_lea.vmem %s1, %s678
      %p680 = scmp.lt.s32.totalorder %s33, 1
      %s681 = scalar_select %p680, %s33, 1
      %s682 = smul.addr %s681, 2
      %s683 = smul.addr %s682, 8
      %s684 = scalar_lea.vmem %s20, %s683
      %p685 = scmp.lt.s32.totalorder %s33, 1
      %s686 = scalar_select %p685, %s33, 1
      %s687 = smul.addr %s686, 2
      %s688 = smul.addr %s687, 8
      %s689 = scalar_lea.vmem %s21, %s688
      %vm691 = vcmask 261120
      %692 = vst.msk [vmem:[#allocation2] sm:$0xff] %vm691, 0.0
      %693 = vst.msk [vmem:[#allocation2 + $0x8] sm:$0xff] %vm691, 0.0
      %vm694 = vcmask 257024
      %695 = vst.msk [vmem:[#allocation2 + $0x10] sm:$0xf] %vm694, 0.0
      %vm696 = vcmask 523264
      %697 = vst.msk [vmem:[#allocation3] sm:$0xff] %vm696, 0.0
      %698 = vst.msk [vmem:[#allocation3 + $0x8] sm:$0xff] %vm696, 0.0
      %vm699 = vcmask 519168
      %700 = vst.msk [vmem:[#allocation3 + $0x10] sm:$0xf] %vm699, 0.0
      %701 = vst.msk [vmem:[#allocation4] sm:$0xff] %vm696, 0.0
      %702 = vst.msk [vmem:[#allocation4 + $0x8] sm:$0xff] %vm696, 0.0
      %vm703 = vcmask 517120
      %704 = vst.msk [vmem:[#allocation4 + $0x10] sm:$0x3] %vm703, 0.0
      %705 = vst [vmem:[#allocation5] sm:$0xff] 0.0
      %706 = vst [vmem:[#allocation5 + $0x8] sm:$0xff] 0.0
      %707 = vst [vmem:[#allocation5 + $0x10] sm:$0x3] 0.0
      %708 = vst [vmem:[#allocation6] sm:$0xff] 0.0
      %709 = vst [vmem:[#allocation6 + $0x8] sm:$0xff] 0.0
      %710 = vst [vmem:[#allocation6 + $0x10] sm:$0xff] 0.0
      %711 = vst [vmem:[#allocation6 + $0x18] sm:$0xff] 0.0
      %712 = vst [vmem:[#allocation6 + $0x20] sm:$0xff] 0.0
      %713 = vst [vmem:[#allocation6 + $0x28] sm:$0xff] 0.0
      %714 = vst [vmem:[#allocation6 + $0x30] sm:$0x3] 0.0
      %715 = vst [vmem:[#allocation6 + $0x38] sm:$0x3] 0.0
      %716 = vst [vmem:[#allocation6 + $0x40] sm:$0x3] 0.0
      %v717 = vld [vmem:[%s674] sm:$0xff]
      %v718 = vld [vmem:[%s674 + $0x8] sm:$0xff]
      %v719 = vld [vmem:[%s679] sm:$0xff]
      %v720 = vld [vmem:[%s679 + $0x8] sm:$0xff]
      %v721 = vpack.c.bf16 %v718, %v717
      %v722 = vld [vmem:[%s2] sm:$0xf]
      %v723 = vld [vmem:[%s2 + $0x4] sm:$0xf]
      %v724 = vld [vmem:[%s2 + $0x8] sm:$0xf]
      %v725 = vld [vmem:[%s2 + $0xc] sm:$0xf]
      %v726 = vld [vmem:[%s2 + $0x10] sm:$0xf]
      %v727 = vld [vmem:[%s2 + $0x14] sm:$0xf]
      %v728 = vld [vmem:[%s2 + $0x18] sm:$0xf]
      %v729 = vld [vmem:[%s2 + $0x1c] sm:$0xf]
      %v730 = vld [vmem:[%s3] sm:$0x1]
      %v732 = vlaneseq
      %v733 = vshrl.u32 %v732, 7
      %v734 = vsub.s32 0, %v733
      %v735 = vrot.slane %v730, %v734
      %v745 = vunpack.c.l.b16 %v722
      %v746 = vunpack.c.l.b16 %v723
      %v747 = vunpack.c.l.b16 %v724
      %v748 = vunpack.c.l.b16 %v725
      %v749 = vunpack.c.l.b16 %v726
      %v750 = vunpack.c.l.b16 %v727
      %v751 = vunpack.c.l.b16 %v728
      %v752 = vunpack.c.l.b16 %v729
      %v753 = vpack.c.b16 %v746, %v745
      %v754 = vpack.c.b16 %v748, %v747
      %v755 = vpack.c.b16 %v750, %v749
      %v756 = vpack.c.b16 %v752, %v751
      %v762 = vsel %vm696, %v721, 0
      %764 = vmatprep.subr.bf16.mxu0 0
      %765 = vmatpush1.bf16.msra.mxu0 %v753
      %766 = vmatprep.subr.bf16.mxu0 0
      %767 = vmatpush1.bf16.msra.mxu0 %v754
      %768 = vmatprep.subr.bf16.mxu0 0
      %769 = vmatpush1.bf16.msra.mxu0 %v755
      %770 = vmatprep.subr.bf16.mxu0 0
      %771 = vmatpush1.bf16.msra.mxu0 %v756
      %772 = vmatprep.subr.bf16.mxu0 0
      %773 = vmatpush1.bf16.msra.mxu0 0
      %774 = vmatprep.subr.bf16.mxu0 0
      %775 = vmatpush1.bf16.msra.mxu0 0
      %776 = vmatprep.subr.bf16.mxu0 0
      %777 = vmatpush1.bf16.msra.mxu0 0
      %778 = vmatprep.subr.bf16.mxu0 0
      %779 = vmatpush1.bf16.msra.mxu0 0
      %780 = vmatprep.subr.bf16.mxu0 0
      %781 = vmatpush1.bf16.msra.mxu0 0
      %782 = vmatprep.subr.bf16.mxu0 0
      %783 = vmatpush1.bf16.msra.mxu0 0
      %784 = vmatprep.subr.bf16.mxu0 0
      %785 = vmatpush1.bf16.msra.mxu0 0
      %786 = vmatprep.subr.bf16.mxu0 0
      %787 = vmatpush1.bf16.msra.mxu0 0
      %788 = vmatprep.subr.bf16.mxu0 0
      %789 = vmatpush1.bf16.msra.mxu0 0
      %790 = vmatprep.subr.bf16.mxu0 0
      %791 = vmatpush1.bf16.msra.mxu0 0
      %792 = vmatprep.subr.bf16.mxu0 0
      %793 = vmatpush1.bf16.msra.mxu0 0
      %794 = vmatprep.subr.bf16.mxu0 0
      %795 = vmatpush1.bf16.msra.mxu0 0
      %796 = vmatprep.mubr.bf16.mxu0 0
      %797 = vmatmul.mubr.bf16.gmra.mrb[0].mxu0 %v762
      %v798 = vpop.f32.mrb[0].mxu0
      %v799 = vadd.f32 %v735, %v798
      %v800 = vpop.f32.mrb[0].mxu0
      %v801 = vpop.f32.mrb[0].mxu0
      %v802 = vadd.f32 %v735, %v801
      %v803 = vpop.f32.mrb[0].mxu0
      %804 = vdwg.mxu0
      %805 = vst.msk [vmem:[#allocation2 + $0x2] sm:$0xff] %vm691, %v719
      %806 = vst.msk [vmem:[#allocation2 + $0xa] sm:$0xff] %vm691, %v720
      %v807 = vld [vmem:[#allocation2] sm:$0xff]
      %v808 = vld [vmem:[#allocation2 + $0x8] sm:$0xff]
      %v809 = vpack.c.bf16 %v808, %v807
      %v810 = vld [vmem:[%s4] sm:$0xf]
      %v811 = vld [vmem:[%s4 + $0x4] sm:$0xf]
      %v812 = vld [vmem:[%s4 + $0x8] sm:$0xf]
      %v813 = vld [vmem:[%s4 + $0xc] sm:$0xf]
      %v814 = vld [vmem:[#allocation2 + $0x1] sm:$0xff]
      %v815 = vld [vmem:[#allocation2 + $0x9] sm:$0xff]
      %v816 = vpack.c.bf16 %v815, %v814
      %s817 = scalar_lea.vmem %s4, 16
      %v818 = vld [vmem:[%s817] sm:$0xf]
      %v819 = vld [vmem:[%s817 + $0x4] sm:$0xf]
      %v820 = vld [vmem:[%s817 + $0x8] sm:$0xf]
      %v821 = vld [vmem:[%s817 + $0xc] sm:$0xf]
      %v826 = vunpack.c.l.b16 %v818
      %v827 = vunpack.c.l.b16 %v819
      %v828 = vunpack.c.l.b16 %v820
      %v829 = vunpack.c.l.b16 %v821
      %v830 = vpack.c.b16 %v827, %v826
      %v831 = vpack.c.b16 %v829, %v828
      %v835 = vsel %vm691, %v816, 0
      %837 = vmatprep.subr.bf16.mxu0 0
      %838 = vmatpush1.bf16.msra.mxu0 %v830
      %839 = vmatprep.subr.bf16.mxu0 0
      %840 = vmatpush1.bf16.msra.mxu0 %v831
      %841 = vmatprep.subr.bf16.mxu0 0
      %842 = vmatpush1.bf16.msra.mxu0 0
      %843 = vmatprep.subr.bf16.mxu0 0
      %844 = vmatpush1.bf16.msra.mxu0 0
      %845 = vmatprep.subr.bf16.mxu0 0
      %846 = vmatpush1.bf16.msra.mxu0 0
      %847 = vmatprep.subr.bf16.mxu0 0
      %848 = vmatpush1.bf16.msra.mxu0 0
      %849 = vmatprep.subr.bf16.mxu0 0
      %850 = vmatpush1.bf16.msra.mxu0 0
      %851 = vmatprep.subr.bf16.mxu0 0
      %852 = vmatpush1.bf16.msra.mxu0 0
      %853 = vmatprep.subr.bf16.mxu0 0
      %854 = vmatpush1.bf16.msra.mxu0 0
      %855 = vmatprep.subr.bf16.mxu0 0
      %856 = vmatpush1.bf16.msra.mxu0 0
      %857 = vmatprep.subr.bf16.mxu0 0
      %858 = vmatpush1.bf16.msra.mxu0 0
      %859 = vmatprep.subr.bf16.mxu0 0
      %860 = vmatpush1.bf16.msra.mxu0 0
      %861 = vmatprep.subr.bf16.mxu0 0
      %862 = vmatpush1.bf16.msra.mxu0 0
      %863 = vmatprep.subr.bf16.mxu0 0
      %864 = vmatpush1.bf16.msra.mxu0 0
      %865 = vmatprep.subr.bf16.mxu0 0
      %866 = vmatpush1.bf16.msra.mxu0 0
      %867 = vmatprep.subr.bf16.mxu0 0
      %868 = vmatpush1.bf16.msra.mxu0 0
      %869 = vmatprep.mubr.bf16.mxu0 0
      %870 = vmatmul.mubr.bf16.gmra.mrb[0].mxu0 %v835
      %v871 = vpop.f32.mrb[0].mxu0
      %v872 = vadd.f32 0.0, %v871
      %v873 = vpop.f32.mrb[0].mxu0
      %v874 = vpop.f32.mrb[0].mxu0
      %v875 = vadd.f32 0.0, %v874
      %v876 = vpop.f32.mrb[0].mxu0
      %877 = vdwg.mxu0
      %v882 = vunpack.c.l.b16 %v810
      %v883 = vunpack.c.l.b16 %v811
      %v884 = vunpack.c.l.b16 %v812
      %v885 = vunpack.c.l.b16 %v813
      %v886 = vpack.c.b16 %v883, %v882
      %v887 = vpack.c.b16 %v885, %v884
      %v891 = vsel %vm691, %v809, 0
      %893 = vmatprep.subr.bf16.mxu0 0
      %894 = vmatpush1.bf16.msra.mxu0 %v886
      %895 = vmatprep.subr.bf16.mxu0 0
      %896 = vmatpush1.bf16.msra.mxu0 %v887
      %897 = vmatprep.subr.bf16.mxu0 0
      %898 = vmatpush1.bf16.msra.mxu0 0
      %899 = vmatprep.subr.bf16.mxu0 0
      %900 = vmatpush1.bf16.msra.mxu0 0
      %901 = vmatprep.subr.bf16.mxu0 0
      %902 = vmatpush1.bf16.msra.mxu0 0
      %903 = vmatprep.subr.bf16.mxu0 0
      %904 = vmatpush1.bf16.msra.mxu0 0
      %905 = vmatprep.subr.bf16.mxu0 0
      %906 = vmatpush1.bf16.msra.mxu0 0
      %907 = vmatprep.subr.bf16.mxu0 0
      %908 = vmatpush1.bf16.msra.mxu0 0
      %909 = vmatprep.subr.bf16.mxu0 0
      %910 = vmatpush1.bf16.msra.mxu0 0
      %911 = vmatprep.subr.bf16.mxu0 0
      %912 = vmatpush1.bf16.msra.mxu0 0
      %913 = vmatprep.subr.bf16.mxu0 0
      %914 = vmatpush1.bf16.msra.mxu0 0
      %915 = vmatprep.subr.bf16.mxu0 0
      %916 = vmatpush1.bf16.msra.mxu0 0
      %917 = vmatprep.subr.bf16.mxu0 0
      %918 = vmatpush1.bf16.msra.mxu0 0
      %919 = vmatprep.subr.bf16.mxu0 0
      %920 = vmatpush1.bf16.msra.mxu0 0
      %921 = vmatprep.subr.bf16.mxu0 0
      %922 = vmatpush1.bf16.msra.mxu0 0
      %923 = vmatprep.subr.bf16.mxu0 0
      %924 = vmatpush1.bf16.msra.mxu0 0
      %925 = vmatprep.mubr.bf16.mxu0 0
      %926 = vmatmul.mubr.bf16.gmra.mrb[0].mxu0 %v891
      %v927 = vpop.f32.mrb[0].mxu0
      %v928 = vadd.f32 %v872, %v927
      %v929 = vpop.f32.mrb[0].mxu0
      %v930 = vpop.f32.mrb[0].mxu0
      %v931 = vadd.f32 %v875, %v930
      %v932 = vpop.f32.mrb[0].mxu0
      %933 = vdwg.mxu0
      %v934 = vld [vmem:[#allocation2 + $0x2] sm:$0xff]
      %v935 = vld [vmem:[#allocation2 + $0xa] sm:$0xff]
      %v936 = vpack.c.bf16 %v935, %v934
      %s937 = scalar_lea.vmem %s4, 32
      %v938 = vld [vmem:[%s937] sm:$0xf]
      %v939 = vld [vmem:[%s937 + $0x4] sm:$0xf]
      %v940 = vld [vmem:[%s937 + $0x8] sm:$0xf]
      %v941 = vld [vmem:[%s937 + $0xc] sm:$0xf]
      %v946 = vunpack.c.l.b16 %v938
      %v947 = vunpack.c.l.b16 %v939
      %v948 = vunpack.c.l.b16 %v940
      %v949 = vunpack.c.l.b16 %v941
      %v950 = vpack.c.b16 %v947, %v946
      %v951 = vpack.c.b16 %v949, %v948
      %v955 = vsel %vm691, %v936, 0
      %957 = vmatprep.subr.bf16.mxu0 0
      %958 = vmatpush1.bf16.msra.mxu0 %v950
      %959 = vmatprep.subr.bf16.mxu0 0
      %960 = vmatpush1.bf16.msra.mxu0 %v951
      %961 = vmatprep.subr.bf16.mxu0 0
      %962 = vmatpush1.bf16.msra.mxu0 0
      %963 = vmatprep.subr.bf16.mxu0 0
      %964 = vmatpush1.bf16.msra.mxu0 0
      %965 = vmatprep.subr.bf16.mxu0 0
      %966 = vmatpush1.bf16.msra.mxu0 0
      %967 = vmatprep.subr.bf16.mxu0 0
      %968 = vmatpush1.bf16.msra.mxu0 0
      %969 = vmatprep.subr.bf16.mxu0 0
      %970 = vmatpush1.bf16.msra.mxu0 0
      %971 = vmatprep.subr.bf16.mxu0 0
      %972 = vmatpush1.bf16.msra.mxu0 0
      %973 = vmatprep.subr.bf16.mxu0 0
      %974 = vmatpush1.bf16.msra.mxu0 0
      %975 = vmatprep.subr.bf16.mxu0 0
      %976 = vmatpush1.bf16.msra.mxu0 0
      %977 = vmatprep.subr.bf16.mxu0 0
      %978 = vmatpush1.bf16.msra.mxu0 0
      %979 = vmatprep.subr.bf16.mxu0 0
      %980 = vmatpush1.bf16.msra.mxu0 0
      %981 = vmatprep.subr.bf16.mxu0 0
      %982 = vmatpush1.bf16.msra.mxu0 0
      %983 = vmatprep.subr.bf16.mxu0 0
      %984 = vmatpush1.bf16.msra.mxu0 0
      %985 = vmatprep.subr.bf16.mxu0 0
      %986 = vmatpush1.bf16.msra.mxu0 0
      %987 = vmatprep.subr.bf16.mxu0 0
      %988 = vmatpush1.bf16.msra.mxu0 0
      %989 = vmatprep.mubr.bf16.mxu0 0
      %990 = vmatmul.mubr.bf16.gmra.mrb[0].mxu0 %v955
      %v991 = vpop.f32.mrb[0].mxu0
      %v992 = vadd.f32 0.0, %v991
      %v993 = vpop.f32.mrb[0].mxu0
      %v994 = vpop.f32.mrb[0].mxu0
      %v995 = vadd.f32 0.0, %v994
      %v996 = vpop.f32.mrb[0].mxu0
      %997 = vdwg.mxu0
      %v998 = vadd.f32 %v928, %v992
      %v999 = vadd.f32 %v931, %v995
      %v1000 = vld [vmem:[#allocation2 + $0x3] sm:$0xff]
      %v1001 = vld [vmem:[#allocation2 + $0xb] sm:$0xff]
      %v1002 = vpack.c.bf16 %v1001, %v1000
      %s1003 = scalar_lea.vmem %s4, 48
      %v1004 = vld [vmem:[%s1003] sm:$0xf]
      %v1005 = vld [vmem:[%s1003 + $0x4] sm:$0xf]
      %v1006 = vld [vmem:[%s1003 + $0x8] sm:$0xf]
      %v1007 = vld [vmem:[%s1003 + $0xc] sm:$0xf]
      %v1012 = vunpack.c.l.b16 %v1004
      %v1013 = vunpack.c.l.b16 %v1005
      %v1014 = vunpack.c.l.b16 %v1006
      %v1015 = vunpack.c.l.b16 %v1007
      %v1016 = vpack.c.b16 %v1013, %v1012
      %v1017 = vpack.c.b16 %v1015, %v1014
      %v1021 = vsel %vm691, %v1002, 0
      %1023 = vmatprep.subr.bf16.mxu0 0
      %1024 = vmatpush1.bf16.msra.mxu0 %v1016
      %1025 = vmatprep.subr.bf16.mxu0 0
      %1026 = vmatpush1.bf16.msra.mxu0 %v1017
      %1027 = vmatprep.subr.bf16.mxu0 0
      %1028 = vmatpush1.bf16.msra.mxu0 0
      %1029 = vmatprep.subr.bf16.mxu0 0
      %1030 = vmatpush1.bf16.msra.mxu0 0
      %1031 = vmatprep.subr.bf16.mxu0 0
      %1032 = vmatpush1.bf16.msra.mxu0 0
      %1033 = vmatprep.subr.bf16.mxu0 0
      %1034 = vmatpush1.bf16.msra.mxu0 0
      %1035 = vmatprep.subr.bf16.mxu0 0
      %1036 = vmatpush1.bf16.msra.mxu0 0
      %1037 = vmatprep.subr.bf16.mxu0 0
      %1038 = vmatpush1.bf16.msra.mxu0 0
      %1039 = vmatprep.subr.bf16.mxu0 0
      %1040 = vmatpush1.bf16.msra.mxu0 0
      %1041 = vmatprep.subr.bf16.mxu0 0
      %1042 = vmatpush1.bf16.msra.mxu0 0
      %1043 = vmatprep.subr.bf16.mxu0 0
      %1044 = vmatpush1.bf16.msra.mxu0 0
      %1045 = vmatprep.subr.bf16.mxu0 0
      %1046 = vmatpush1.bf16.msra.mxu0 0
      %1047 = vmatprep.subr.bf16.mxu0 0
      %1048 = vmatpush1.bf16.msra.mxu0 0
      %1049 = vmatprep.subr.bf16.mxu0 0
      %1050 = vmatpush1.bf16.msra.mxu0 0
      %1051 = vmatprep.subr.bf16.mxu0 0
      %1052 = vmatpush1.bf16.msra.mxu0 0
      %1053 = vmatprep.subr.bf16.mxu0 0
      %1054 = vmatpush1.bf16.msra.mxu0 0
      %1055 = vmatprep.mubr.bf16.mxu0 0
      %1056 = vmatmul.mubr.bf16.gmra.mrb[0].mxu0 %v1021
      %v1057 = vpop.f32.mrb[0].mxu0
      %v1058 = vadd.f32 0.0, %v1057
      %v1059 = vpop.f32.mrb[0].mxu0
      %v1060 = vpop.f32.mrb[0].mxu0
      %v1061 = vadd.f32 0.0, %v1060
      %v1062 = vpop.f32.mrb[0].mxu0
      %1063 = vdwg.mxu0
      %v1064 = vadd.f32 %v998, %v1058
      %v1065 = vadd.f32 %v999, %v1061
      %v1066 = vld [vmem:[#allocation2 + $0x4] sm:$0xff]
      %v1067 = vld [vmem:[#allocation2 + $0xc] sm:$0xff]
      %v1068 = vpack.c.bf16 %v1067, %v1066
      %s1069 = scalar_lea.vmem %s4, 64
      %v1070 = vld [vmem:[%s1069] sm:$0xf]
      %v1071 = vld [vmem:[%s1069 + $0x4] sm:$0xf]
      %v1072 = vld [vmem:[%s1069 + $0x8] sm:$0xf]
      %v1073 = vld [vmem:[%s1069 + $0xc] sm:$0xf]
      %v1078 = vunpack.c.l.b16 %v1070
      %v1079 = vunpack.c.l.b16 %v1071
      %v1080 = vunpack.c.l.b16 %v1072
      %v1081 = vunpack.c.l.b16 %v1073
      %v1082 = vpack.c.b16 %v1079, %v1078
      %v1083 = vpack.c.b16 %v1081, %v1080
      %v1087 = vsel %vm691, %v1068, 0
      %1089 = vmatprep.subr.bf16.mxu0 0
      %1090 = vmatpush1.bf16.msra.mxu0 %v1082
      %1091 = vmatprep.subr.bf16.mxu0 0
      %1092 = vmatpush1.bf16.msra.mxu0 %v1083
      %1093 = vmatprep.subr.bf16.mxu0 0
      %1094 = vmatpush1.bf16.msra.mxu0 0
      %1095 = vmatprep.subr.bf16.mxu0 0
      %1096 = vmatpush1.bf16.msra.mxu0 0
      %1097 = vmatprep.subr.bf16.mxu0 0
      %1098 = vmatpush1.bf16.msra.mxu0 0
      %1099 = vmatprep.subr.bf16.mxu0 0
      %1100 = vmatpush1.bf16.msra.mxu0 0
      %1101 = vmatprep.subr.bf16.mxu0 0
      %1102 = vmatpush1.bf16.msra.mxu0 0
      %1103 = vmatprep.subr.bf16.mxu0 0
      %1104 = vmatpush1.bf16.msra.mxu0 0
      %1105 = vmatprep.subr.bf16.mxu0 0
      %1106 = vmatpush1.bf16.msra.mxu0 0
      %1107 = vmatprep.subr.bf16.mxu0 0
      %1108 = vmatpush1.bf16.msra.mxu0 0
      %1109 = vmatprep.subr.bf16.mxu0 0
      %1110 = vmatpush1.bf16.msra.mxu0 0
      %1111 = vmatprep.subr.bf16.mxu0 0
      %1112 = vmatpush1.bf16.msra.mxu0 0
      %1113 = vmatprep.subr.bf16.mxu0 0
      %1114 = vmatpush1.bf16.msra.mxu0 0
      %1115 = vmatprep.subr.bf16.mxu0 0
      %1116 = vmatpush1.bf16.msra.mxu0 0
      %1117 = vmatprep.subr.bf16.mxu0 0
      %1118 = vmatpush1.bf16.msra.mxu0 0
      %1119 = vmatprep.subr.bf16.mxu0 0
      %1120 = vmatpush1.bf16.msra.mxu0 0
      %1121 = vmatprep.mubr.bf16.mxu0 0
      %1122 = vmatmul.mubr.bf16.gmra.mrb[0].mxu0 %v1087
      %v1123 = vpop.f32.mrb[0].mxu0
      %v1124 = vadd.f32 0.0, %v1123
      %v1125 = vpop.f32.mrb[0].mxu0
      %v1126 = vpop.f32.mrb[0].mxu0
      %v1127 = vadd.f32 0.0, %v1126
      %v1128 = vpop.f32.mrb[0].mxu0
      %1129 = vdwg.mxu0
      %v1130 = vadd.f32 %v1064, %v1124
      %v1131 = vadd.f32 %v1065, %v1127
      %v1132 = vld [vmem:[%s5] sm:$0x1]
      %v1134 = vlaneseq
      %v1135 = vshrl.u32 %v1134, 7
      %v1136 = vsub.s32 0, %v1135
      %v1137 = vrot.slane %v1132, %v1136
      %v1139 = vadd.f32 %v1130, %v1137
      %v1140 = vadd.f32 %v1131, %v1137
      %vm1141 = vcmp.ge.f32.partialorder %v1139, 0.0
      %vm1142 = vcmp.ge.f32.partialorder %v1140, 0.0
      %v1143 = vmul.f32 %v1139, 0.01
      %v1144 = vmul.f32 %v1140, 0.01
      %v1145 = vsel %vm1141, %v1139, %v1143
      %v1146 = vsel %vm1142, %v1140, %v1144
      %v1147 = vpack.c.bf16 %v1146, %v1145
      %v1148 = vld [vmem:[%s6] sm:$0xff]
      %v1149 = vld [vmem:[%s6 + $0x8] sm:$0xff]
      %v1150 = vld [vmem:[%s6 + $0x10] sm:$0xff]
      %v1151 = vld [vmem:[%s6 + $0x18] sm:$0xff]
      %v1152 = vld [vmem:[%s6 + $0x20] sm:$0xf]
      %v1153 = vld [vmem:[%s6 + $0x24] sm:$0xff]
      %v1154 = vld [vmem:[%s6 + $0x2c] sm:$0xff]
      %v1155 = vld [vmem:[%s6 + $0x34] sm:$0xff]
      %v1156 = vld [vmem:[%s6 + $0x3c] sm:$0xff]
      %v1157 = vld [vmem:[%s6 + $0x44] sm:$0xf]
      %v1158 = vld [vmem:[%s6 + $0x48] sm:$0xff]
      %v1159 = vld [vmem:[%s6 + $0x50] sm:$0xff]
      %v1160 = vld [vmem:[%s6 + $0x58] sm:$0xff]
      %v1161 = vld [vmem:[%s6 + $0x60] sm:$0xff]
      %v1162 = vld [vmem:[%s6 + $0x68] sm:$0xf]
      %v1163 = vld [vmem:[%s6 + $0x6c] sm:$0xff]
      %v1164 = vld [vmem:[%s6 + $0x74] sm:$0xff]
      %v1165 = vld [vmem:[%s6 + $0x7c] sm:$0xff]
      %v1166 = vld [vmem:[%s6 + $0x84] sm:$0xff]
      %v1167 = vld [vmem:[%s6 + $0x8c] sm:$0xf]
      %v1168 = vld [vmem:[%s6 + $0x90] sm:$0xff]
      %v1169 = vld [vmem:[%s6 + $0x98] sm:$0xff]
      %v1170 = vld [vmem:[%s6 + $0xa0] sm:$0xff]
      %v1171 = vld [vmem:[%s6 + $0xa8] sm:$0xff]
      %v1172 = vld [vmem:[%s6 + $0xb0] sm:$0xf]
      %v1173 = vld [vmem:[%s6 + $0xb4] sm:$0xff]
      %v1174 = vld [vmem:[%s6 + $0xbc] sm:$0xff]
      %v1175 = vld [vmem:[%s6 + $0xc4] sm:$0xff]
      %v1176 = vld [vmem:[%s6 + $0xcc] sm:$0xff]
      %v1177 = vld [vmem:[%s6 + $0xd4] sm:$0xf]
      %v1178 = vld [vmem:[%s6 + $0xd8] sm:$0xff]
      %v1179 = vld [vmem:[%s6 + $0xe0] sm:$0xff]
      %v1180 = vld [vmem:[%s6 + $0xe8] sm:$0xff]
      %v1181 = vld [vmem:[%s6 + $0xf0] sm:$0xff]
      %v1182 = vld [vmem:[%s6 + $0xf8] sm:$0xf]
      %v1183 = vld [vmem:[%s6 + $0xfc] sm:$0xff]
      %v1184 = vld [vmem:[%s6 + $0x104] sm:$0xff]
      %v1185 = vld [vmem:[%s6 + $0x10c] sm:$0xff]
      %v1186 = vld [vmem:[%s6 + $0x114] sm:$0xff]
      %v1187 = vld [vmem:[%s6 + $0x11c] sm:$0xf]
      %v1188 = vld [vmem:[%s6 + $0x120] sm:$0xff]
      %v1189 = vld [vmem:[%s6 + $0x128] sm:$0xff]
      %v1190 = vld [vmem:[%s6 + $0x130] sm:$0xff]
      %v1191 = vld [vmem:[%s6 + $0x138] sm:$0xff]
      %v1192 = vld [vmem:[%s6 + $0x140] sm:$0xf]
      %v1193 = vld [vmem:[%s6 + $0x144] sm:$0xff]
      %v1194 = vld [vmem:[%s6 + $0x14c] sm:$0xff]
      %v1195 = vld [vmem:[%s6 + $0x154] sm:$0xff]
      %v1196 = vld [vmem:[%s6 + $0x15c] sm:$0xff]
      %v1197 = vld [vmem:[%s6 + $0x164] sm:$0xf]
      %v1198 = vld [vmem:[%s6 + $0x168] sm:$0xff]
      %v1199 = vld [vmem:[%s6 + $0x170] sm:$0xff]
      %v1200 = vld [vmem:[%s6 + $0x178] sm:$0xff]
      %v1201 = vld [vmem:[%s6 + $0x180] sm:$0xff]
      %v1202 = vld [vmem:[%s6 + $0x188] sm:$0xf]
      %v1203 = vld [vmem:[%s6 + $0x18c] sm:$0xff]
      %v1204 = vld [vmem:[%s6 + $0x194] sm:$0xff]
      %v1205 = vld [vmem:[%s6 + $0x19c] sm:$0xff]
      %v1206 = vld [vmem:[%s6 + $0x1a4] sm:$0xff]
      %v1207 = vld [vmem:[%s6 + $0x1ac] sm:$0xf]
      %v1208 = vld [vmem:[%s7] sm:$0xff]
      %v1209 = vld [vmem:[%s7 + $0x8] sm:$0x1]
      %v1212 = vlaneseq
      %v1213 = vshrl.u32 %v1212, 7
      %v1214 = vsub.s32 0, %v1213
      %v1215 = vrot.slane %v1208, %v1214
      %v1216 = vlaneseq
      %v1217 = vshrl.u32 %v1216, 7
      %v1218 = vsub.s32 1, %v1217
      %v1219 = vrot.slane %v1208, %v1218
      %v1220 = vlaneseq
      %v1221 = vshrl.u32 %v1220, 7
      %v1222 = vsub.s32 2, %v1221
      %v1223 = vrot.slane %v1208, %v1222
      %v1224 = vlaneseq
      %v1225 = vshrl.u32 %v1224, 7
      %v1226 = vsub.s32 3, %v1225
      %v1227 = vrot.slane %v1208, %v1226
      %v1228 = vlaneseq
      %v1229 = vshrl.u32 %v1228, 7
      %v1230 = vsub.s32 4, %v1229
      %v1231 = vrot.slane %v1208, %v1230
      %v1232 = vlaneseq
      %v1233 = vshrl.u32 %v1232, 7
      %v1234 = vsub.s32 5, %v1233
      %v1235 = vrot.slane %v1208, %v1234
      %v1236 = vlaneseq
      %v1237 = vshrl.u32 %v1236, 7
      %v1238 = vsub.s32 6, %v1237
      %v1239 = vrot.slane %v1208, %v1238
      %v1240 = vlaneseq
      %v1241 = vshrl.u32 %v1240, 7
      %v1242 = vsub.s32 7, %v1241
      %v1243 = vrot.slane %v1208, %v1242
      %v1244 = vlaneseq
      %v1245 = vshrl.u32 %v1244, 7
      %v1246 = vsub.s32 0, %v1245
      %v1247 = vrot.slane %v1209, %v1246
      %v1317 = vunpack.c.l.b16 %v1148
      %v1318 = vunpack.c.h.b16 %v1148
      %v1319 = vunpack.c.l.b16 %v1149
      %v1320 = vunpack.c.h.b16 %v1149
      %v1321 = vunpack.c.l.b16 %v1150
      %v1322 = vunpack.c.h.b16 %v1150
      %v1323 = vunpack.c.l.b16 %v1151
      %v1324 = vunpack.c.h.b16 %v1151
      %v1325 = vunpack.c.l.b16 %v1152
      %v1326 = vunpack.c.l.b16 %v1153
      %v1327 = vunpack.c.h.b16 %v1153
      %v1328 = vunpack.c.l.b16 %v1154
      %v1329 = vunpack.c.h.b16 %v1154
      %v1330 = vunpack.c.l.b16 %v1155
      %v1331 = vunpack.c.h.b16 %v1155
      %v1332 = vunpack.c.l.b16 %v1156
      %v1333 = vunpack.c.h.b16 %v1156
      %v1334 = vunpack.c.l.b16 %v1157
      %v1335 = vunpack.c.l.b16 %v1158
      %v1336 = vunpack.c.h.b16 %v1158
      %v1337 = vunpack.c.l.b16 %v1159
      %v1338 = vunpack.c.h.b16 %v1159
      %v1339 = vunpack.c.l.b16 %v1160
      %v1340 = vunpack.c.h.b16 %v1160
      %v1341 = vunpack.c.l.b16 %v1161
      %v1342 = vunpack.c.h.b16 %v1161
      %v1343 = vunpack.c.l.b16 %v1162
      %v1344 = vunpack.c.l.b16 %v1163
      %v1345 = vunpack.c.h.b16 %v1163
      %v1346 = vunpack.c.l.b16 %v1164
      %v1347 = vunpack.c.h.b16 %v1164
      %v1348 = vunpack.c.l.b16 %v1165
      %v1349 = vunpack.c.h.b16 %v1165
      %v1350 = vunpack.c.l.b16 %v1166
      %v1351 = vunpack.c.h.b16 %v1166
      %v1352 = vunpack.c.l.b16 %v1167
      %v1353 = vunpack.c.l.b16 %v1168
      %v1354 = vunpack.c.h.b16 %v1168
      %v1355 = vunpack.c.l.b16 %v1169
      %v1356 = vunpack.c.h.b16 %v1169
      %v1357 = vunpack.c.l.b16 %v1170
      %v1358 = vunpack.c.h.b16 %v1170
      %v1359 = vunpack.c.l.b16 %v1171
      %v1360 = vunpack.c.h.b16 %v1171
      %v1361 = vunpack.c.l.b16 %v1172
      %v1362 = vunpack.c.l.b16 %v1173
      %v1363 = vunpack.c.h.b16 %v1173
      %v1364 = vunpack.c.l.b16 %v1174
      %v1365 = vunpack.c.h.b16 %v1174
      %v1366 = vunpack.c.l.b16 %v1175
      %v1367 = vunpack.c.h.b16 %v1175
      %v1368 = vunpack.c.l.b16 %v1176
      %v1369 = vunpack.c.h.b16 %v1176
      %v1370 = vunpack.c.l.b16 %v1177
      %v1371 = vunpack.c.l.b16 %v1178
      %v1372 = vunpack.c.h.b16 %v1178
      %v1373 = vunpack.c.l.b16 %v1179
      %v1374 = vunpack.c.h.b16 %v1179
      %v1375 = vunpack.c.l.b16 %v1180
      %v1376 = vunpack.c.h.b16 %v1180
      %v1377 = vunpack.c.l.b16 %v1181
      %v1378 = vunpack.c.h.b16 %v1181
      %v1379 = vunpack.c.l.b16 %v1182
      %v1380 = vunpack.c.l.b16 %v1183
      %v1381 = vunpack.c.h.b16 %v1183
      %v1382 = vunpack.c.l.b16 %v1184
      %v1383 = vunpack.c.h.b16 %v1184
      %v1384 = vunpack.c.l.b16 %v1185
      %v1385 = vunpack.c.h.b16 %v1185
      %v1386 = vunpack.c.l.b16 %v1186
      %v1387 = vunpack.c.h.b16 %v1186
      %v1388 = vunpack.c.l.b16 %v1187
      %v1389 = vunpack.c.l.b16 %v1188
      %v1390 = vunpack.c.h.b16 %v1188
      %v1391 = vunpack.c.l.b16 %v1189
      %v1392 = vunpack.c.h.b16 %v1189
      %v1393 = vunpack.c.l.b16 %v1190
      %v1394 = vunpack.c.h.b16 %v1190
      %v1395 = vunpack.c.l.b16 %v1191
      %v1396 = vunpack.c.h.b16 %v1191
      %v1397 = vunpack.c.l.b16 %v1192
      %v1398 = vunpack.c.l.b16 %v1193
      %v1399 = vunpack.c.h.b16 %v1193
      %v1400 = vunpack.c.l.b16 %v1194
      %v1401 = vunpack.c.h.b16 %v1194
      %v1402 = vunpack.c.l.b16 %v1195
      %v1403 = vunpack.c.h.b16 %v1195
      %v1404 = vunpack.c.l.b16 %v1196
      %v1405 = vunpack.c.h.b16 %v1196
      %v1406 = vunpack.c.l.b16 %v1197
      %v1407 = vunpack.c.l.b16 %v1198
      %v1408 = vunpack.c.h.b16 %v1198
      %v1409 = vunpack.c.l.b16 %v1199
      %v1410 = vunpack.c.h.b16 %v1199
      %v1411 = vunpack.c.l.b16 %v1200
      %v1412 = vunpack.c.h.b16 %v1200
      %v1413 = vunpack.c.l.b16 %v1201
      %v1414 = vunpack.c.h.b16 %v1201
      %v1415 = vunpack.c.l.b16 %v1202
      %v1416 = vunpack.c.l.b16 %v1203
      %v1417 = vunpack.c.h.b16 %v1203
      %v1418 = vunpack.c.l.b16 %v1204
      %v1419 = vunpack.c.h.b16 %v1204
      %v1420 = vunpack.c.l.b16 %v1205
      %v1421 = vunpack.c.h.b16 %v1205
      %v1422 = vunpack.c.l.b16 %v1206
      %v1423 = vunpack.c.h.b16 %v1206
      %v1424 = vunpack.c.l.b16 %v1207
      %v1425 = vpack.c.b16 %v1326, %v1317
      %v1426 = vpack.c.b16 %v1327, %v1318
      %v1427 = vpack.c.b16 %v1328, %v1319
      %v1428 = vpack.c.b16 %v1329, %v1320
      %v1429 = vpack.c.b16 %v1330, %v1321
      %v1430 = vpack.c.b16 %v1331, %v1322
      %v1431 = vpack.c.b16 %v1332, %v1323
      %v1432 = vpack.c.b16 %v1333, %v1324
      %v1433 = vpack.c.b16 %v1334, %v1325
      %v1434 = vpack.c.b16 %v1344, %v1335
      %v1435 = vpack.c.b16 %v1345, %v1336
      %v1436 = vpack.c.b16 %v1346, %v1337
      %v1437 = vpack.c.b16 %v1347, %v1338
      %v1438 = vpack.c.b16 %v1348, %v1339
      %v1439 = vpack.c.b16 %v1349, %v1340
      %v1440 = vpack.c.b16 %v1350, %v1341
      %v1441 = vpack.c.b16 %v1351, %v1342
      %v1442 = vpack.c.b16 %v1352, %v1343
      %v1443 = vpack.c.b16 %v1362, %v1353
      %v1444 = vpack.c.b16 %v1363, %v1354
      %v1445 = vpack.c.b16 %v1364, %v1355
      %v1446 = vpack.c.b16 %v1365, %v1356
      %v1447 = vpack.c.b16 %v1366, %v1357
      %v1448 = vpack.c.b16 %v1367, %v1358
      %v1449 = vpack.c.b16 %v1368, %v1359
      %v1450 = vpack.c.b16 %v1369, %v1360
      %v1451 = vpack.c.b16 %v1370, %v1361
      %v1452 = vpack.c.b16 %v1380, %v1371
      %v1453 = vpack.c.b16 %v1381, %v1372
      %v1454 = vpack.c.b16 %v1382, %v1373
      %v1455 = vpack.c.b16 %v1383, %v1374
      %v1456 = vpack.c.b16 %v1384, %v1375
      %v1457 = vpack.c.b16 %v1385, %v1376
      %v1458 = vpack.c.b16 %v1386, %v1377
      %v1459 = vpack.c.b16 %v1387, %v1378
      %v1460 = vpack.c.b16 %v1388, %v1379
      %v1461 = vpack.c.b16 %v1398, %v1389
      %v1462 = vpack.c.b16 %v1399, %v1390
      %v1463 = vpack.c.b16 %v1400, %v1391
      %v1464 = vpack.c.b16 %v1401, %v1392
      %v1465 = vpack.c.b16 %v1402, %v1393
      %v1466 = vpack.c.b16 %v1403, %v1394
      %v1467 = vpack.c.b16 %v1404, %v1395
      %v1468 = vpack.c.b16 %v1405, %v1396
      %v1469 = vpack.c.b16 %v1406, %v1397
      %v1470 = vpack.c.b16 %v1416, %v1407
      %v1471 = vpack.c.b16 %v1417, %v1408
      %v1472 = vpack.c.b16 %v1418, %v1409
      %v1473 = vpack.c.b16 %v1419, %v1410
      %v1474 = vpack.c.b16 %v1420, %v1411
      %v1475 = vpack.c.b16 %v1421, %v1412
      %v1476 = vpack.c.b16 %v1422, %v1413
      %v1477 = vpack.c.b16 %v1423, %v1414
      %v1478 = vpack.c.b16 %v1424, %v1415
      %vm1533 = vcmask 785408
      %v1535 = vsel %vm1533, %v1147, 0
      %1537 = vmatprep.subr.bf16.mxu0 %v1426
      %1538 = vmatpush1.bf16.msra.mxu0 %v1425
      %1539 = vmatprep.subr.bf16.mxu0 %v1435
      %1540 = vmatpush1.bf16.msra.mxu0 %v1434
      %1541 = vmatprep.subr.bf16.mxu0 %v1444
      %1542 = vmatpush1.bf16.msra.mxu0 %v1443
      %1543 = vmatprep.subr.bf16.mxu0 %v1453
      %1544 = vmatpush1.bf16.msra.mxu0 %v1452
      %1545 = vmatprep.subr.bf16.mxu0 %v1462
      %1546 = vmatpush1.bf16.msra.mxu0 %v1461
      %1547 = vmatprep.subr.bf16.mxu0 %v1471
      %1548 = vmatpush1.bf16.msra.mxu0 %v1470
      %1549 = vmatprep.subr.bf16.mxu0 0
      %1550 = vmatpush1.bf16.msra.mxu0 0
      %1551 = vmatprep.subr.bf16.mxu0 0
      %1552 = vmatpush1.bf16.msra.mxu0 0
      %1553 = vmatprep.subr.bf16.mxu0 0
      %1554 = vmatpush1.bf16.msra.mxu0 0
      %1555 = vmatprep.subr.bf16.mxu0 0
      %1556 = vmatpush1.bf16.msra.mxu0 0
      %1557 = vmatprep.subr.bf16.mxu0 0
      %1558 = vmatpush1.bf16.msra.mxu0 0
      %1559 = vmatprep.subr.bf16.mxu0 0
      %1560 = vmatpush1.bf16.msra.mxu0 0
      %1561 = vmatprep.subr.bf16.mxu0 0
      %1562 = vmatpush1.bf16.msra.mxu0 0
      %1563 = vmatprep.subr.bf16.mxu0 0
      %1564 = vmatpush1.bf16.msra.mxu0 0
      %1565 = vmatprep.subr.bf16.mxu0 0
      %1566 = vmatpush1.bf16.msra.mxu0 0
      %1567 = vmatprep.subr.bf16.mxu0 0
      %1568 = vmatpush1.bf16.msra.mxu0 0
      %1569 = vmatprep.mubr.bf16.mxu0 0
      %1570 = vmatmul.mubr.bf16.gmra.mrb[0].mxu0 %v1535
      %v1571 = vpop.f32.mrb[0].mxu0
      %v1572 = vadd.f32 %v1215, %v1571
      %v1573 = vpop.f32.mrb[0].mxu0
      %v1574 = vadd.f32 %v1219, %v1573
      %v1575 = vpop.f32.mrb[0].mxu0
      %v1576 = vadd.f32 %v1215, %v1575
      %v1577 = vpop.f32.mrb[0].mxu0
      %v1578 = vadd.f32 %v1219, %v1577
      %1579 = vdwg.mxu0
      %1580 = vmatprep.subr.bf16.mxu0 %v1428
      %1581 = vmatpush1.bf16.msra.mxu0 %v1427
      %1582 = vmatprep.subr.bf16.mxu0 %v1437
      %1583 = vmatpush1.bf16.msra.mxu0 %v1436
      %1584 = vmatprep.subr.bf16.mxu0 %v1446
      %1585 = vmatpush1.bf16.msra.mxu0 %v1445
      %1586 = vmatprep.subr.bf16.mxu0 %v1455
      %1587 = vmatpush1.bf16.msra.mxu0 %v1454
      %1588 = vmatprep.subr.bf16.mxu0 %v1464
      %1589 = vmatpush1.bf16.msra.mxu0 %v1463
      %1590 = vmatprep.subr.bf16.mxu0 %v1473
      %1591 = vmatpush1.bf16.msra.mxu0 %v1472
      %1592 = vmatprep.subr.bf16.mxu0 0
      %1593 = vmatpush1.bf16.msra.mxu0 0
      %1594 = vmatprep.subr.bf16.mxu0 0
      %1595 = vmatpush1.bf16.msra.mxu0 0
      %1596 = vmatprep.subr.bf16.mxu0 0
      %1597 = vmatpush1.bf16.msra.mxu0 0
      %1598 = vmatprep.subr.bf16.mxu0 0
      %1599 = vmatpush1.bf16.msra.mxu0 0
      %1600 = vmatprep.subr.bf16.mxu0 0
      %1601 = vmatpush1.bf16.msra.mxu0 0
      %1602 = vmatprep.subr.bf16.mxu0 0
      %1603 = vmatpush1.bf16.msra.mxu0 0
      %1604 = vmatprep.subr.bf16.mxu0 0
      %1605 = vmatpush1.bf16.msra.mxu0 0
      %1606 = vmatprep.subr.bf16.mxu0 0
      %1607 = vmatpush1.bf16.msra.mxu0 0
      %1608 = vmatprep.subr.bf16.mxu0 0
      %1609 = vmatpush1.bf16.msra.mxu0 0
      %1610 = vmatprep.subr.bf16.mxu0 0
      %1611 = vmatpush1.bf16.msra.mxu0 0
      %1612 = vmatprep.mubr.bf16.mxu0 0
      %1613 = vmatmul.mubr.bf16.gmra.mrb[0].mxu0 %v1535
      %v1614 = vpop.f32.mrb[0].mxu0
      %v1615 = vadd.f32 %v1223, %v1614
      %v1616 = vpop.f32.mrb[0].mxu0
      %v1617 = vadd.f32 %v1227, %v1616
      %v1618 = vpop.f32.mrb[0].mxu0
      %v1619 = vadd.f32 %v1223, %v1618
      %v1620 = vpop.f32.mrb[0].mxu0
      %v1621 = vadd.f32 %v1227, %v1620
      %1622 = vdwg.mxu0
      %1623 = vmatprep.subr.bf16.mxu0 %v1430
      %1624 = vmatpush1.bf16.msra.mxu0 %v1429
      %1625 = vmatprep.subr.bf16.mxu0 %v1439
      %1626 = vmatpush1.bf16.msra.mxu0 %v1438
      %1627 = vmatprep.subr.bf16.mxu0 %v1448
      %1628 = vmatpush1.bf16.msra.mxu0 %v1447
      %1629 = vmatprep.subr.bf16.mxu0 %v1457
      %1630 = vmatpush1.bf16.msra.mxu0 %v1456
      %1631 = vmatprep.subr.bf16.mxu0 %v1466
      %1632 = vmatpush1.bf16.msra.mxu0 %v1465
      %1633 = vmatprep.subr.bf16.mxu0 %v1475
      %1634 = vmatpush1.bf16.msra.mxu0 %v1474
      %1635 = vmatprep.subr.bf16.mxu0 0
      %1636 = vmatpush1.bf16.msra.mxu0 0
      %1637 = vmatprep.subr.bf16.mxu0 0
      %1638 = vmatpush1.bf16.msra.mxu0 0
      %1639 = vmatprep.subr.bf16.mxu0 0
      %1640 = vmatpush1.bf16.msra.mxu0 0
      %1641 = vmatprep.subr.bf16.mxu0 0
      %1642 = vmatpush1.bf16.msra.mxu0 0
      %1643 = vmatprep.subr.bf16.mxu0 0
      %1644 = vmatpush1.bf16.msra.mxu0 0
      %1645 = vmatprep.subr.bf16.mxu0 0
      %1646 = vmatpush1.bf16.msra.mxu0 0
      %1647 = vmatprep.subr.bf16.mxu0 0
      %1648 = vmatpush1.bf16.msra.mxu0 0
      %1649 = vmatprep.subr.bf16.mxu0 0
      %1650 = vmatpush1.bf16.msra.mxu0 0
      %1651 = vmatprep.subr.bf16.mxu0 0
      %1652 = vmatpush1.bf16.msra.mxu0 0
      %1653 = vmatprep.subr.bf16.mxu0 0
      %1654 = vmatpush1.bf16.msra.mxu0 0
      %1655 = vmatprep.mubr.bf16.mxu0 0
      %1656 = vmatmul.mubr.bf16.gmra.mrb[0].mxu0 %v1535
      %v1657 = vpop.f32.mrb[0].mxu0
      %v1658 = vadd.f32 %v1231, %v1657
      %v1659 = vpop.f32.mrb[0].mxu0
      %v1660 = vadd.f32 %v1235, %v1659
      %v1661 = vpop.f32.mrb[0].mxu0
      %v1662 = vadd.f32 %v1231, %v1661
      %v1663 = vpop.f32.mrb[0].mxu0
      %v1664 = vadd.f32 %v1235, %v1663
      %1665 = vdwg.mxu0
      %1666 = vmatprep.subr.bf16.mxu0 %v1432
      %1667 = vmatpush1.bf16.msra.mxu0 %v1431
      %1668 = vmatprep.subr.bf16.mxu0 %v1441
      %1669 = vmatpush1.bf16.msra.mxu0 %v1440
      %1670 = vmatprep.subr.bf16.mxu0 %v1450
      %1671 = vmatpush1.bf16.msra.mxu0 %v1449
      %1672 = vmatprep.subr.bf16.mxu0 %v1459
      %1673 = vmatpush1.bf16.msra.mxu0 %v1458
      %1674 = vmatprep.subr.bf16.mxu0 %v1468
      %1675 = vmatpush1.bf16.msra.mxu0 %v1467
      %1676 = vmatprep.subr.bf16.mxu0 %v1477
      %1677 = vmatpush1.bf16.msra.mxu0 %v1476
      %1678 = vmatprep.subr.bf16.mxu0 0
      %1679 = vmatpush1.bf16.msra.mxu0 0
      %1680 = vmatprep.subr.bf16.mxu0 0
      %1681 = vmatpush1.bf16.msra.mxu0 0
      %1682 = vmatprep.subr.bf16.mxu0 0
      %1683 = vmatpush1.bf16.msra.mxu0 0
      %1684 = vmatprep.subr.bf16.mxu0 0
      %1685 = vmatpush1.bf16.msra.mxu0 0
      %1686 = vmatprep.subr.bf16.mxu0 0
      %1687 = vmatpush1.bf16.msra.mxu0 0
      %1688 = vmatprep.subr.bf16.mxu0 0
      %1689 = vmatpush1.bf16.msra.mxu0 0
      %1690 = vmatprep.subr.bf16.mxu0 0
      %1691 = vmatpush1.bf16.msra.mxu0 0
      %1692 = vmatprep.subr.bf16.mxu0 0
      %1693 = vmatpush1.bf16.msra.mxu0 0
      %1694 = vmatprep.subr.bf16.mxu0 0
      %1695 = vmatpush1.bf16.msra.mxu0 0
      %1696 = vmatprep.subr.bf16.mxu0 0
      %1697 = vmatpush1.bf16.msra.mxu0 0
      %1698 = vmatprep.mubr.bf16.mxu0 0
      %1699 = vmatmul.mubr.bf16.gmra.mrb[0].mxu0 %v1535
      %v1700 = vpop.f32.mrb[0].mxu0
      %v1701 = vadd.f32 %v1239, %v1700
      %v1702 = vpop.f32.mrb[0].mxu0
      %v1703 = vadd.f32 %v1243, %v1702
      %v1704 = vpop.f32.mrb[0].mxu0
      %v1705 = vadd.f32 %v1239, %v1704
      %v1706 = vpop.f32.mrb[0].mxu0
      %v1707 = vadd.f32 %v1243, %v1706
      %1708 = vdwg.mxu0
      %1709 = vmatprep.subr.bf16.mxu0 0
      %1710 = vmatpush1.bf16.msra.mxu0 %v1433
      %1711 = vmatprep.subr.bf16.mxu0 0
      %1712 = vmatpush1.bf16.msra.mxu0 %v1442
      %1713 = vmatprep.subr.bf16.mxu0 0
      %1714 = vmatpush1.bf16.msra.mxu0 %v1451
      %1715 = vmatprep.subr.bf16.mxu0 0
      %1716 = vmatpush1.bf16.msra.mxu0 %v1460
      %1717 = vmatprep.subr.bf16.mxu0 0
      %1718 = vmatpush1.bf16.msra.mxu0 %v1469
      %1719 = vmatprep.subr.bf16.mxu0 0
      %1720 = vmatpush1.bf16.msra.mxu0 %v1478
      %1721 = vmatprep.subr.bf16.mxu0 0
      %1722 = vmatpush1.bf16.msra.mxu0 0
      %1723 = vmatprep.subr.bf16.mxu0 0
      %1724 = vmatpush1.bf16.msra.mxu0 0
      %1725 = vmatprep.subr.bf16.mxu0 0
      %1726 = vmatpush1.bf16.msra.mxu0 0
      %1727 = vmatprep.subr.bf16.mxu0 0
      %1728 = vmatpush1.bf16.msra.mxu0 0
      %1729 = vmatprep.subr.bf16.mxu0 0
      %1730 = vmatpush1.bf16.msra.mxu0 0
      %1731 = vmatprep.subr.bf16.mxu0 0
      %1732 = vmatpush1.bf16.msra.mxu0 0
      %1733 = vmatprep.subr.bf16.mxu0 0
      %1734 = vmatpush1.bf16.msra.mxu0 0
      %1735 = vmatprep.subr.bf16.mxu0 0
      %1736 = vmatpush1.bf16.msra.mxu0 0
      %1737 = vmatprep.subr.bf16.mxu0 0
      %1738 = vmatpush1.bf16.msra.mxu0 0
      %1739 = vmatprep.subr.bf16.mxu0 0
      %1740 = vmatpush1.bf16.msra.mxu0 0
      %1741 = vmatprep.mubr.bf16.mxu0 0
      %1742 = vmatmul.mubr.bf16.gmra.mrb[0].mxu0 %v1535
      %v1743 = vpop.f32.mrb[0].mxu0
      %v1744 = vadd.f32 %v1247, %v1743
      %v1745 = vpop.f32.mrb[0].mxu0
      %v1746 = vpop.f32.mrb[0].mxu0
      %v1747 = vadd.f32 %v1247, %v1746
      %v1748 = vpop.f32.mrb[0].mxu0
      %1749 = vdwg.mxu0
      %1750 = vst [vmem:[#allocation7] sm:$0xff] %v1572
      %1751 = vst [vmem:[#allocation7 + $0x8] sm:$0xff] %v1574
      %1752 = vst [vmem:[#allocation7 + $0x10] sm:$0xff] %v1615
      %1753 = vst [vmem:[#allocation7 + $0x18] sm:$0xff] %v1617
      %1754 = vst [vmem:[#allocation7 + $0x20] sm:$0xff] %v1658
      %1755 = vst [vmem:[#allocation7 + $0x28] sm:$0xff] %v1660
      %1756 = vst [vmem:[#allocation7 + $0x30] sm:$0xff] %v1701
      %1757 = vst [vmem:[#allocation7 + $0x38] sm:$0xff] %v1703
      %1758 = vst [vmem:[#allocation7 + $0x40] sm:$0xff] %v1744
      %1759 = vst [vmem:[#allocation7 + $0x48] sm:$0xff] %v1576
      %1760 = vst [vmem:[#allocation7 + $0x50] sm:$0xff] %v1578
      %1761 = vst [vmem:[#allocation7 + $0x58] sm:$0xff] %v1619
      %1762 = vst [vmem:[#allocation7 + $0x60] sm:$0xff] %v1621
      %1763 = vst [vmem:[#allocation7 + $0x68] sm:$0xff] %v1662
      %1764 = vst [vmem:[#allocation7 + $0x70] sm:$0xff] %v1664
      %1765 = vst [vmem:[#allocation7 + $0x78] sm:$0xff] %v1705
      %1766 = vst [vmem:[#allocation7 + $0x80] sm:$0xff] %v1707
      %1767 = vst [vmem:[#allocation7 + $0x88] sm:$0xff] %v1747
      %v1768 = vld [vmem:[#allocation2] sm:$0xff]
      %v1769 = vld [vmem:[#allocation2 + $0x8] sm:$0xff]
      %v1770 = vpack.c.bf16 %v1769, %v1768
      %v1771 = vld [vmem:[%s8] sm:$0xf]
      %v1772 = vld [vmem:[%s8 + $0x4] sm:$0xf]
      %v1773 = vld [vmem:[%s8 + $0x8] sm:$0xf]
      %v1774 = vld [vmem:[%s8 + $0xc] sm:$0xf]
      %v1775 = vld [vmem:[#allocation2 + $0x1] sm:$0xff]
      %v1776 = vld [vmem:[#allocation2 + $0x9] sm:$0xff]
      %v1777 = vpack.c.bf16 %v1776, %v1775
      %s1778 = scalar_lea.vmem %s8, 16
      %v1779 = vld [vmem:[%s1778] sm:$0xf]
      %v1780 = vld [vmem:[%s1778 + $0x4] sm:$0xf]
      %v1781 = vld [vmem:[%s1778 + $0x8] sm:$0xf]
      %v1782 = vld [vmem:[%s1778 + $0xc] sm:$0xf]
      %v1787 = vunpack.c.l.b16 %v1779
      %v1788 = vunpack.c.l.b16 %v1780
      %v1789 = vunpack.c.l.b16 %v1781
      %v1790 = vunpack.c.l.b16 %v1782
      %v1791 = vpack.c.b16 %v1788, %v1787
      %v1792 = vpack.c.b16 %v1790, %v1789
      %v1796 = vsel %vm691, %v1777, 0
      %1798 = vmatprep.subr.bf16.mxu0 0
      %1799 = vmatpush1.bf16.msra.mxu0 %v1791
      %1800 = vmatprep.subr.bf16.mxu0 0
      %1801 = vmatpush1.bf16.msra.mxu0 %v1792
      %1802 = vmatprep.subr.bf16.mxu0 0
      %1803 = vmatpush1.bf16.msra.mxu0 0
      %1804 = vmatprep.subr.bf16.mxu0 0
      %1805 = vmatpush1.bf16.msra.mxu0 0
      %1806 = vmatprep.subr.bf16.mxu0 0
      %1807 = vmatpush1.bf16.msra.mxu0 0
      %1808 = vmatprep.subr.bf16.mxu0 0
      %1809 = vmatpush1.bf16.msra.mxu0 0
      %1810 = vmatprep.subr.bf16.mxu0 0
      %1811 = vmatpush1.bf16.msra.mxu0 0
      %1812 = vmatprep.subr.bf16.mxu0 0
      %1813 = vmatpush1.bf16.msra.mxu0 0
      %1814 = vmatprep.subr.bf16.mxu0 0
      %1815 = vmatpush1.bf16.msra.mxu0 0
      %1816 = vmatprep.subr.bf16.mxu0 0
      %1817 = vmatpush1.bf16.msra.mxu0 0
      %1818 = vmatprep.subr.bf16.mxu0 0
      %1819 = vmatpush1.bf16.msra.mxu0 0
      %1820 = vmatprep.subr.bf16.mxu0 0
      %1821 = vmatpush1.bf16.msra.mxu0 0
      %1822 = vmatprep.subr.bf16.mxu0 0
      %1823 = vmatpush1.bf16.msra.mxu0 0
      %1824 = vmatprep.subr.bf16.mxu0 0
      %1825 = vmatpush1.bf16.msra.mxu0 0
      %1826 = vmatprep.subr.bf16.mxu0 0
      %1827 = vmatpush1.bf16.msra.mxu0 0
      %1828 = vmatprep.subr.bf16.mxu0 0
      %1829 = vmatpush1.bf16.msra.mxu0 0
      %1830 = vmatprep.mubr.bf16.mxu0 0
      %1831 = vmatmul.mubr.bf16.gmra.mrb[0].mxu0 %v1796
      %v1832 = vpop.f32.mrb[0].mxu0
      %v1833 = vadd.f32 0.0, %v1832
      %v1834 = vpop.f32.mrb[0].mxu0
      %v1835 = vpop.f32.mrb[0].mxu0
      %v1836 = vadd.f32 0.0, %v1835
      %v1837 = vpop.f32.mrb[0].mxu0
      %1838 = vdwg.mxu0
      %v1843 = vunpack.c.l.b16 %v1771
      %v1844 = vunpack.c.l.b16 %v1772
      %v1845 = vunpack.c.l.b16 %v1773
      %v1846 = vunpack.c.l.b16 %v1774
      %v1847 = vpack.c.b16 %v1844, %v1843
      %v1848 = vpack.c.b16 %v1846, %v1845
      %v1852 = vsel %vm691, %v1770, 0
      %1854 = vmatprep.subr.bf16.mxu0 0
      %1855 = vmatpush1.bf16.msra.mxu0 %v1847
      %1856 = vmatprep.subr.bf16.mxu0 0
      %1857 = vmatpush1.bf16.msra.mxu0 %v1848
      %1858 = vmatprep.subr.bf16.mxu0 0
      %1859 = vmatpush1.bf16.msra.mxu0 0
      %1860 = vmatprep.subr.bf16.mxu0 0
      %1861 = vmatpush1.bf16.msra.mxu0 0
      %1862 = vmatprep.subr.bf16.mxu0 0
      %1863 = vmatpush1.bf16.msra.mxu0 0
      %1864 = vmatprep.subr.bf16.mxu0 0
      %1865 = vmatpush1.bf16.msra.mxu0 0
      %1866 = vmatprep.subr.bf16.mxu0 0
      %1867 = vmatpush1.bf16.msra.mxu0 0
      %1868 = vmatprep.subr.bf16.mxu0 0
      %1869 = vmatpush1.bf16.msra.mxu0 0
      %1870 = vmatprep.subr.bf16.mxu0 0
      %1871 = vmatpush1.bf16.msra.mxu0 0
      %1872 = vmatprep.subr.bf16.mxu0 0
      %1873 = vmatpush1.bf16.msra.mxu0 0
      %1874 = vmatprep.subr.bf16.mxu0 0
      %1875 = vmatpush1.bf16.msra.mxu0 0
      %1876 = vmatprep.subr.bf16.mxu0 0
      %1877 = vmatpush1.bf16.msra.mxu0 0
      %1878 = vmatprep.subr.bf16.mxu0 0
      %1879 = vmatpush1.bf16.msra.mxu0 0
      %1880 = vmatprep.subr.bf16.mxu0 0
      %1881 = vmatpush1.bf16.msra.mxu0 0
      %1882 = vmatprep.subr.bf16.mxu0 0
      %1883 = vmatpush1.bf16.msra.mxu0 0
      %1884 = vmatprep.subr.bf16.mxu0 0
      %1885 = vmatpush1.bf16.msra.mxu0 0
      %1886 = vmatprep.mubr.bf16.mxu0 0
      %1887 = vmatmul.mubr.bf16.gmra.mrb[0].mxu0 %v1852
      %v1888 = vpop.f32.mrb[0].mxu0
      %v1889 = vadd.f32 %v1833, %v1888
      %v1890 = vpop.f32.mrb[0].mxu0
      %v1891 = vpop.f32.mrb[0].mxu0
      %v1892 = vadd.f32 %v1836, %v1891
      %v1893 = vpop.f32.mrb[0].mxu0
      %1894 = vdwg.mxu0
      %v1895 = vld [vmem:[#allocation2 + $0x2] sm:$0xff]
      %v1896 = vld [vmem:[#allocation2 + $0xa] sm:$0xff]
      %v1897 = vpack.c.bf16 %v1896, %v1895
      %s1898 = scalar_lea.vmem %s8, 32
      %v1899 = vld [vmem:[%s1898] sm:$0xf]
      %v1900 = vld [vmem:[%s1898 + $0x4] sm:$0xf]
      %v1901 = vld [vmem:[%s1898 + $0x8] sm:$0xf]
      %v1902 = vld [vmem:[%s1898 + $0xc] sm:$0xf]
      %v1907 = vunpack.c.l.b16 %v1899
      %v1908 = vunpack.c.l.b16 %v1900
      %v1909 = vunpack.c.l.b16 %v1901
      %v1910 = vunpack.c.l.b16 %v1902
      %v1911 = vpack.c.b16 %v1908, %v1907
      %v1912 = vpack.c.b16 %v1910, %v1909
      %v1916 = vsel %vm691, %v1897, 0
      %1918 = vmatprep.subr.bf16.mxu0 0
      %1919 = vmatpush1.bf16.msra.mxu0 %v1911
      %1920 = vmatprep.subr.bf16.mxu0 0
      %1921 = vmatpush1.bf16.msra.mxu0 %v1912
      %1922 = vmatprep.subr.bf16.mxu0 0
      %1923 = vmatpush1.bf16.msra.mxu0 0
      %1924 = vmatprep.subr.bf16.mxu0 0
      %1925 = vmatpush1.bf16.msra.mxu0 0
      %1926 = vmatprep.subr.bf16.mxu0 0
      %1927 = vmatpush1.bf16.msra.mxu0 0
      %1928 = vmatprep.subr.bf16.mxu0 0
      %1929 = vmatpush1.bf16.msra.mxu0 0
      %1930 = vmatprep.subr.bf16.mxu0 0
      %1931 = vmatpush1.bf16.msra.mxu0 0
      %1932 = vmatprep.subr.bf16.mxu0 0
      %1933 = vmatpush1.bf16.msra.mxu0 0
      %1934 = vmatprep.subr.bf16.mxu0 0
      %1935 = vmatpush1.bf16.msra.mxu0 0
      %1936 = vmatprep.subr.bf16.mxu0 0
      %1937 = vmatpush1.bf16.msra.mxu0 0
      %1938 = vmatprep.subr.bf16.mxu0 0
      %1939 = vmatpush1.bf16.msra.mxu0 0
      %1940 = vmatprep.subr.bf16.mxu0 0
      %1941 = vmatpush1.bf16.msra.mxu0 0
      %1942 = vmatprep.subr.bf16.mxu0 0
      %1943 = vmatpush1.bf16.msra.mxu0 0
      %1944 = vmatprep.subr.bf16.mxu0 0
      %1945 = vmatpush1.bf16.msra.mxu0 0
      %1946 = vmatprep.subr.bf16.mxu0 0
      %1947 = vmatpush1.bf16.msra.mxu0 0
      %1948 = vmatprep.subr.bf16.mxu0 0
      %1949 = vmatpush1.bf16.msra.mxu0 0
      %1950 = vmatprep.mubr.bf16.mxu0 0
      %1951 = vmatmul.mubr.bf16.gmra.mrb[0].mxu0 %v1916
      %v1952 = vpop.f32.mrb[0].mxu0
      %v1953 = vadd.f32 0.0, %v1952
      %v1954 = vpop.f32.mrb[0].mxu0
      %v1955 = vpop.f32.mrb[0].mxu0
      %v1956 = vadd.f32 0.0, %v1955
      %v1957 = vpop.f32.mrb[0].mxu0
      %1958 = vdwg.mxu0
      %v1959 = vadd.f32 %v1889, %v1953
      %v1960 = vadd.f32 %v1892, %v1956
      %v1961 = vld [vmem:[#allocation2 + $0x3] sm:$0xff]
      %v1962 = vld [vmem:[#allocation2 + $0xb] sm:$0xff]
      %v1963 = vpack.c.bf16 %v1962, %v1961
      %s1964 = scalar_lea.vmem %s8, 48
      %v1965 = vld [vmem:[%s1964] sm:$0xf]
      %v1966 = vld [vmem:[%s1964 + $0x4] sm:$0xf]
      %v1967 = vld [vmem:[%s1964 + $0x8] sm:$0xf]
      %v1968 = vld [vmem:[%s1964 + $0xc] sm:$0xf]
      %v1973 = vunpack.c.l.b16 %v1965
      %v1974 = vunpack.c.l.b16 %v1966
      %v1975 = vunpack.c.l.b16 %v1967
      %v1976 = vunpack.c.l.b16 %v1968
      %v1977 = vpack.c.b16 %v1974, %v1973
      %v1978 = vpack.c.b16 %v1976, %v1975
      %v1982 = vsel %vm691, %v1963, 0
      %1984 = vmatprep.subr.bf16.mxu0 0
      %1985 = vmatpush1.bf16.msra.mxu0 %v1977
      %1986 = vmatprep.subr.bf16.mxu0 0
      %1987 = vmatpush1.bf16.msra.mxu0 %v1978
      %1988 = vmatprep.subr.bf16.mxu0 0
      %1989 = vmatpush1.bf16.msra.mxu0 0
      %1990 = vmatprep.subr.bf16.mxu0 0
      %1991 = vmatpush1.bf16.msra.mxu0 0
      %1992 = vmatprep.subr.bf16.mxu0 0
      %1993 = vmatpush1.bf16.msra.mxu0 0
      %1994 = vmatprep.subr.bf16.mxu0 0
      %1995 = vmatpush1.bf16.msra.mxu0 0
      %1996 = vmatprep.subr.bf16.mxu0 0
      %1997 = vmatpush1.bf16.msra.mxu0 0
      %1998 = vmatprep.subr.bf16.mxu0 0
      %1999 = vmatpush1.bf16.msra.mxu0 0
      %2000 = vmatprep.subr.bf16.mxu0 0
      %2001 = vmatpush1.bf16.msra.mxu0 0
      %2002 = vmatprep.subr.bf16.mxu0 0
      %2003 = vmatpush1.bf16.msra.mxu0 0
      %2004 = vmatprep.subr.bf16.mxu0 0
      %2005 = vmatpush1.bf16.msra.mxu0 0
      %2006 = vmatprep.subr.bf16.mxu0 0
      %2007 = vmatpush1.bf16.msra.mxu0 0
      %2008 = vmatprep.subr.bf16.mxu0 0
      %2009 = vmatpush1.bf16.msra.mxu0 0
      %2010 = vmatprep.subr.bf16.mxu0 0
      %2011 = vmatpush1.bf16.msra.mxu0 0
      %2012 = vmatprep.subr.bf16.mxu0 0
      %2013 = vmatpush1.bf16.msra.mxu0 0
      %2014 = vmatprep.subr.bf16.mxu0 0
      %2015 = vmatpush1.bf16.msra.mxu0 0
      %2016 = vmatprep.mubr.bf16.mxu0 0
      %2017 = vmatmul.mubr.bf16.gmra.mrb[0].mxu0 %v1982
      %v2018 = vpop.f32.mrb[0].mxu0
      %v2019 = vadd.f32 0.0, %v2018
      %v2020 = vpop.f32.mrb[0].mxu0
      %v2021 = vpop.f32.mrb[0].mxu0
      %v2022 = vadd.f32 0.0, %v2021
      %v2023 = vpop.f32.mrb[0].mxu0
      %2024 = vdwg.mxu0
      %v2025 = vadd.f32 %v1959, %v2019
      %v2026 = vadd.f32 %v1960, %v2022
      %v2027 = vld [vmem:[#allocation2 + $0x4] sm:$0xff]
      %v2028 = vld [vmem:[#allocation2 + $0xc] sm:$0xff]
      %v2029 = vpack.c.bf16 %v2028, %v2027
      %s2030 = scalar_lea.vmem %s8, 64
      %v2031 = vld [vmem:[%s2030] sm:$0xf]
      %v2032 = vld [vmem:[%s2030 + $0x4] sm:$0xf]
      %v2033 = vld [vmem:[%s2030 + $0x8] sm:$0xf]
      %v2034 = vld [vmem:[%s2030 + $0xc] sm:$0xf]
      %v2039 = vunpack.c.l.b16 %v2031
      %v2040 = vunpack.c.l.b16 %v2032
      %v2041 = vunpack.c.l.b16 %v2033
      %v2042 = vunpack.c.l.b16 %v2034
      %v2043 = vpack.c.b16 %v2040, %v2039
      %v2044 = vpack.c.b16 %v2042, %v2041
      %v2048 = vsel %vm691, %v2029, 0
      %2050 = vmatprep.subr.bf16.mxu0 0
      %2051 = vmatpush1.bf16.msra.mxu0 %v2043
      %2052 = vmatprep.subr.bf16.mxu0 0
      %2053 = vmatpush1.bf16.msra.mxu0 %v2044
      %2054 = vmatprep.subr.bf16.mxu0 0
      %2055 = vmatpush1.bf16.msra.mxu0 0
      %2056 = vmatprep.subr.bf16.mxu0 0
      %2057 = vmatpush1.bf16.msra.mxu0 0
      %2058 = vmatprep.subr.bf16.mxu0 0
      %2059 = vmatpush1.bf16.msra.mxu0 0
      %2060 = vmatprep.subr.bf16.mxu0 0
      %2061 = vmatpush1.bf16.msra.mxu0 0
      %2062 = vmatprep.subr.bf16.mxu0 0
      %2063 = vmatpush1.bf16.msra.mxu0 0
      %2064 = vmatprep.subr.bf16.mxu0 0
      %2065 = vmatpush1.bf16.msra.mxu0 0
      %2066 = vmatprep.subr.bf16.mxu0 0
      %2067 = vmatpush1.bf16.msra.mxu0 0
      %2068 = vmatprep.subr.bf16.mxu0 0
      %2069 = vmatpush1.bf16.msra.mxu0 0
      %2070 = vmatprep.subr.bf16.mxu0 0
      %2071 = vmatpush1.bf16.msra.mxu0 0
      %2072 = vmatprep.subr.bf16.mxu0 0
      %2073 = vmatpush1.bf16.msra.mxu0 0
      %2074 = vmatprep.subr.bf16.mxu0 0
      %2075 = vmatpush1.bf16.msra.mxu0 0
      %2076 = vmatprep.subr.bf16.mxu0 0
      %2077 = vmatpush1.bf16.msra.mxu0 0
      %2078 = vmatprep.subr.bf16.mxu0 0
      %2079 = vmatpush1.bf16.msra.mxu0 0
      %2080 = vmatprep.subr.bf16.mxu0 0
      %2081 = vmatpush1.bf16.msra.mxu0 0
      %2082 = vmatprep.mubr.bf16.mxu0 0
      %2083 = vmatmul.mubr.bf16.gmra.mrb[0].mxu0 %v2048
      %v2084 = vpop.f32.mrb[0].mxu0
      %v2085 = vadd.f32 0.0, %v2084
      %v2086 = vpop.f32.mrb[0].mxu0
      %v2087 = vpop.f32.mrb[0].mxu0
      %v2088 = vadd.f32 0.0, %v2087
      %v2089 = vpop.f32.mrb[0].mxu0
      %2090 = vdwg.mxu0
      %v2091 = vadd.f32 %v2025, %v2085
      %v2092 = vadd.f32 %v2026, %v2088
      %v2093 = vld [vmem:[%s9] sm:$0x1]
      %v2095 = vlaneseq
      %v2096 = vshrl.u32 %v2095, 7
      %v2097 = vsub.s32 0, %v2096
      %v2098 = vrot.slane %v2093, %v2097
      %v2100 = vadd.f32 %v2091, %v2098
      %v2101 = vadd.f32 %v2092, %v2098
      %vm2102 = vcmp.ge.f32.partialorder %v2100, 0.0
      %vm2103 = vcmp.ge.f32.partialorder %v2101, 0.0
      %v2104 = vmul.f32 %v2100, 0.01
      %v2105 = vmul.f32 %v2101, 0.01
      %v2106 = vsel %vm2102, %v2100, %v2104
      %v2107 = vsel %vm2103, %v2101, %v2105
      %2108 = vst.msk [vmem:[#allocation4 + $0x1] sm:$0xff] %vm696, %v717
      %2109 = vst.msk [vmem:[#allocation4 + $0x9] sm:$0xff] %vm696, %v718
      %v2110 = vld [vmem:[#allocation4] sm:$0xff]
      %v2111 = vld [vmem:[#allocation4 + $0x8] sm:$0xff]
      %v2112 = vpack.c.bf16 %v2111, %v2110
      %v2113 = vld [vmem:[%s10] sm:$0xff]
      %v2114 = vld [vmem:[%s10 + $0x8] sm:$0xf]
      %v2115 = vld [vmem:[%s10 + $0xc] sm:$0xff]
      %v2116 = vld [vmem:[%s10 + $0x14] sm:$0xf]
      %v2117 = vld [vmem:[%s10 + $0x18] sm:$0xff]
      %v2118 = vld [vmem:[%s10 + $0x20] sm:$0xf]
      %v2119 = vld [vmem:[%s10 + $0x24] sm:$0xff]
      %v2120 = vld [vmem:[%s10 + $0x2c] sm:$0xf]
      %v2121 = vld [vmem:[%s10 + $0x30] sm:$0xff]
      %v2122 = vld [vmem:[%s10 + $0x38] sm:$0xf]
      %v2123 = vld [vmem:[%s10 + $0x3c] sm:$0xff]
      %v2124 = vld [vmem:[%s10 + $0x44] sm:$0xf]
      %v2125 = vld [vmem:[%s10 + $0x48] sm:$0xff]
      %v2126 = vld [vmem:[%s10 + $0x50] sm:$0xf]
      %v2127 = vld [vmem:[%s10 + $0x54] sm:$0xff]
      %v2128 = vld [vmem:[%s10 + $0x5c] sm:$0xf]
      %v2129 = vld [vmem:[#allocation4 + $0x1] sm:$0xff]
      %v2130 = vld [vmem:[#allocation4 + $0x9] sm:$0xff]
      %v2131 = vpack.c.bf16 %v2130, %v2129
      %s2132 = scalar_lea.vmem %s10, 96
      %v2133 = vld [vmem:[%s2132] sm:$0xff]
      %v2134 = vld [vmem:[%s2132 + $0x8] sm:$0xf]
      %v2135 = vld [vmem:[%s2132 + $0xc] sm:$0xff]
      %v2136 = vld [vmem:[%s2132 + $0x14] sm:$0xf]
      %v2137 = vld [vmem:[%s2132 + $0x18] sm:$0xff]
      %v2138 = vld [vmem:[%s2132 + $0x20] sm:$0xf]
      %v2139 = vld [vmem:[%s2132 + $0x24] sm:$0xff]
      %v2140 = vld [vmem:[%s2132 + $0x2c] sm:$0xf]
      %v2141 = vld [vmem:[%s2132 + $0x30] sm:$0xff]
      %v2142 = vld [vmem:[%s2132 + $0x38] sm:$0xf]
      %v2143 = vld [vmem:[%s2132 + $0x3c] sm:$0xff]
      %v2144 = vld [vmem:[%s2132 + $0x44] sm:$0xf]
      %v2145 = vld [vmem:[%s2132 + $0x48] sm:$0xff]
      %v2146 = vld [vmem:[%s2132 + $0x50] sm:$0xf]
      %v2147 = vld [vmem:[%s2132 + $0x54] sm:$0xff]
      %v2148 = vld [vmem:[%s2132 + $0x5c] sm:$0xf]
      %v2165 = vunpack.c.l.b16 %v2133
      %v2166 = vunpack.c.h.b16 %v2133
      %v2167 = vunpack.c.l.b16 %v2134
      %v2168 = vunpack.c.l.b16 %v2135
      %v2169 = vunpack.c.h.b16 %v2135
      %v2170 = vunpack.c.l.b16 %v2136
      %v2171 = vunpack.c.l.b16 %v2137
      %v2172 = vunpack.c.h.b16 %v2137
      %v2173 = vunpack.c.l.b16 %v2138
      %v2174 = vunpack.c.l.b16 %v2139
      %v2175 = vunpack.c.h.b16 %v2139
      %v2176 = vunpack.c.l.b16 %v2140
      %v2177 = vunpack.c.l.b16 %v2141
      %v2178 = vunpack.c.h.b16 %v2141
      %v2179 = vunpack.c.l.b16 %v2142
      %v2180 = vunpack.c.l.b16 %v2143
      %v2181 = vunpack.c.h.b16 %v2143
      %v2182 = vunpack.c.l.b16 %v2144
      %v2183 = vunpack.c.l.b16 %v2145
      %v2184 = vunpack.c.h.b16 %v2145
      %v2185 = vunpack.c.l.b16 %v2146
      %v2186 = vunpack.c.l.b16 %v2147
      %v2187 = vunpack.c.h.b16 %v2147
      %v2188 = vunpack.c.l.b16 %v2148
      %v2189 = vpack.c.b16 %v2168, %v2165
      %v2190 = vpack.c.b16 %v2169, %v2166
      %v2191 = vpack.c.b16 %v2170, %v2167
      %v2192 = vpack.c.b16 %v2174, %v2171
      %v2193 = vpack.c.b16 %v2175, %v2172
      %v2194 = vpack.c.b16 %v2176, %v2173
      %v2195 = vpack.c.b16 %v2180, %v2177
      %v2196 = vpack.c.b16 %v2181, %v2178
      %v2197 = vpack.c.b16 %v2182, %v2179
      %v2198 = vpack.c.b16 %v2186, %v2183
      %v2199 = vpack.c.b16 %v2187, %v2184
      %v2200 = vpack.c.b16 %v2188, %v2185
      %v2214 = vsel %vm696, %v2131, 0
      %2216 = vmatprep.subr.bf16.mxu0 %v2190
      %2217 = vmatpush1.bf16.msra.mxu0 %v2189
      %2218 = vmatprep.subr.bf16.mxu0 %v2193
      %2219 = vmatpush1.bf16.msra.mxu0 %v2192
      %2220 = vmatprep.subr.bf16.mxu0 %v2196
      %2221 = vmatpush1.bf16.msra.mxu0 %v2195
      %2222 = vmatprep.subr.bf16.mxu0 %v2199
      %2223 = vmatpush1.bf16.msra.mxu0 %v2198
      %2224 = vmatprep.subr.bf16.mxu0 0
      %2225 = vmatpush1.bf16.msra.mxu0 0
      %2226 = vmatprep.subr.bf16.mxu0 0
      %2227 = vmatpush1.bf16.msra.mxu0 0
      %2228 = vmatprep.subr.bf16.mxu0 0
      %2229 = vmatpush1.bf16.msra.mxu0 0
      %2230 = vmatprep.subr.bf16.mxu0 0
      %2231 = vmatpush1.bf16.msra.mxu0 0
      %2232 = vmatprep.subr.bf16.mxu0 0
      %2233 = vmatpush1.bf16.msra.mxu0 0
      %2234 = vmatprep.subr.bf16.mxu0 0
      %2235 = vmatpush1.bf16.msra.mxu0 0
      %2236 = vmatprep.subr.bf16.mxu0 0
      %2237 = vmatpush1.bf16.msra.mxu0 0
      %2238 = vmatprep.subr.bf16.mxu0 0
      %2239 = vmatpush1.bf16.msra.mxu0 0
      %2240 = vmatprep.subr.bf16.mxu0 0
      %2241 = vmatpush1.bf16.msra.mxu0 0
      %2242 = vmatprep.subr.bf16.mxu0 0
      %2243 = vmatpush1.bf16.msra.mxu0 0
      %2244 = vmatprep.subr.bf16.mxu0 0
      %2245 = vmatpush1.bf16.msra.mxu0 0
      %2246 = vmatprep.subr.bf16.mxu0 0
      %2247 = vmatpush1.bf16.msra.mxu0 0
      %2248 = vmatprep.mubr.bf16.mxu0 0
      %2249 = vmatmul.mubr.bf16.gmra.mrb[0].mxu0 %v2214
      %v2250 = vpop.f32.mrb[0].mxu0
      %v2251 = vadd.f32 0.0, %v2250
      %v2252 = vpop.f32.mrb[0].mxu0
      %v2253 = vadd.f32 0.0, %v2252
      %v2254 = vpop.f32.mrb[0].mxu0
      %v2255 = vadd.f32 0.0, %v2254
      %v2256 = vpop.f32.mrb[0].mxu0
      %v2257 = vadd.f32 0.0, %v2256
      %2258 = vdwg.mxu0
      %2259 = vmatprep.subr.bf16.mxu0 0
      %2260 = vmatpush1.bf16.msra.mxu0 %v2191
      %2261 = vmatprep.subr.bf16.mxu0 0
      %2262 = vmatpush1.bf16.msra.mxu0 %v2194
      %2263 = vmatprep.subr.bf16.mxu0 0
      %2264 = vmatpush1.bf16.msra.mxu0 %v2197
      %2265 = vmatprep.subr.bf16.mxu0 0
      %2266 = vmatpush1.bf16.msra.mxu0 %v2200
      %2267 = vmatprep.subr.bf16.mxu0 0
      %2268 = vmatpush1.bf16.msra.mxu0 0
      %2269 = vmatprep.subr.bf16.mxu0 0
      %2270 = vmatpush1.bf16.msra.mxu0 0
      %2271 = vmatprep.subr.bf16.mxu0 0
      %2272 = vmatpush1.bf16.msra.mxu0 0
      %2273 = vmatprep.subr.bf16.mxu0 0
      %2274 = vmatpush1.bf16.msra.mxu0 0
      %2275 = vmatprep.subr.bf16.mxu0 0
      %2276 = vmatpush1.bf16.msra.mxu0 0
      %2277 = vmatprep.subr.bf16.mxu0 0
      %2278 = vmatpush1.bf16.msra.mxu0 0
      %2279 = vmatprep.subr.bf16.mxu0 0
      %2280 = vmatpush1.bf16.msra.mxu0 0
      %2281 = vmatprep.subr.bf16.mxu0 0
      %2282 = vmatpush1.bf16.msra.mxu0 0
      %2283 = vmatprep.subr.bf16.mxu0 0
      %2284 = vmatpush1.bf16.msra.mxu0 0
      %2285 = vmatprep.subr.bf16.mxu0 0
      %2286 = vmatpush1.bf16.msra.mxu0 0
      %2287 = vmatprep.subr.bf16.mxu0 0
      %2288 = vmatpush1.bf16.msra.mxu0 0
      %2289 = vmatprep.subr.bf16.mxu0 0
      %2290 = vmatpush1.bf16.msra.mxu0 0
      %2291 = vmatprep.mubr.bf16.mxu0 0
      %2292 = vmatmul.mubr.bf16.gmra.mrb[0].mxu0 %v2214
      %v2293 = vpop.f32.mrb[0].mxu0
      %v2294 = vadd.f32 0.0, %v2293
      %v2295 = vpop.f32.mrb[0].mxu0
      %v2296 = vpop.f32.mrb[0].mxu0
      %v2297 = vadd.f32 0.0, %v2296
      %v2298 = vpop.f32.mrb[0].mxu0
      %2299 = vdwg.mxu0
      %v2316 = vunpack.c.l.b16 %v2113
      %v2317 = vunpack.c.h.b16 %v2113
      %v2318 = vunpack.c.l.b16 %v2114
      %v2319 = vunpack.c.l.b16 %v2115
      %v2320 = vunpack.c.h.b16 %v2115
      %v2321 = vunpack.c.l.b16 %v2116
      %v2322 = vunpack.c.l.b16 %v2117
      %v2323 = vunpack.c.h.b16 %v2117
      %v2324 = vunpack.c.l.b16 %v2118
      %v2325 = vunpack.c.l.b16 %v2119
      %v2326 = vunpack.c.h.b16 %v2119
      %v2327 = vunpack.c.l.b16 %v2120
      %v2328 = vunpack.c.l.b16 %v2121
      %v2329 = vunpack.c.h.b16 %v2121
      %v2330 = vunpack.c.l.b16 %v2122
      %v2331 = vunpack.c.l.b16 %v2123
      %v2332 = vunpack.c.h.b16 %v2123
      %v2333 = vunpack.c.l.b16 %v2124
      %v2334 = vunpack.c.l.b16 %v2125
      %v2335 = vunpack.c.h.b16 %v2125
      %v2336 = vunpack.c.l.b16 %v2126
      %v2337 = vunpack.c.l.b16 %v2127
      %v2338 = vunpack.c.h.b16 %v2127
      %v2339 = vunpack.c.l.b16 %v2128
      %v2340 = vpack.c.b16 %v2319, %v2316
      %v2341 = vpack.c.b16 %v2320, %v2317
      %v2342 = vpack.c.b16 %v2321, %v2318
      %v2343 = vpack.c.b16 %v2325, %v2322
      %v2344 = vpack.c.b16 %v2326, %v2323
      %v2345 = vpack.c.b16 %v2327, %v2324
      %v2346 = vpack.c.b16 %v2331, %v2328
      %v2347 = vpack.c.b16 %v2332, %v2329
      %v2348 = vpack.c.b16 %v2333, %v2330
      %v2349 = vpack.c.b16 %v2337, %v2334
      %v2350 = vpack.c.b16 %v2338, %v2335
      %v2351 = vpack.c.b16 %v2339, %v2336
      %v2365 = vsel %vm696, %v2112, 0
      %2367 = vmatprep.subr.bf16.mxu0 %v2341
      %2368 = vmatpush1.bf16.msra.mxu0 %v2340
      %2369 = vmatprep.subr.bf16.mxu0 %v2344
      %2370 = vmatpush1.bf16.msra.mxu0 %v2343
      %2371 = vmatprep.subr.bf16.mxu0 %v2347
      %2372 = vmatpush1.bf16.msra.mxu0 %v2346
      %2373 = vmatprep.subr.bf16.mxu0 %v2350
      %2374 = vmatpush1.bf16.msra.mxu0 %v2349
      %2375 = vmatprep.subr.bf16.mxu0 0
      %2376 = vmatpush1.bf16.msra.mxu0 0
      %2377 = vmatprep.subr.bf16.mxu0 0
      %2378 = vmatpush1.bf16.msra.mxu0 0
      %2379 = vmatprep.subr.bf16.mxu0 0
      %2380 = vmatpush1.bf16.msra.mxu0 0
      %2381 = vmatprep.subr.bf16.mxu0 0
      %2382 = vmatpush1.bf16.msra.mxu0 0
      %2383 = vmatprep.subr.bf16.mxu0 0
      %2384 = vmatpush1.bf16.msra.mxu0 0
      %2385 = vmatprep.subr.bf16.mxu0 0
      %2386 = vmatpush1.bf16.msra.mxu0 0
      %2387 = vmatprep.subr.bf16.mxu0 0
      %2388 = vmatpush1.bf16.msra.mxu0 0
      %2389 = vmatprep.subr.bf16.mxu0 0
      %2390 = vmatpush1.bf16.msra.mxu0 0
      %2391 = vmatprep.subr.bf16.mxu0 0
      %2392 = vmatpush1.bf16.msra.mxu0 0
      %2393 = vmatprep.subr.bf16.mxu0 0
      %2394 = vmatpush1.bf16.msra.mxu0 0
      %2395 = vmatprep.subr.bf16.mxu0 0
      %2396 = vmatpush1.bf16.msra.mxu0 0
      %2397 = vmatprep.subr.bf16.mxu0 0
      %2398 = vmatpush1.bf16.msra.mxu0 0
      %2399 = vmatprep.mubr.bf16.mxu0 0
      %2400 = vmatmul.mubr.bf16.gmra.mrb[0].mxu0 %v2365
      %v2401 = vpop.f32.mrb[0].mxu0
      %v2402 = vadd.f32 %v2251, %v2401
      %v2403 = vpop.f32.mrb[0].mxu0
      %v2404 = vadd.f32 %v2253, %v2403
      %v2405 = vpop.f32.mrb[0].mxu0
      %v2406 = vadd.f32 %v2255, %v2405
      %v2407 = vpop.f32.mrb[0].mxu0
      %v2408 = vadd.f32 %v2257, %v2407
      %2409 = vdwg.mxu0
      %2410 = vmatprep.subr.bf16.mxu0 0
      %2411 = vmatpush1.bf16.msra.mxu0 %v2342
      %2412 = vmatprep.subr.bf16.mxu0 0
      %2413 = vmatpush1.bf16.msra.mxu0 %v2345
      %2414 = vmatprep.subr.bf16.mxu0 0
      %2415 = vmatpush1.bf16.msra.mxu0 %v2348
      %2416 = vmatprep.subr.bf16.mxu0 0
      %2417 = vmatpush1.bf16.msra.mxu0 %v2351
      %2418 = vmatprep.subr.bf16.mxu0 0
      %2419 = vmatpush1.bf16.msra.mxu0 0
      %2420 = vmatprep.subr.bf16.mxu0 0
      %2421 = vmatpush1.bf16.msra.mxu0 0
      %2422 = vmatprep.subr.bf16.mxu0 0
      %2423 = vmatpush1.bf16.msra.mxu0 0
      %2424 = vmatprep.subr.bf16.mxu0 0
      %2425 = vmatpush1.bf16.msra.mxu0 0
      %2426 = vmatprep.subr.bf16.mxu0 0
      %2427 = vmatpush1.bf16.msra.mxu0 0
      %2428 = vmatprep.subr.bf16.mxu0 0
      %2429 = vmatpush1.bf16.msra.mxu0 0
      %2430 = vmatprep.subr.bf16.mxu0 0
      %2431 = vmatpush1.bf16.msra.mxu0 0
      %2432 = vmatprep.subr.bf16.mxu0 0
      %2433 = vmatpush1.bf16.msra.mxu0 0
      %2434 = vmatprep.subr.bf16.mxu0 0
      %2435 = vmatpush1.bf16.msra.mxu0 0
      %2436 = vmatprep.subr.bf16.mxu0 0
      %2437 = vmatpush1.bf16.msra.mxu0 0
      %2438 = vmatprep.subr.bf16.mxu0 0
      %2439 = vmatpush1.bf16.msra.mxu0 0
      %2440 = vmatprep.subr.bf16.mxu0 0
      %2441 = vmatpush1.bf16.msra.mxu0 0
      %2442 = vmatprep.mubr.bf16.mxu0 0
      %2443 = vmatmul.mubr.bf16.gmra.mrb[0].mxu0 %v2365
      %v2444 = vpop.f32.mrb[0].mxu0
      %v2445 = vadd.f32 %v2294, %v2444
      %v2446 = vpop.f32.mrb[0].mxu0
      %v2447 = vpop.f32.mrb[0].mxu0
      %v2448 = vadd.f32 %v2297, %v2447
      %v2449 = vpop.f32.mrb[0].mxu0
      %2450 = vdwg.mxu0
      %v2451 = vld [vmem:[#allocation4 + $0x2] sm:$0xff]
      %v2452 = vld [vmem:[#allocation4 + $0xa] sm:$0xff]
      %v2453 = vpack.c.bf16 %v2452, %v2451
      %s2454 = scalar_lea.vmem %s10, 192
      %v2455 = vld [vmem:[%s2454] sm:$0xff]
      %v2456 = vld [vmem:[%s2454 + $0x8] sm:$0xf]
      %v2457 = vld [vmem:[%s2454 + $0xc] sm:$0xff]
      %v2458 = vld [vmem:[%s2454 + $0x14] sm:$0xf]
      %v2459 = vld [vmem:[%s2454 + $0x18] sm:$0xff]
      %v2460 = vld [vmem:[%s2454 + $0x20] sm:$0xf]
      %v2461 = vld [vmem:[%s2454 + $0x24] sm:$0xff]
      %v2462 = vld [vmem:[%s2454 + $0x2c] sm:$0xf]
      %v2463 = vld [vmem:[%s2454 + $0x30] sm:$0xff]
      %v2464 = vld [vmem:[%s2454 + $0x38] sm:$0xf]
      %v2465 = vld [vmem:[%s2454 + $0x3c] sm:$0xff]
      %v2466 = vld [vmem:[%s2454 + $0x44] sm:$0xf]
      %v2467 = vld [vmem:[%s2454 + $0x48] sm:$0xff]
      %v2468 = vld [vmem:[%s2454 + $0x50] sm:$0xf]
      %v2469 = vld [vmem:[%s2454 + $0x54] sm:$0xff]
      %v2470 = vld [vmem:[%s2454 + $0x5c] sm:$0xf]
      %v2487 = vunpack.c.l.b16 %v2455
      %v2488 = vunpack.c.h.b16 %v2455
      %v2489 = vunpack.c.l.b16 %v2456
      %v2490 = vunpack.c.l.b16 %v2457
      %v2491 = vunpack.c.h.b16 %v2457
      %v2492 = vunpack.c.l.b16 %v2458
      %v2493 = vunpack.c.l.b16 %v2459
      %v2494 = vunpack.c.h.b16 %v2459
      %v2495 = vunpack.c.l.b16 %v2460
      %v2496 = vunpack.c.l.b16 %v2461
      %v2497 = vunpack.c.h.b16 %v2461
      %v2498 = vunpack.c.l.b16 %v2462
      %v2499 = vunpack.c.l.b16 %v2463
      %v2500 = vunpack.c.h.b16 %v2463
      %v2501 = vunpack.c.l.b16 %v2464
      %v2502 = vunpack.c.l.b16 %v2465
      %v2503 = vunpack.c.h.b16 %v2465
      %v2504 = vunpack.c.l.b16 %v2466
      %v2505 = vunpack.c.l.b16 %v2467
      %v2506 = vunpack.c.h.b16 %v2467
      %v2507 = vunpack.c.l.b16 %v2468
      %v2508 = vunpack.c.l.b16 %v2469
      %v2509 = vunpack.c.h.b16 %v2469
      %v2510 = vunpack.c.l.b16 %v2470
      %v2511 = vpack.c.b16 %v2490, %v2487
      %v2512 = vpack.c.b16 %v2491, %v2488
      %v2513 = vpack.c.b16 %v2492, %v2489
      %v2514 = vpack.c.b16 %v2496, %v2493
      %v2515 = vpack.c.b16 %v2497, %v2494
      %v2516 = vpack.c.b16 %v2498, %v2495
      %v2517 = vpack.c.b16 %v2502, %v2499
      %v2518 = vpack.c.b16 %v2503, %v2500
      %v2519 = vpack.c.b16 %v2504, %v2501
      %v2520 = vpack.c.b16 %v2508, %v2505
      %v2521 = vpack.c.b16 %v2509, %v2506
      %v2522 = vpack.c.b16 %v2510, %v2507
      %v2536 = vsel %vm696, %v2453, 0
      %2538 = vmatprep.subr.bf16.mxu0 %v2512
      %2539 = vmatpush1.bf16.msra.mxu0 %v2511
      %2540 = vmatprep.subr.bf16.mxu0 %v2515
      %2541 = vmatpush1.bf16.msra.mxu0 %v2514
      %2542 = vmatprep.subr.bf16.mxu0 %v2518
      %2543 = vmatpush1.bf16.msra.mxu0 %v2517
      %2544 = vmatprep.subr.bf16.mxu0 %v2521
      %2545 = vmatpush1.bf16.msra.mxu0 %v2520
      %2546 = vmatprep.subr.bf16.mxu0 0
      %2547 = vmatpush1.bf16.msra.mxu0 0
      %2548 = vmatprep.subr.bf16.mxu0 0
      %2549 = vmatpush1.bf16.msra.mxu0 0
      %2550 = vmatprep.subr.bf16.mxu0 0
      %2551 = vmatpush1.bf16.msra.mxu0 0
      %2552 = vmatprep.subr.bf16.mxu0 0
      %2553 = vmatpush1.bf16.msra.mxu0 0
      %2554 = vmatprep.subr.bf16.mxu0 0
      %2555 = vmatpush1.bf16.msra.mxu0 0
      %2556 = vmatprep.subr.bf16.mxu0 0
      %2557 = vmatpush1.bf16.msra.mxu0 0
      %2558 = vmatprep.subr.bf16.mxu0 0
      %2559 = vmatpush1.bf16.msra.mxu0 0
      %2560 = vmatprep.subr.bf16.mxu0 0
      %2561 = vmatpush1.bf16.msra.mxu0 0
      %2562 = vmatprep.subr.bf16.mxu0 0
      %2563 = vmatpush1.bf16.msra.mxu0 0
      %2564 = vmatprep.subr.bf16.mxu0 0
      %2565 = vmatpush1.bf16.msra.mxu0 0
      %2566 = vmatprep.subr.bf16.mxu0 0
      %2567 = vmatpush1.bf16.msra.mxu0 0
      %2568 = vmatprep.subr.bf16.mxu0 0
      %2569 = vmatpush1.bf16.msra.mxu0 0
      %2570 = vmatprep.mubr.bf16.mxu0 0
      %2571 = vmatmul.mubr.bf16.gmra.mrb[0].mxu0 %v2536
      %v2572 = vpop.f32.mrb[0].mxu0
      %v2573 = vadd.f32 0.0, %v2572
      %v2574 = vpop.f32.mrb[0].mxu0
      %v2575 = vadd.f32 0.0, %v2574
      %v2576 = vpop.f32.mrb[0].mxu0
      %v2577 = vadd.f32 0.0, %v2576
      %v2578 = vpop.f32.mrb[0].mxu0
      %v2579 = vadd.f32 0.0, %v2578
      %2580 = vdwg.mxu0
      %2581 = vmatprep.subr.bf16.mxu0 0
      %2582 = vmatpush1.bf16.msra.mxu0 %v2513
      %2583 = vmatprep.subr.bf16.mxu0 0
      %2584 = vmatpush1.bf16.msra.mxu0 %v2516
      %2585 = vmatprep.subr.bf16.mxu0 0
      %2586 = vmatpush1.bf16.msra.mxu0 %v2519
      %2587 = vmatprep.subr.bf16.mxu0 0
      %2588 = vmatpush1.bf16.msra.mxu0 %v2522
      %2589 = vmatprep.subr.bf16.mxu0 0
      %2590 = vmatpush1.bf16.msra.mxu0 0
      %2591 = vmatprep.subr.bf16.mxu0 0
      %2592 = vmatpush1.bf16.msra.mxu0 0
      %2593 = vmatprep.subr.bf16.mxu0 0
      %2594 = vmatpush1.bf16.msra.mxu0 0
      %2595 = vmatprep.subr.bf16.mxu0 0
      %2596 = vmatpush1.bf16.msra.mxu0 0
      %2597 = vmatprep.subr.bf16.mxu0 0
      %2598 = vmatpush1.bf16.msra.mxu0 0
      %2599 = vmatprep.subr.bf16.mxu0 0
      %2600 = vmatpush1.bf16.msra.mxu0 0
      %2601 = vmatprep.subr.bf16.mxu0 0
      %2602 = vmatpush1.bf16.msra.mxu0 0
      %2603 = vmatprep.subr.bf16.mxu0 0
      %2604 = vmatpush1.bf16.msra.mxu0 0
      %2605 = vmatprep.subr.bf16.mxu0 0
      %2606 = vmatpush1.bf16.msra.mxu0 0
      %2607 = vmatprep.subr.bf16.mxu0 0
      %2608 = vmatpush1.bf16.msra.mxu0 0
      %2609 = vmatprep.subr.bf16.mxu0 0
      %2610 = vmatpush1.bf16.msra.mxu0 0
      %2611 = vmatprep.subr.bf16.mxu0 0
      %2612 = vmatpush1.bf16.msra.mxu0 0
      %2613 = vmatprep.mubr.bf16.mxu0 0
      %2614 = vmatmul.mubr.bf16.gmra.mrb[0].mxu0 %v2536
      %v2615 = vpop.f32.mrb[0].mxu0
      %v2616 = vadd.f32 0.0, %v2615
      %v2617 = vpop.f32.mrb[0].mxu0
      %v2618 = vpop.f32.mrb[0].mxu0
      %v2619 = vadd.f32 0.0, %v2618
      %v2620 = vpop.f32.mrb[0].mxu0
      %2621 = vdwg.mxu0
      %v2622 = vadd.f32 %v2402, %v2573
      %v2623 = vadd.f32 %v2404, %v2575
      %v2624 = vadd.f32 %v2445, %v2616
      %v2625 = vadd.f32 %v2406, %v2577
      %v2626 = vadd.f32 %v2408, %v2579
      %v2627 = vadd.f32 %v2448, %v2619
      %v2628 = vld [vmem:[%s11] sm:$0x7]
      %v2630 = vlaneseq
      %v2631 = vshrl.u32 %v2630, 7
      %v2632 = vsub.s32 0, %v2631
      %v2633 = vrot.slane %v2628, %v2632
      %v2634 = vlaneseq
      %v2635 = vshrl.u32 %v2634, 7
      %v2636 = vsub.s32 1, %v2635
      %v2637 = vrot.slane %v2628, %v2636
      %v2638 = vlaneseq
      %v2639 = vshrl.u32 %v2638, 7
      %v2640 = vsub.s32 2, %v2639
      %v2641 = vrot.slane %v2628, %v2640
      %v2645 = vadd.f32 %v2622, %v2633
      %v2646 = vadd.f32 %v2623, %v2637
      %v2647 = vadd.f32 %v2624, %v2641
      %v2648 = vadd.f32 %v2625, %v2633
      %v2649 = vadd.f32 %v2626, %v2637
      %v2650 = vadd.f32 %v2627, %v2641
      %vm2657 = vcmask 1040384
      %v2658 = vrot.slane %v2645, 7
      %v2659 = vrot.slane %v2646, 7
      %v2660 = vrot.slane %v2647, 7
      %v2661 = vrot.slane %v2648, 7
      %v2662 = vsel %vm2657, %v2658, %v2661
      %v2663 = vrot.slane %v2649, 7
      %v2664 = vsel %vm2657, %v2659, %v2663
      %v2665 = vrot.slane %v2650, 7
      %v2666 = vsel %vm2657, %v2660, %v2665
      %2676 = vst [vmem:[#allocation6] sm:$0xfe] %v2658
      %2677 = vst [vmem:[#allocation6 + $0x8] sm:$0xfe] %v2659
      %2678 = vst [vmem:[#allocation6 + $0x10] sm:$0xfe] %v2660
      %2679 = vst [vmem:[#allocation6 + $0x18] sm:$0xff] %v2662
      %2680 = vst [vmem:[#allocation6 + $0x20] sm:$0xff] %v2664
      %2681 = vst [vmem:[#allocation6 + $0x28] sm:$0xff] %v2666
      %2682 = vst [vmem:[#allocation6 + $0x30] sm:$0x1] %v2661
      %2683 = vst [vmem:[#allocation6 + $0x38] sm:$0x1] %v2663
      %2684 = vst [vmem:[#allocation6 + $0x40] sm:$0x1] %v2665
      %v2685 = vld [vmem:[#allocation6] sm:$0xff]
      %v2686 = vld [vmem:[#allocation6 + $0x8] sm:$0xff]
      %v2687 = vld [vmem:[#allocation6 + $0x10] sm:$0xff]
      %v2688 = vld [vmem:[#allocation6 + $0x18] sm:$0xff]
      %v2689 = vld [vmem:[#allocation6 + $0x20] sm:$0xff]
      %v2690 = vld [vmem:[#allocation6 + $0x28] sm:$0xff]
      %v2691 = vld [vmem:[#allocation7] sm:$0xff]
      %v2692 = vld [vmem:[#allocation7 + $0x48] sm:$0xff]
      %v2693 = vmul.f32 %v2691, %v2685
      %v2694 = vmul.f32 %v2692, %v2688
      %v2695 = vadd.f32 %v2693, 0.0
      %v2696 = vadd.f32 %v2694, 0.0
      %v2697 = vld [vmem:[#allocation7 + $0x8] sm:$0xff]
      %v2698 = vld [vmem:[#allocation7 + $0x50] sm:$0xff]
      %v2699 = vmul.f32 %v2697, %v2686
      %v2700 = vmul.f32 %v2698, %v2689
      %v2701 = vadd.f32 %v2695, %v2699
      %v2702 = vadd.f32 %v2696, %v2700
      %v2703 = vld [vmem:[#allocation7 + $0x10] sm:$0xff]
      %v2704 = vld [vmem:[#allocation7 + $0x58] sm:$0xff]
      %v2705 = vmul.f32 %v2703, %v2687
      %v2706 = vmul.f32 %v2704, %v2690
      %v2707 = vadd.f32 %v2701, %v2705
      %v2708 = vadd.f32 %v2702, %v2706
      %v2709 = vld [vmem:[#allocation6] sm:$0xfe]
      %v2710 = vld [vmem:[#allocation6 + $0x8] sm:$0xfe]
      %v2711 = vld [vmem:[#allocation6 + $0x10] sm:$0xfe]
      %v2712 = vld [vmem:[#allocation6 + $0x30] sm:$0x1]
      %v2713 = vld [vmem:[#allocation6 + $0x38] sm:$0x1]
      %v2714 = vld [vmem:[#allocation6 + $0x40] sm:$0x1]
      %v2715 = vld [vmem:[#allocation7 + $0x18] sm:$0xff]
      %v2716 = vld [vmem:[#allocation7 + $0x60] sm:$0xff]
      %vm2720 = vcmask 1046528
      %v2721 = vrot.slane %v2709, 1
      %v2722 = vrot.slane %v2688, 1
      %v2723 = vsel %vm2720, %v2721, %v2722
      %v2724 = vrot.slane %v2712, 1
      %v2725 = vsel %vm2720, %v2722, %v2724
      %v2728 = vmul.f32 %v2715, %v2723
      %v2729 = vmul.f32 %v2716, %v2725
      %v2730 = vadd.f32 %v2707, %v2728
      %v2731 = vadd.f32 %v2708, %v2729
      %v2732 = vld [vmem:[#allocation7 + $0x20] sm:$0xff]
      %v2733 = vld [vmem:[#allocation7 + $0x68] sm:$0xff]
      %v2737 = vrot.slane %v2710, 1
      %v2738 = vrot.slane %v2689, 1
      %v2739 = vsel %vm2720, %v2737, %v2738
      %v2740 = vrot.slane %v2713, 1
      %v2741 = vsel %vm2720, %v2738, %v2740
      %v2744 = vmul.f32 %v2732, %v2739
      %v2745 = vmul.f32 %v2733, %v2741
      %v2746 = vadd.f32 %v2730, %v2744
      %v2747 = vadd.f32 %v2731, %v2745
      %v2748 = vld [vmem:[#allocation7 + $0x28] sm:$0xff]
      %v2749 = vld [vmem:[#allocation7 + $0x70] sm:$0xff]
      %v2753 = vrot.slane %v2711, 1
      %v2754 = vrot.slane %v2690, 1
      %v2755 = vsel %vm2720, %v2753, %v2754
      %v2756 = vrot.slane %v2714, 1
      %v2757 = vsel %vm2720, %v2754, %v2756
      %v2760 = vmul.f32 %v2748, %v2755
      %v2761 = vmul.f32 %v2749, %v2757
      %v2762 = vadd.f32 %v2746, %v2760
      %v2763 = vadd.f32 %v2747, %v2761
      %v2764 = vld [vmem:[#allocation6] sm:$0xfc]
      %v2765 = vld [vmem:[#allocation6 + $0x8] sm:$0xfc]
      %v2766 = vld [vmem:[#allocation6 + $0x10] sm:$0xfc]
      %v2767 = vld [vmem:[#allocation6 + $0x30] sm:$0x3]
      %v2768 = vld [vmem:[#allocation6 + $0x38] sm:$0x3]
      %v2769 = vld [vmem:[#allocation6 + $0x40] sm:$0x3]
      %v2770 = vld [vmem:[#allocation7 + $0x30] sm:$0xff]
      %v2771 = vld [vmem:[#allocation7 + $0x78] sm:$0xff]
      %vm2774 = vcmask 1045504
      %v2775 = vrot.slane %v2764, 2
      %v2776 = vrot.slane %v2688, 2
      %v2777 = vsel %vm2774, %v2775, %v2776
      %v2778 = vrot.slane %v2767, 2
      %v2779 = vsel %vm2774, %v2776, %v2778
      %v2782 = vmul.f32 %v2770, %v2777
      %v2783 = vmul.f32 %v2771, %v2779
      %v2784 = vadd.f32 %v2762, %v2782
      %v2785 = vadd.f32 %v2763, %v2783
      %v2786 = vld [vmem:[#allocation7 + $0x38] sm:$0xff]
      %v2787 = vld [vmem:[#allocation7 + $0x80] sm:$0xff]
      %v2790 = vrot.slane %v2765, 2
      %v2791 = vrot.slane %v2689, 2
      %v2792 = vsel %vm2774, %v2790, %v2791
      %v2793 = vrot.slane %v2768, 2
      %v2794 = vsel %vm2774, %v2791, %v2793
      %v2797 = vmul.f32 %v2786, %v2792
      %v2798 = vmul.f32 %v2787, %v2794
      %v2799 = vadd.f32 %v2784, %v2797
      %v2800 = vadd.f32 %v2785, %v2798
      %v2801 = vld [vmem:[#allocation7 + $0x40] sm:$0xff]
      %v2802 = vld [vmem:[#allocation7 + $0x88] sm:$0xff]
      %v2805 = vrot.slane %v2766, 2
      %v2806 = vrot.slane %v2690, 2
      %v2807 = vsel %vm2774, %v2805, %v2806
      %v2808 = vrot.slane %v2769, 2
      %v2809 = vsel %vm2774, %v2806, %v2808
      %v2812 = vmul.f32 %v2801, %v2807
      %v2813 = vmul.f32 %v2802, %v2809
      %v2814 = vadd.f32 %v2799, %v2812
      %v2815 = vadd.f32 %v2800, %v2813
      %vm2816 = vcmp.ge.f32.partialorder %v2814, 0.0
      %vm2817 = vcmp.ge.f32.partialorder %v2815, 0.0
      %v2818 = vmul.f32 %v2814, 0.01
      %v2819 = vmul.f32 %v2815, 0.01
      %v2820 = vsel %vm2816, %v2814, %v2818
      %v2821 = vsel %vm2817, %v2815, %v2819
      %2822 = vst.msk [vmem:[#allocation3 + $0x2] sm:$0xff] %vm696, %v2106
      %2823 = vst.msk [vmem:[#allocation3 + $0xa] sm:$0xff] %vm696, %v2107
      %v2824 = vld [vmem:[#allocation3] sm:$0xff]
      %v2825 = vld [vmem:[#allocation3 + $0x8] sm:$0xff]
      %v2826 = vpack.c.bf16 %v2825, %v2824
      %v2827 = vld [vmem:[%s12] sm:$0xf]
      %v2828 = vld [vmem:[%s12 + $0x4] sm:$0xf]
      %v2829 = vld [vmem:[%s12 + $0x8] sm:$0xf]
      %v2830 = vld [vmem:[%s12 + $0xc] sm:$0xf]
      %v2831 = vld [vmem:[%s12 + $0x10] sm:$0xf]
      %v2832 = vld [vmem:[%s12 + $0x14] sm:$0xf]
      %v2833 = vld [vmem:[%s12 + $0x18] sm:$0xf]
      %v2834 = vld [vmem:[%s12 + $0x1c] sm:$0xf]
      %v2835 = vld [vmem:[#allocation3 + $0x1] sm:$0xff]
      %v2836 = vld [vmem:[#allocation3 + $0x9] sm:$0xff]
      %v2837 = vpack.c.bf16 %v2836, %v2835
      %s2838 = scalar_lea.vmem %s12, 32
      %v2839 = vld [vmem:[%s2838] sm:$0xf]
      %v2840 = vld [vmem:[%s2838 + $0x4] sm:$0xf]
      %v2841 = vld [vmem:[%s2838 + $0x8] sm:$0xf]
      %v2842 = vld [vmem:[%s2838 + $0xc] sm:$0xf]
      %v2843 = vld [vmem:[%s2838 + $0x10] sm:$0xf]
      %v2844 = vld [vmem:[%s2838 + $0x14] sm:$0xf]
      %v2845 = vld [vmem:[%s2838 + $0x18] sm:$0xf]
      %v2846 = vld [vmem:[%s2838 + $0x1c] sm:$0xf]
      %v2855 = vunpack.c.l.b16 %v2839
      %v2856 = vunpack.c.l.b16 %v2840
      %v2857 = vunpack.c.l.b16 %v2841
      %v2858 = vunpack.c.l.b16 %v2842
      %v2859 = vunpack.c.l.b16 %v2843
      %v2860 = vunpack.c.l.b16 %v2844
      %v2861 = vunpack.c.l.b16 %v2845
      %v2862 = vunpack.c.l.b16 %v2846
      %v2863 = vpack.c.b16 %v2856, %v2855
      %v2864 = vpack.c.b16 %v2858, %v2857
      %v2865 = vpack.c.b16 %v2860, %v2859
      %v2866 = vpack.c.b16 %v2862, %v2861
      %v2872 = vsel %vm696, %v2837, 0
      %2874 = vmatprep.subr.bf16.mxu0 0
      %2875 = vmatpush1.bf16.msra.mxu0 %v2863
      %2876 = vmatprep.subr.bf16.mxu0 0
      %2877 = vmatpush1.bf16.msra.mxu0 %v2864
      %2878 = vmatprep.subr.bf16.mxu0 0
      %2879 = vmatpush1.bf16.msra.mxu0 %v2865
      %2880 = vmatprep.subr.bf16.mxu0 0
      %2881 = vmatpush1.bf16.msra.mxu0 %v2866
      %2882 = vmatprep.subr.bf16.mxu0 0
      %2883 = vmatpush1.bf16.msra.mxu0 0
      %2884 = vmatprep.subr.bf16.mxu0 0
      %2885 = vmatpush1.bf16.msra.mxu0 0
      %2886 = vmatprep.subr.bf16.mxu0 0
      %2887 = vmatpush1.bf16.msra.mxu0 0
      %2888 = vmatprep.subr.bf16.mxu0 0
      %2889 = vmatpush1.bf16.msra.mxu0 0
      %2890 = vmatprep.subr.bf16.mxu0 0
      %2891 = vmatpush1.bf16.msra.mxu0 0
      %2892 = vmatprep.subr.bf16.mxu0 0
      %2893 = vmatpush1.bf16.msra.mxu0 0
      %2894 = vmatprep.subr.bf16.mxu0 0
      %2895 = vmatpush1.bf16.msra.mxu0 0
      %2896 = vmatprep.subr.bf16.mxu0 0
      %2897 = vmatpush1.bf16.msra.mxu0 0
      %2898 = vmatprep.subr.bf16.mxu0 0
      %2899 = vmatpush1.bf16.msra.mxu0 0
      %2900 = vmatprep.subr.bf16.mxu0 0
      %2901 = vmatpush1.bf16.msra.mxu0 0
      %2902 = vmatprep.subr.bf16.mxu0 0
      %2903 = vmatpush1.bf16.msra.mxu0 0
      %2904 = vmatprep.subr.bf16.mxu0 0
      %2905 = vmatpush1.bf16.msra.mxu0 0
      %2906 = vmatprep.mubr.bf16.mxu0 0
      %2907 = vmatmul.mubr.bf16.gmra.mrb[0].mxu0 %v2872
      %v2908 = vpop.f32.mrb[0].mxu0
      %v2909 = vadd.f32 0.0, %v2908
      %v2910 = vpop.f32.mrb[0].mxu0
      %v2911 = vpop.f32.mrb[0].mxu0
      %v2912 = vadd.f32 0.0, %v2911
      %v2913 = vpop.f32.mrb[0].mxu0
      %2914 = vdwg.mxu0
      %v2923 = vunpack.c.l.b16 %v2827
      %v2924 = vunpack.c.l.b16 %v2828
      %v2925 = vunpack.c.l.b16 %v2829
      %v2926 = vunpack.c.l.b16 %v2830
      %v2927 = vunpack.c.l.b16 %v2831
      %v2928 = vunpack.c.l.b16 %v2832
      %v2929 = vunpack.c.l.b16 %v2833
      %v2930 = vunpack.c.l.b16 %v2834
      %v2931 = vpack.c.b16 %v2924, %v2923
      %v2932 = vpack.c.b16 %v2926, %v2925
      %v2933 = vpack.c.b16 %v2928, %v2927
      %v2934 = vpack.c.b16 %v2930, %v2929
      %v2940 = vsel %vm696, %v2826, 0
      %2942 = vmatprep.subr.bf16.mxu0 0
      %2943 = vmatpush1.bf16.msra.mxu0 %v2931
      %2944 = vmatprep.subr.bf16.mxu0 0
      %2945 = vmatpush1.bf16.msra.mxu0 %v2932
      %2946 = vmatprep.subr.bf16.mxu0 0
      %2947 = vmatpush1.bf16.msra.mxu0 %v2933
      %2948 = vmatprep.subr.bf16.mxu0 0
      %2949 = vmatpush1.bf16.msra.mxu0 %v2934
      %2950 = vmatprep.subr.bf16.mxu0 0
      %2951 = vmatpush1.bf16.msra.mxu0 0
      %2952 = vmatprep.subr.bf16.mxu0 0
      %2953 = vmatpush1.bf16.msra.mxu0 0
      %2954 = vmatprep.subr.bf16.mxu0 0
      %2955 = vmatpush1.bf16.msra.mxu0 0
      %2956 = vmatprep.subr.bf16.mxu0 0
      %2957 = vmatpush1.bf16.msra.mxu0 0
      %2958 = vmatprep.subr.bf16.mxu0 0
      %2959 = vmatpush1.bf16.msra.mxu0 0
      %2960 = vmatprep.subr.bf16.mxu0 0
      %2961 = vmatpush1.bf16.msra.mxu0 0
      %2962 = vmatprep.subr.bf16.mxu0 0
      %2963 = vmatpush1.bf16.msra.mxu0 0
      %2964 = vmatprep.subr.bf16.mxu0 0
      %2965 = vmatpush1.bf16.msra.mxu0 0
      %2966 = vmatprep.subr.bf16.mxu0 0
      %2967 = vmatpush1.bf16.msra.mxu0 0
      %2968 = vmatprep.subr.bf16.mxu0 0
      %2969 = vmatpush1.bf16.msra.mxu0 0
      %2970 = vmatprep.subr.bf16.mxu0 0
      %2971 = vmatpush1.bf16.msra.mxu0 0
      %2972 = vmatprep.subr.bf16.mxu0 0
      %2973 = vmatpush1.bf16.msra.mxu0 0
      %2974 = vmatprep.mubr.bf16.mxu0 0
      %2975 = vmatmul.mubr.bf16.gmra.mrb[0].mxu0 %v2940
      %v2976 = vpop.f32.mrb[0].mxu0
      %v2977 = vadd.f32 %v2909, %v2976
      %v2978 = vpop.f32.mrb[0].mxu0
      %v2979 = vpop.f32.mrb[0].mxu0
      %v2980 = vadd.f32 %v2912, %v2979
      %v2981 = vpop.f32.mrb[0].mxu0
      %2982 = vdwg.mxu0
      %v2983 = vld [vmem:[#allocation3 + $0x2] sm:$0xff]
      %v2984 = vld [vmem:[#allocation3 + $0xa] sm:$0xff]
      %v2985 = vpack.c.bf16 %v2984, %v2983
      %s2986 = scalar_lea.vmem %s12, 64
      %v2987 = vld [vmem:[%s2986] sm:$0xf]
      %v2988 = vld [vmem:[%s2986 + $0x4] sm:$0xf]
      %v2989 = vld [vmem:[%s2986 + $0x8] sm:$0xf]
      %v2990 = vld [vmem:[%s2986 + $0xc] sm:$0xf]
      %v2991 = vld [vmem:[%s2986 + $0x10] sm:$0xf]
      %v2992 = vld [vmem:[%s2986 + $0x14] sm:$0xf]
      %v2993 = vld [vmem:[%s2986 + $0x18] sm:$0xf]
      %v2994 = vld [vmem:[%s2986 + $0x1c] sm:$0xf]
      %v3003 = vunpack.c.l.b16 %v2987
      %v3004 = vunpack.c.l.b16 %v2988
      %v3005 = vunpack.c.l.b16 %v2989
      %v3006 = vunpack.c.l.b16 %v2990
      %v3007 = vunpack.c.l.b16 %v2991
      %v3008 = vunpack.c.l.b16 %v2992
      %v3009 = vunpack.c.l.b16 %v2993
      %v3010 = vunpack.c.l.b16 %v2994
      %v3011 = vpack.c.b16 %v3004, %v3003
      %v3012 = vpack.c.b16 %v3006, %v3005
      %v3013 = vpack.c.b16 %v3008, %v3007
      %v3014 = vpack.c.b16 %v3010, %v3009
      %v3020 = vsel %vm696, %v2985, 0
      %3022 = vmatprep.subr.bf16.mxu0 0
      %3023 = vmatpush1.bf16.msra.mxu0 %v3011
      %3024 = vmatprep.subr.bf16.mxu0 0
      %3025 = vmatpush1.bf16.msra.mxu0 %v3012
      %3026 = vmatprep.subr.bf16.mxu0 0
      %3027 = vmatpush1.bf16.msra.mxu0 %v3013
      %3028 = vmatprep.subr.bf16.mxu0 0
      %3029 = vmatpush1.bf16.msra.mxu0 %v3014
      %3030 = vmatprep.subr.bf16.mxu0 0
      %3031 = vmatpush1.bf16.msra.mxu0 0
      %3032 = vmatprep.subr.bf16.mxu0 0
      %3033 = vmatpush1.bf16.msra.mxu0 0
      %3034 = vmatprep.subr.bf16.mxu0 0
      %3035 = vmatpush1.bf16.msra.mxu0 0
      %3036 = vmatprep.subr.bf16.mxu0 0
      %3037 = vmatpush1.bf16.msra.mxu0 0
      %3038 = vmatprep.subr.bf16.mxu0 0
      %3039 = vmatpush1.bf16.msra.mxu0 0
      %3040 = vmatprep.subr.bf16.mxu0 0
      %3041 = vmatpush1.bf16.msra.mxu0 0
      %3042 = vmatprep.subr.bf16.mxu0 0
      %3043 = vmatpush1.bf16.msra.mxu0 0
      %3044 = vmatprep.subr.bf16.mxu0 0
      %3045 = vmatpush1.bf16.msra.mxu0 0
      %3046 = vmatprep.subr.bf16.mxu0 0
      %3047 = vmatpush1.bf16.msra.mxu0 0
      %3048 = vmatprep.subr.bf16.mxu0 0
      %3049 = vmatpush1.bf16.msra.mxu0 0
      %3050 = vmatprep.subr.bf16.mxu0 0
      %3051 = vmatpush1.bf16.msra.mxu0 0
      %3052 = vmatprep.subr.bf16.mxu0 0
      %3053 = vmatpush1.bf16.msra.mxu0 0
      %3054 = vmatprep.mubr.bf16.mxu0 0
      %3055 = vmatmul.mubr.bf16.gmra.mrb[0].mxu0 %v3020
      %v3056 = vpop.f32.mrb[0].mxu0
      %v3057 = vadd.f32 0.0, %v3056
      %v3058 = vpop.f32.mrb[0].mxu0
      %v3059 = vpop.f32.mrb[0].mxu0
      %v3060 = vadd.f32 0.0, %v3059
      %v3061 = vpop.f32.mrb[0].mxu0
      %3062 = vdwg.mxu0
      %v3063 = vadd.f32 %v2977, %v3057
      %v3064 = vadd.f32 %v2980, %v3060
      %v3065 = vld [vmem:[#allocation3 + $0x3] sm:$0xff]
      %v3066 = vld [vmem:[#allocation3 + $0xb] sm:$0xff]
      %v3067 = vpack.c.bf16 %v3066, %v3065
      %s3068 = scalar_lea.vmem %s12, 96
      %v3069 = vld [vmem:[%s3068] sm:$0xf]
      %v3070 = vld [vmem:[%s3068 + $0x4] sm:$0xf]
      %v3071 = vld [vmem:[%s3068 + $0x8] sm:$0xf]
      %v3072 = vld [vmem:[%s3068 + $0xc] sm:$0xf]
      %v3073 = vld [vmem:[%s3068 + $0x10] sm:$0xf]
      %v3074 = vld [vmem:[%s3068 + $0x14] sm:$0xf]
      %v3075 = vld [vmem:[%s3068 + $0x18] sm:$0xf]
      %v3076 = vld [vmem:[%s3068 + $0x1c] sm:$0xf]
      %v3085 = vunpack.c.l.b16 %v3069
      %v3086 = vunpack.c.l.b16 %v3070
      %v3087 = vunpack.c.l.b16 %v3071
      %v3088 = vunpack.c.l.b16 %v3072
      %v3089 = vunpack.c.l.b16 %v3073
      %v3090 = vunpack.c.l.b16 %v3074
      %v3091 = vunpack.c.l.b16 %v3075
      %v3092 = vunpack.c.l.b16 %v3076
      %v3093 = vpack.c.b16 %v3086, %v3085
      %v3094 = vpack.c.b16 %v3088, %v3087
      %v3095 = vpack.c.b16 %v3090, %v3089
      %v3096 = vpack.c.b16 %v3092, %v3091
      %v3102 = vsel %vm696, %v3067, 0
      %3104 = vmatprep.subr.bf16.mxu0 0
      %3105 = vmatpush1.bf16.msra.mxu0 %v3093
      %3106 = vmatprep.subr.bf16.mxu0 0
      %3107 = vmatpush1.bf16.msra.mxu0 %v3094
      %3108 = vmatprep.subr.bf16.mxu0 0
      %3109 = vmatpush1.bf16.msra.mxu0 %v3095
      %3110 = vmatprep.subr.bf16.mxu0 0
      %3111 = vmatpush1.bf16.msra.mxu0 %v3096
      %3112 = vmatprep.subr.bf16.mxu0 0
      %3113 = vmatpush1.bf16.msra.mxu0 0
      %3114 = vmatprep.subr.bf16.mxu0 0
      %3115 = vmatpush1.bf16.msra.mxu0 0
      %3116 = vmatprep.subr.bf16.mxu0 0
      %3117 = vmatpush1.bf16.msra.mxu0 0
      %3118 = vmatprep.subr.bf16.mxu0 0
      %3119 = vmatpush1.bf16.msra.mxu0 0
      %3120 = vmatprep.subr.bf16.mxu0 0
      %3121 = vmatpush1.bf16.msra.mxu0 0
      %3122 = vmatprep.subr.bf16.mxu0 0
      %3123 = vmatpush1.bf16.msra.mxu0 0
      %3124 = vmatprep.subr.bf16.mxu0 0
      %3125 = vmatpush1.bf16.msra.mxu0 0
      %3126 = vmatprep.subr.bf16.mxu0 0
      %3127 = vmatpush1.bf16.msra.mxu0 0
      %3128 = vmatprep.subr.bf16.mxu0 0
      %3129 = vmatpush1.bf16.msra.mxu0 0
      %3130 = vmatprep.subr.bf16.mxu0 0
      %3131 = vmatpush1.bf16.msra.mxu0 0
      %3132 = vmatprep.subr.bf16.mxu0 0
      %3133 = vmatpush1.bf16.msra.mxu0 0
      %3134 = vmatprep.subr.bf16.mxu0 0
      %3135 = vmatpush1.bf16.msra.mxu0 0
      %3136 = vmatprep.mubr.bf16.mxu0 0
      %3137 = vmatmul.mubr.bf16.gmra.mrb[0].mxu0 %v3102
      %v3138 = vpop.f32.mrb[0].mxu0
      %v3139 = vadd.f32 0.0, %v3138
      %v3140 = vpop.f32.mrb[0].mxu0
      %v3141 = vpop.f32.mrb[0].mxu0
      %v3142 = vadd.f32 0.0, %v3141
      %v3143 = vpop.f32.mrb[0].mxu0
      %3144 = vdwg.mxu0
      %v3145 = vadd.f32 %v3063, %v3139
      %v3146 = vadd.f32 %v3064, %v3142
      %v3147 = vld [vmem:[#allocation3 + $0x4] sm:$0xff]
      %v3148 = vld [vmem:[#allocation3 + $0xc] sm:$0xff]
      %v3149 = vpack.c.bf16 %v3148, %v3147
      %s3150 = scalar_lea.vmem %s12, 128
      %v3151 = vld [vmem:[%s3150] sm:$0xf]
      %v3152 = vld [vmem:[%s3150 + $0x4] sm:$0xf]
      %v3153 = vld [vmem:[%s3150 + $0x8] sm:$0xf]
      %v3154 = vld [vmem:[%s3150 + $0xc] sm:$0xf]
      %v3155 = vld [vmem:[%s3150 + $0x10] sm:$0xf]
      %v3156 = vld [vmem:[%s3150 + $0x14] sm:$0xf]
      %v3157 = vld [vmem:[%s3150 + $0x18] sm:$0xf]
      %v3158 = vld [vmem:[%s3150 + $0x1c] sm:$0xf]
      %v3167 = vunpack.c.l.b16 %v3151
      %v3168 = vunpack.c.l.b16 %v3152
      %v3169 = vunpack.c.l.b16 %v3153
      %v3170 = vunpack.c.l.b16 %v3154
      %v3171 = vunpack.c.l.b16 %v3155
      %v3172 = vunpack.c.l.b16 %v3156
      %v3173 = vunpack.c.l.b16 %v3157
      %v3174 = vunpack.c.l.b16 %v3158
      %v3175 = vpack.c.b16 %v3168, %v3167
      %v3176 = vpack.c.b16 %v3170, %v3169
      %v3177 = vpack.c.b16 %v3172, %v3171
      %v3178 = vpack.c.b16 %v3174, %v3173
      %v3184 = vsel %vm696, %v3149, 0
      %3186 = vmatprep.subr.bf16.mxu0 0
      %3187 = vmatpush1.bf16.msra.mxu0 %v3175
      %3188 = vmatprep.subr.bf16.mxu0 0
      %3189 = vmatpush1.bf16.msra.mxu0 %v3176
      %3190 = vmatprep.subr.bf16.mxu0 0
      %3191 = vmatpush1.bf16.msra.mxu0 %v3177
      %3192 = vmatprep.subr.bf16.mxu0 0
      %3193 = vmatpush1.bf16.msra.mxu0 %v3178
      %3194 = vmatprep.subr.bf16.mxu0 0
      %3195 = vmatpush1.bf16.msra.mxu0 0
      %3196 = vmatprep.subr.bf16.mxu0 0
      %3197 = vmatpush1.bf16.msra.mxu0 0
      %3198 = vmatprep.subr.bf16.mxu0 0
      %3199 = vmatpush1.bf16.msra.mxu0 0
      %3200 = vmatprep.subr.bf16.mxu0 0
      %3201 = vmatpush1.bf16.msra.mxu0 0
      %3202 = vmatprep.subr.bf16.mxu0 0
      %3203 = vmatpush1.bf16.msra.mxu0 0
      %3204 = vmatprep.subr.bf16.mxu0 0
      %3205 = vmatpush1.bf16.msra.mxu0 0
      %3206 = vmatprep.subr.bf16.mxu0 0
      %3207 = vmatpush1.bf16.msra.mxu0 0
      %3208 = vmatprep.subr.bf16.mxu0 0
      %3209 = vmatpush1.bf16.msra.mxu0 0
      %3210 = vmatprep.subr.bf16.mxu0 0
      %3211 = vmatpush1.bf16.msra.mxu0 0
      %3212 = vmatprep.subr.bf16.mxu0 0
      %3213 = vmatpush1.bf16.msra.mxu0 0
      %3214 = vmatprep.subr.bf16.mxu0 0
      %3215 = vmatpush1.bf16.msra.mxu0 0
      %3216 = vmatprep.subr.bf16.mxu0 0
      %3217 = vmatpush1.bf16.msra.mxu0 0
      %3218 = vmatprep.mubr.bf16.mxu0 0
      %3219 = vmatmul.mubr.bf16.gmra.mrb[0].mxu0 %v3184
      %v3220 = vpop.f32.mrb[0].mxu0
      %v3221 = vadd.f32 0.0, %v3220
      %v3222 = vpop.f32.mrb[0].mxu0
      %v3223 = vpop.f32.mrb[0].mxu0
      %v3224 = vadd.f32 0.0, %v3223
      %v3225 = vpop.f32.mrb[0].mxu0
      %3226 = vdwg.mxu0
      %v3227 = vadd.f32 %v3145, %v3221
      %v3228 = vadd.f32 %v3146, %v3224
      %v3229 = vld [vmem:[%s13] sm:$0x1]
      %v3231 = vlaneseq
      %v3232 = vshrl.u32 %v3231, 7
      %v3233 = vsub.s32 0, %v3232
      %v3234 = vrot.slane %v3229, %v3233
      %v3236 = vadd.f32 %v3227, %v3234
      %v3237 = vadd.f32 %v3228, %v3234
      %vm3238 = vcmp.ge.f32.partialorder %v3236, 0.0
      %vm3239 = vcmp.ge.f32.partialorder %v3237, 0.0
      %v3240 = vmul.f32 %v3236, 0.01
      %v3241 = vmul.f32 %v3237, 0.01
      %v3242 = vsel %vm3238, %v3236, %v3240
      %v3243 = vsel %vm3239, %v3237, %v3241
      %v3244 = vpack.c.bf16 %v3243, %v3242
      %v3245 = vld [vmem:[%s14] sm:$0xff]
      %v3246 = vld [vmem:[%s14 + $0x8] sm:$0xff]
      %v3247 = vld [vmem:[%s14 + $0x10] sm:$0xff]
      %v3248 = vld [vmem:[%s14 + $0x18] sm:$0xff]
      %v3249 = vld [vmem:[%s14 + $0x20] sm:$0xf]
      %v3250 = vld [vmem:[%s14 + $0x24] sm:$0xff]
      %v3251 = vld [vmem:[%s14 + $0x2c] sm:$0xff]
      %v3252 = vld [vmem:[%s14 + $0x34] sm:$0xff]
      %v3253 = vld [vmem:[%s14 + $0x3c] sm:$0xff]
      %v3254 = vld [vmem:[%s14 + $0x44] sm:$0xf]
      %v3255 = vld [vmem:[%s14 + $0x48] sm:$0xff]
      %v3256 = vld [vmem:[%s14 + $0x50] sm:$0xff]
      %v3257 = vld [vmem:[%s14 + $0x58] sm:$0xff]
      %v3258 = vld [vmem:[%s14 + $0x60] sm:$0xff]
      %v3259 = vld [vmem:[%s14 + $0x68] sm:$0xf]
      %v3260 = vld [vmem:[%s14 + $0x6c] sm:$0xff]
      %v3261 = vld [vmem:[%s14 + $0x74] sm:$0xff]
      %v3262 = vld [vmem:[%s14 + $0x7c] sm:$0xff]
      %v3263 = vld [vmem:[%s14 + $0x84] sm:$0xff]
      %v3264 = vld [vmem:[%s14 + $0x8c] sm:$0xf]
      %v3265 = vld [vmem:[%s14 + $0x90] sm:$0xff]
      %v3266 = vld [vmem:[%s14 + $0x98] sm:$0xff]
      %v3267 = vld [vmem:[%s14 + $0xa0] sm:$0xff]
      %v3268 = vld [vmem:[%s14 + $0xa8] sm:$0xff]
      %v3269 = vld [vmem:[%s14 + $0xb0] sm:$0xf]
      %v3270 = vld [vmem:[%s14 + $0xb4] sm:$0xff]
      %v3271 = vld [vmem:[%s14 + $0xbc] sm:$0xff]
      %v3272 = vld [vmem:[%s14 + $0xc4] sm:$0xff]
      %v3273 = vld [vmem:[%s14 + $0xcc] sm:$0xff]
      %v3274 = vld [vmem:[%s14 + $0xd4] sm:$0xf]
      %v3275 = vld [vmem:[%s14 + $0xd8] sm:$0xff]
      %v3276 = vld [vmem:[%s14 + $0xe0] sm:$0xff]
      %v3277 = vld [vmem:[%s14 + $0xe8] sm:$0xff]
      %v3278 = vld [vmem:[%s14 + $0xf0] sm:$0xff]
      %v3279 = vld [vmem:[%s14 + $0xf8] sm:$0xf]
      %v3280 = vld [vmem:[%s14 + $0xfc] sm:$0xff]
      %v3281 = vld [vmem:[%s14 + $0x104] sm:$0xff]
      %v3282 = vld [vmem:[%s14 + $0x10c] sm:$0xff]
      %v3283 = vld [vmem:[%s14 + $0x114] sm:$0xff]
      %v3284 = vld [vmem:[%s14 + $0x11c] sm:$0xf]
      %v3285 = vld [vmem:[%s14 + $0x120] sm:$0xff]
      %v3286 = vld [vmem:[%s14 + $0x128] sm:$0xff]
      %v3287 = vld [vmem:[%s14 + $0x130] sm:$0xff]
      %v3288 = vld [vmem:[%s14 + $0x138] sm:$0xff]
      %v3289 = vld [vmem:[%s14 + $0x140] sm:$0xf]
      %v3290 = vld [vmem:[%s14 + $0x144] sm:$0xff]
      %v3291 = vld [vmem:[%s14 + $0x14c] sm:$0xff]
      %v3292 = vld [vmem:[%s14 + $0x154] sm:$0xff]
      %v3293 = vld [vmem:[%s14 + $0x15c] sm:$0xff]
      %v3294 = vld [vmem:[%s14 + $0x164] sm:$0xf]
      %v3295 = vld [vmem:[%s14 + $0x168] sm:$0xff]
      %v3296 = vld [vmem:[%s14 + $0x170] sm:$0xff]
      %v3297 = vld [vmem:[%s14 + $0x178] sm:$0xff]
      %v3298 = vld [vmem:[%s14 + $0x180] sm:$0xff]
      %v3299 = vld [vmem:[%s14 + $0x188] sm:$0xf]
      %v3300 = vld [vmem:[%s14 + $0x18c] sm:$0xff]
      %v3301 = vld [vmem:[%s14 + $0x194] sm:$0xff]
      %v3302 = vld [vmem:[%s14 + $0x19c] sm:$0xff]
      %v3303 = vld [vmem:[%s14 + $0x1a4] sm:$0xff]
      %v3304 = vld [vmem:[%s14 + $0x1ac] sm:$0xf]
      %v3305 = vld [vmem:[%s15] sm:$0xff]
      %v3306 = vld [vmem:[%s15 + $0x8] sm:$0x1]
      %v3309 = vlaneseq
      %v3310 = vshrl.u32 %v3309, 7
      %v3311 = vsub.s32 0, %v3310
      %v3312 = vrot.slane %v3305, %v3311
      %v3313 = vlaneseq
      %v3314 = vshrl.u32 %v3313, 7
      %v3315 = vsub.s32 1, %v3314
      %v3316 = vrot.slane %v3305, %v3315
      %v3317 = vlaneseq
      %v3318 = vshrl.u32 %v3317, 7
      %v3319 = vsub.s32 2, %v3318
      %v3320 = vrot.slane %v3305, %v3319
      %v3321 = vlaneseq
      %v3322 = vshrl.u32 %v3321, 7
      %v3323 = vsub.s32 3, %v3322
      %v3324 = vrot.slane %v3305, %v3323
      %v3325 = vlaneseq
      %v3326 = vshrl.u32 %v3325, 7
      %v3327 = vsub.s32 4, %v3326
      %v3328 = vrot.slane %v3305, %v3327
      %v3329 = vlaneseq
      %v3330 = vshrl.u32 %v3329, 7
      %v3331 = vsub.s32 5, %v3330
      %v3332 = vrot.slane %v3305, %v3331
      %v3333 = vlaneseq
      %v3334 = vshrl.u32 %v3333, 7
      %v3335 = vsub.s32 6, %v3334
      %v3336 = vrot.slane %v3305, %v3335
      %v3337 = vlaneseq
      %v3338 = vshrl.u32 %v3337, 7
      %v3339 = vsub.s32 7, %v3338
      %v3340 = vrot.slane %v3305, %v3339
      %v3341 = vlaneseq
      %v3342 = vshrl.u32 %v3341, 7
      %v3343 = vsub.s32 0, %v3342
      %v3344 = vrot.slane %v3306, %v3343
      %v3414 = vunpack.c.l.b16 %v3245
      %v3415 = vunpack.c.h.b16 %v3245
      %v3416 = vunpack.c.l.b16 %v3246
      %v3417 = vunpack.c.h.b16 %v3246
      %v3418 = vunpack.c.l.b16 %v3247
      %v3419 = vunpack.c.h.b16 %v3247
      %v3420 = vunpack.c.l.b16 %v3248
      %v3421 = vunpack.c.h.b16 %v3248
      %v3422 = vunpack.c.l.b16 %v3249
      %v3423 = vunpack.c.l.b16 %v3250
      %v3424 = vunpack.c.h.b16 %v3250
      %v3425 = vunpack.c.l.b16 %v3251
      %v3426 = vunpack.c.h.b16 %v3251
      %v3427 = vunpack.c.l.b16 %v3252
      %v3428 = vunpack.c.h.b16 %v3252
      %v3429 = vunpack.c.l.b16 %v3253
      %v3430 = vunpack.c.h.b16 %v3253
      %v3431 = vunpack.c.l.b16 %v3254
      %v3432 = vunpack.c.l.b16 %v3255
      %v3433 = vunpack.c.h.b16 %v3255
      %v3434 = vunpack.c.l.b16 %v3256
      %v3435 = vunpack.c.h.b16 %v3256
      %v3436 = vunpack.c.l.b16 %v3257
      %v3437 = vunpack.c.h.b16 %v3257
      %v3438 = vunpack.c.l.b16 %v3258
      %v3439 = vunpack.c.h.b16 %v3258
      %v3440 = vunpack.c.l.b16 %v3259
      %v3441 = vunpack.c.l.b16 %v3260
      %v3442 = vunpack.c.h.b16 %v3260
      %v3443 = vunpack.c.l.b16 %v3261
      %v3444 = vunpack.c.h.b16 %v3261
      %v3445 = vunpack.c.l.b16 %v3262
      %v3446 = vunpack.c.h.b16 %v3262
      %v3447 = vunpack.c.l.b16 %v3263
      %v3448 = vunpack.c.h.b16 %v3263
      %v3449 = vunpack.c.l.b16 %v3264
      %v3450 = vunpack.c.l.b16 %v3265
      %v3451 = vunpack.c.h.b16 %v3265
      %v3452 = vunpack.c.l.b16 %v3266
      %v3453 = vunpack.c.h.b16 %v3266
      %v3454 = vunpack.c.l.b16 %v3267
      %v3455 = vunpack.c.h.b16 %v3267
      %v3456 = vunpack.c.l.b16 %v3268
      %v3457 = vunpack.c.h.b16 %v3268
      %v3458 = vunpack.c.l.b16 %v3269
      %v3459 = vunpack.c.l.b16 %v3270
      %v3460 = vunpack.c.h.b16 %v3270
      %v3461 = vunpack.c.l.b16 %v3271
      %v3462 = vunpack.c.h.b16 %v3271
      %v3463 = vunpack.c.l.b16 %v3272
      %v3464 = vunpack.c.h.b16 %v3272
      %v3465 = vunpack.c.l.b16 %v3273
      %v3466 = vunpack.c.h.b16 %v3273
      %v3467 = vunpack.c.l.b16 %v3274
      %v3468 = vunpack.c.l.b16 %v3275
      %v3469 = vunpack.c.h.b16 %v3275
      %v3470 = vunpack.c.l.b16 %v3276
      %v3471 = vunpack.c.h.b16 %v3276
      %v3472 = vunpack.c.l.b16 %v3277
      %v3473 = vunpack.c.h.b16 %v3277
      %v3474 = vunpack.c.l.b16 %v3278
      %v3475 = vunpack.c.h.b16 %v3278
      %v3476 = vunpack.c.l.b16 %v3279
      %v3477 = vunpack.c.l.b16 %v3280
      %v3478 = vunpack.c.h.b16 %v3280
      %v3479 = vunpack.c.l.b16 %v3281
      %v3480 = vunpack.c.h.b16 %v3281
      %v3481 = vunpack.c.l.b16 %v3282
      %v3482 = vunpack.c.h.b16 %v3282
      %v3483 = vunpack.c.l.b16 %v3283
      %v3484 = vunpack.c.h.b16 %v3283
      %v3485 = vunpack.c.l.b16 %v3284
      %v3486 = vunpack.c.l.b16 %v3285
      %v3487 = vunpack.c.h.b16 %v3285
      %v3488 = vunpack.c.l.b16 %v3286
      %v3489 = vunpack.c.h.b16 %v3286
      %v3490 = vunpack.c.l.b16 %v3287
      %v3491 = vunpack.c.h.b16 %v3287
      %v3492 = vunpack.c.l.b16 %v3288
      %v3493 = vunpack.c.h.b16 %v3288
      %v3494 = vunpack.c.l.b16 %v3289
      %v3495 = vunpack.c.l.b16 %v3290
      %v3496 = vunpack.c.h.b16 %v3290
      %v3497 = vunpack.c.l.b16 %v3291
      %v3498 = vunpack.c.h.b16 %v3291
      %v3499 = vunpack.c.l.b16 %v3292
      %v3500 = vunpack.c.h.b16 %v3292
      %v3501 = vunpack.c.l.b16 %v3293
      %v3502 = vunpack.c.h.b16 %v3293
      %v3503 = vunpack.c.l.b16 %v3294
      %v3504 = vunpack.c.l.b16 %v3295
      %v3505 = vunpack.c.h.b16 %v3295
      %v3506 = vunpack.c.l.b16 %v3296
      %v3507 = vunpack.c.h.b16 %v3296
      %v3508 = vunpack.c.l.b16 %v3297
      %v3509 = vunpack.c.h.b16 %v3297
      %v3510 = vunpack.c.l.b16 %v3298
      %v3511 = vunpack.c.h.b16 %v3298
      %v3512 = vunpack.c.l.b16 %v3299
      %v3513 = vunpack.c.l.b16 %v3300
      %v3514 = vunpack.c.h.b16 %v3300
      %v3515 = vunpack.c.l.b16 %v3301
      %v3516 = vunpack.c.h.b16 %v3301
      %v3517 = vunpack.c.l.b16 %v3302
      %v3518 = vunpack.c.h.b16 %v3302
      %v3519 = vunpack.c.l.b16 %v3303
      %v3520 = vunpack.c.h.b16 %v3303
      %v3521 = vunpack.c.l.b16 %v3304
      %v3522 = vpack.c.b16 %v3423, %v3414
      %v3523 = vpack.c.b16 %v3424, %v3415
      %v3524 = vpack.c.b16 %v3425, %v3416
      %v3525 = vpack.c.b16 %v3426, %v3417
      %v3526 = vpack.c.b16 %v3427, %v3418
      %v3527 = vpack.c.b16 %v3428, %v3419
      %v3528 = vpack.c.b16 %v3429, %v3420
      %v3529 = vpack.c.b16 %v3430, %v3421
      %v3530 = vpack.c.b16 %v3431, %v3422
      %v3531 = vpack.c.b16 %v3441, %v3432
      %v3532 = vpack.c.b16 %v3442, %v3433
      %v3533 = vpack.c.b16 %v3443, %v3434
      %v3534 = vpack.c.b16 %v3444, %v3435
      %v3535 = vpack.c.b16 %v3445, %v3436
      %v3536 = vpack.c.b16 %v3446, %v3437
      %v3537 = vpack.c.b16 %v3447, %v3438
      %v3538 = vpack.c.b16 %v3448, %v3439
      %v3539 = vpack.c.b16 %v3449, %v3440
      %v3540 = vpack.c.b16 %v3459, %v3450
      %v3541 = vpack.c.b16 %v3460, %v3451
      %v3542 = vpack.c.b16 %v3461, %v3452
      %v3543 = vpack.c.b16 %v3462, %v3453
      %v3544 = vpack.c.b16 %v3463, %v3454
      %v3545 = vpack.c.b16 %v3464, %v3455
      %v3546 = vpack.c.b16 %v3465, %v3456
      %v3547 = vpack.c.b16 %v3466, %v3457
      %v3548 = vpack.c.b16 %v3467, %v3458
      %v3549 = vpack.c.b16 %v3477, %v3468
      %v3550 = vpack.c.b16 %v3478, %v3469
      %v3551 = vpack.c.b16 %v3479, %v3470
      %v3552 = vpack.c.b16 %v3480, %v3471
      %v3553 = vpack.c.b16 %v3481, %v3472
      %v3554 = vpack.c.b16 %v3482, %v3473
      %v3555 = vpack.c.b16 %v3483, %v3474
      %v3556 = vpack.c.b16 %v3484, %v3475
      %v3557 = vpack.c.b16 %v3485, %v3476
      %v3558 = vpack.c.b16 %v3495, %v3486
      %v3559 = vpack.c.b16 %v3496, %v3487
      %v3560 = vpack.c.b16 %v3497, %v3488
      %v3561 = vpack.c.b16 %v3498, %v3489
      %v3562 = vpack.c.b16 %v3499, %v3490
      %v3563 = vpack.c.b16 %v3500, %v3491
      %v3564 = vpack.c.b16 %v3501, %v3492
      %v3565 = vpack.c.b16 %v3502, %v3493
      %v3566 = vpack.c.b16 %v3503, %v3494
      %v3567 = vpack.c.b16 %v3513, %v3504
      %v3568 = vpack.c.b16 %v3514, %v3505
      %v3569 = vpack.c.b16 %v3515, %v3506
      %v3570 = vpack.c.b16 %v3516, %v3507
      %v3571 = vpack.c.b16 %v3517, %v3508
      %v3572 = vpack.c.b16 %v3518, %v3509
      %v3573 = vpack.c.b16 %v3519, %v3510
      %v3574 = vpack.c.b16 %v3520, %v3511
      %v3575 = vpack.c.b16 %v3521, %v3512
      %v3631 = vsel %vm1533, %v3244, 0
      %3633 = vmatprep.subr.bf16.mxu0 %v3523
      %3634 = vmatpush1.bf16.msra.mxu0 %v3522
      %3635 = vmatprep.subr.bf16.mxu0 %v3532
      %3636 = vmatpush1.bf16.msra.mxu0 %v3531
      %3637 = vmatprep.subr.bf16.mxu0 %v3541
      %3638 = vmatpush1.bf16.msra.mxu0 %v3540
      %3639 = vmatprep.subr.bf16.mxu0 %v3550
      %3640 = vmatpush1.bf16.msra.mxu0 %v3549
      %3641 = vmatprep.subr.bf16.mxu0 %v3559
      %3642 = vmatpush1.bf16.msra.mxu0 %v3558
      %3643 = vmatprep.subr.bf16.mxu0 %v3568
      %3644 = vmatpush1.bf16.msra.mxu0 %v3567
      %3645 = vmatprep.subr.bf16.mxu0 0
      %3646 = vmatpush1.bf16.msra.mxu0 0
      %3647 = vmatprep.subr.bf16.mxu0 0
      %3648 = vmatpush1.bf16.msra.mxu0 0
      %3649 = vmatprep.subr.bf16.mxu0 0
      %3650 = vmatpush1.bf16.msra.mxu0 0
      %3651 = vmatprep.subr.bf16.mxu0 0
      %3652 = vmatpush1.bf16.msra.mxu0 0
      %3653 = vmatprep.subr.bf16.mxu0 0
      %3654 = vmatpush1.bf16.msra.mxu0 0
      %3655 = vmatprep.subr.bf16.mxu0 0
      %3656 = vmatpush1.bf16.msra.mxu0 0
      %3657 = vmatprep.subr.bf16.mxu0 0
      %3658 = vmatpush1.bf16.msra.mxu0 0
      %3659 = vmatprep.subr.bf16.mxu0 0
      %3660 = vmatpush1.bf16.msra.mxu0 0
      %3661 = vmatprep.subr.bf16.mxu0 0
      %3662 = vmatpush1.bf16.msra.mxu0 0
      %3663 = vmatprep.subr.bf16.mxu0 0
      %3664 = vmatpush1.bf16.msra.mxu0 0
      %3665 = vmatprep.mubr.bf16.mxu0 0
      %3666 = vmatmul.mubr.bf16.gmra.mrb[0].mxu0 %v3631
      %v3667 = vpop.f32.mrb[0].mxu0
      %v3668 = vadd.f32 %v3312, %v3667
      %v3669 = vpop.f32.mrb[0].mxu0
      %v3670 = vadd.f32 %v3316, %v3669
      %v3671 = vpop.f32.mrb[0].mxu0
      %v3672 = vadd.f32 %v3312, %v3671
      %v3673 = vpop.f32.mrb[0].mxu0
      %v3674 = vadd.f32 %v3316, %v3673
      %3675 = vdwg.mxu0
      %3676 = vmatprep.subr.bf16.mxu0 %v3525
      %3677 = vmatpush1.bf16.msra.mxu0 %v3524
      %3678 = vmatprep.subr.bf16.mxu0 %v3534
      %3679 = vmatpush1.bf16.msra.mxu0 %v3533
      %3680 = vmatprep.subr.bf16.mxu0 %v3543
      %3681 = vmatpush1.bf16.msra.mxu0 %v3542
      %3682 = vmatprep.subr.bf16.mxu0 %v3552
      %3683 = vmatpush1.bf16.msra.mxu0 %v3551
      %3684 = vmatprep.subr.bf16.mxu0 %v3561
      %3685 = vmatpush1.bf16.msra.mxu0 %v3560
      %3686 = vmatprep.subr.bf16.mxu0 %v3570
      %3687 = vmatpush1.bf16.msra.mxu0 %v3569
      %3688 = vmatprep.subr.bf16.mxu0 0
      %3689 = vmatpush1.bf16.msra.mxu0 0
      %3690 = vmatprep.subr.bf16.mxu0 0
      %3691 = vmatpush1.bf16.msra.mxu0 0
      %3692 = vmatprep.subr.bf16.mxu0 0
      %3693 = vmatpush1.bf16.msra.mxu0 0
      %3694 = vmatprep.subr.bf16.mxu0 0
      %3695 = vmatpush1.bf16.msra.mxu0 0
      %3696 = vmatprep.subr.bf16.mxu0 0
      %3697 = vmatpush1.bf16.msra.mxu0 0
      %3698 = vmatprep.subr.bf16.mxu0 0
      %3699 = vmatpush1.bf16.msra.mxu0 0
      %3700 = vmatprep.subr.bf16.mxu0 0
      %3701 = vmatpush1.bf16.msra.mxu0 0
      %3702 = vmatprep.subr.bf16.mxu0 0
      %3703 = vmatpush1.bf16.msra.mxu0 0
      %3704 = vmatprep.subr.bf16.mxu0 0
      %3705 = vmatpush1.bf16.msra.mxu0 0
      %3706 = vmatprep.subr.bf16.mxu0 0
      %3707 = vmatpush1.bf16.msra.mxu0 0
      %3708 = vmatprep.mubr.bf16.mxu0 0
      %3709 = vmatmul.mubr.bf16.gmra.mrb[0].mxu0 %v3631
      %v3710 = vpop.f32.mrb[0].mxu0
      %v3711 = vadd.f32 %v3320, %v3710
      %v3712 = vpop.f32.mrb[0].mxu0
      %v3713 = vadd.f32 %v3324, %v3712
      %v3714 = vpop.f32.mrb[0].mxu0
      %v3715 = vadd.f32 %v3320, %v3714
      %v3716 = vpop.f32.mrb[0].mxu0
      %v3717 = vadd.f32 %v3324, %v3716
      %3718 = vdwg.mxu0
      %3719 = vmatprep.subr.bf16.mxu0 %v3527
      %3720 = vmatpush1.bf16.msra.mxu0 %v3526
      %3721 = vmatprep.subr.bf16.mxu0 %v3536
      %3722 = vmatpush1.bf16.msra.mxu0 %v3535
      %3723 = vmatprep.subr.bf16.mxu0 %v3545
      %3724 = vmatpush1.bf16.msra.mxu0 %v3544
      %3725 = vmatprep.subr.bf16.mxu0 %v3554
      %3726 = vmatpush1.bf16.msra.mxu0 %v3553
      %3727 = vmatprep.subr.bf16.mxu0 %v3563
      %3728 = vmatpush1.bf16.msra.mxu0 %v3562
      %3729 = vmatprep.subr.bf16.mxu0 %v3572
      %3730 = vmatpush1.bf16.msra.mxu0 %v3571
      %3731 = vmatprep.subr.bf16.mxu0 0
      %3732 = vmatpush1.bf16.msra.mxu0 0
      %3733 = vmatprep.subr.bf16.mxu0 0
      %3734 = vmatpush1.bf16.msra.mxu0 0
      %3735 = vmatprep.subr.bf16.mxu0 0
      %3736 = vmatpush1.bf16.msra.mxu0 0
      %3737 = vmatprep.subr.bf16.mxu0 0
      %3738 = vmatpush1.bf16.msra.mxu0 0
      %3739 = vmatprep.subr.bf16.mxu0 0
      %3740 = vmatpush1.bf16.msra.mxu0 0
      %3741 = vmatprep.subr.bf16.mxu0 0
      %3742 = vmatpush1.bf16.msra.mxu0 0
      %3743 = vmatprep.subr.bf16.mxu0 0
      %3744 = vmatpush1.bf16.msra.mxu0 0
      %3745 = vmatprep.subr.bf16.mxu0 0
      %3746 = vmatpush1.bf16.msra.mxu0 0
      %3747 = vmatprep.subr.bf16.mxu0 0
      %3748 = vmatpush1.bf16.msra.mxu0 0
      %3749 = vmatprep.subr.bf16.mxu0 0
      %3750 = vmatpush1.bf16.msra.mxu0 0
      %3751 = vmatprep.mubr.bf16.mxu0 0
      %3752 = vmatmul.mubr.bf16.gmra.mrb[0].mxu0 %v3631
      %v3753 = vpop.f32.mrb[0].mxu0
      %v3754 = vadd.f32 %v3328, %v3753
      %v3755 = vpop.f32.mrb[0].mxu0
      %v3756 = vadd.f32 %v3332, %v3755
      %v3757 = vpop.f32.mrb[0].mxu0
      %v3758 = vadd.f32 %v3328, %v3757
      %v3759 = vpop.f32.mrb[0].mxu0
      %v3760 = vadd.f32 %v3332, %v3759
      %3761 = vdwg.mxu0
      %3762 = vmatprep.subr.bf16.mxu0 %v3529
      %3763 = vmatpush1.bf16.msra.mxu0 %v3528
      %3764 = vmatprep.subr.bf16.mxu0 %v3538
      %3765 = vmatpush1.bf16.msra.mxu0 %v3537
      %3766 = vmatprep.subr.bf16.mxu0 %v3547
      %3767 = vmatpush1.bf16.msra.mxu0 %v3546
      %3768 = vmatprep.subr.bf16.mxu0 %v3556
      %3769 = vmatpush1.bf16.msra.mxu0 %v3555
      %3770 = vmatprep.subr.bf16.mxu0 %v3565
      %3771 = vmatpush1.bf16.msra.mxu0 %v3564
      %3772 = vmatprep.subr.bf16.mxu0 %v3574
      %3773 = vmatpush1.bf16.msra.mxu0 %v3573
      %3774 = vmatprep.subr.bf16.mxu0 0
      %3775 = vmatpush1.bf16.msra.mxu0 0
      %3776 = vmatprep.subr.bf16.mxu0 0
      %3777 = vmatpush1.bf16.msra.mxu0 0
      %3778 = vmatprep.subr.bf16.mxu0 0
      %3779 = vmatpush1.bf16.msra.mxu0 0
      %3780 = vmatprep.subr.bf16.mxu0 0
      %3781 = vmatpush1.bf16.msra.mxu0 0
      %3782 = vmatprep.subr.bf16.mxu0 0
      %3783 = vmatpush1.bf16.msra.mxu0 0
      %3784 = vmatprep.subr.bf16.mxu0 0
      %3785 = vmatpush1.bf16.msra.mxu0 0
      %3786 = vmatprep.subr.bf16.mxu0 0
      %3787 = vmatpush1.bf16.msra.mxu0 0
      %3788 = vmatprep.subr.bf16.mxu0 0
      %3789 = vmatpush1.bf16.msra.mxu0 0
      %3790 = vmatprep.subr.bf16.mxu0 0
      %3791 = vmatpush1.bf16.msra.mxu0 0
      %3792 = vmatprep.subr.bf16.mxu0 0
      %3793 = vmatpush1.bf16.msra.mxu0 0
      %3794 = vmatprep.mubr.bf16.mxu0 0
      %3795 = vmatmul.mubr.bf16.gmra.mrb[0].mxu0 %v3631
      %v3796 = vpop.f32.mrb[0].mxu0
      %v3797 = vadd.f32 %v3336, %v3796
      %v3798 = vpop.f32.mrb[0].mxu0
      %v3799 = vadd.f32 %v3340, %v3798
      %v3800 = vpop.f32.mrb[0].mxu0
      %v3801 = vadd.f32 %v3336, %v3800
      %v3802 = vpop.f32.mrb[0].mxu0
      %v3803 = vadd.f32 %v3340, %v3802
      %3804 = vdwg.mxu0
      %3805 = vmatprep.subr.bf16.mxu0 0
      %3806 = vmatpush1.bf16.msra.mxu0 %v3530
      %3807 = vmatprep.subr.bf16.mxu0 0
      %3808 = vmatpush1.bf16.msra.mxu0 %v3539
      %3809 = vmatprep.subr.bf16.mxu0 0
      %3810 = vmatpush1.bf16.msra.mxu0 %v3548
      %3811 = vmatprep.subr.bf16.mxu0 0
      %3812 = vmatpush1.bf16.msra.mxu0 %v3557
      %3813 = vmatprep.subr.bf16.mxu0 0
      %3814 = vmatpush1.bf16.msra.mxu0 %v3566
      %3815 = vmatprep.subr.bf16.mxu0 0
      %3816 = vmatpush1.bf16.msra.mxu0 %v3575
      %3817 = vmatprep.subr.bf16.mxu0 0
      %3818 = vmatpush1.bf16.msra.mxu0 0
      %3819 = vmatprep.subr.bf16.mxu0 0
      %3820 = vmatpush1.bf16.msra.mxu0 0
      %3821 = vmatprep.subr.bf16.mxu0 0
      %3822 = vmatpush1.bf16.msra.mxu0 0
      %3823 = vmatprep.subr.bf16.mxu0 0
      %3824 = vmatpush1.bf16.msra.mxu0 0
      %3825 = vmatprep.subr.bf16.mxu0 0
      %3826 = vmatpush1.bf16.msra.mxu0 0
      %3827 = vmatprep.subr.bf16.mxu0 0
      %3828 = vmatpush1.bf16.msra.mxu0 0
      %3829 = vmatprep.subr.bf16.mxu0 0
      %3830 = vmatpush1.bf16.msra.mxu0 0
      %3831 = vmatprep.subr.bf16.mxu0 0
      %3832 = vmatpush1.bf16.msra.mxu0 0
      %3833 = vmatprep.subr.bf16.mxu0 0
      %3834 = vmatpush1.bf16.msra.mxu0 0
      %3835 = vmatprep.subr.bf16.mxu0 0
      %3836 = vmatpush1.bf16.msra.mxu0 0
      %3837 = vmatprep.mubr.bf16.mxu0 0
      %3838 = vmatmul.mubr.bf16.gmra.mrb[0].mxu0 %v3631
      %v3839 = vpop.f32.mrb[0].mxu0
      %v3840 = vadd.f32 %v3344, %v3839
      %v3841 = vpop.f32.mrb[0].mxu0
      %v3842 = vpop.f32.mrb[0].mxu0
      %v3843 = vadd.f32 %v3344, %v3842
      %v3844 = vpop.f32.mrb[0].mxu0
      %3845 = vdwg.mxu0
      %3846 = vst [vmem:[#allocation7] sm:$0xff] %v3668
      %3847 = vst [vmem:[#allocation7 + $0x8] sm:$0xff] %v3670
      %3848 = vst [vmem:[#allocation7 + $0x10] sm:$0xff] %v3711
      %3849 = vst [vmem:[#allocation7 + $0x18] sm:$0xff] %v3713
      %3850 = vst [vmem:[#allocation7 + $0x20] sm:$0xff] %v3754
      %3851 = vst [vmem:[#allocation7 + $0x28] sm:$0xff] %v3756
      %3852 = vst [vmem:[#allocation7 + $0x30] sm:$0xff] %v3797
      %3853 = vst [vmem:[#allocation7 + $0x38] sm:$0xff] %v3799
      %3854 = vst [vmem:[#allocation7 + $0x40] sm:$0xff] %v3840
      %3855 = vst [vmem:[#allocation7 + $0x48] sm:$0xff] %v3672
      %3856 = vst [vmem:[#allocation7 + $0x50] sm:$0xff] %v3674
      %3857 = vst [vmem:[#allocation7 + $0x58] sm:$0xff] %v3715
      %3858 = vst [vmem:[#allocation7 + $0x60] sm:$0xff] %v3717
      %3859 = vst [vmem:[#allocation7 + $0x68] sm:$0xff] %v3758
      %3860 = vst [vmem:[#allocation7 + $0x70] sm:$0xff] %v3760
      %3861 = vst [vmem:[#allocation7 + $0x78] sm:$0xff] %v3801
      %3862 = vst [vmem:[#allocation7 + $0x80] sm:$0xff] %v3803
      %3863 = vst [vmem:[#allocation7 + $0x88] sm:$0xff] %v3843
      %v3864 = vld [vmem:[#allocation3] sm:$0xff]
      %v3865 = vld [vmem:[#allocation3 + $0x8] sm:$0xff]
      %v3866 = vpack.c.bf16 %v3865, %v3864
      %v3867 = vld [vmem:[%s16] sm:$0xf]
      %v3868 = vld [vmem:[%s16 + $0x4] sm:$0xf]
      %v3869 = vld [vmem:[%s16 + $0x8] sm:$0xf]
      %v3870 = vld [vmem:[%s16 + $0xc] sm:$0xf]
      %v3871 = vld [vmem:[%s16 + $0x10] sm:$0xf]
      %v3872 = vld [vmem:[%s16 + $0x14] sm:$0xf]
      %v3873 = vld [vmem:[%s16 + $0x18] sm:$0xf]
      %v3874 = vld [vmem:[%s16 + $0x1c] sm:$0xf]
      %v3875 = vld [vmem:[#allocation3 + $0x1] sm:$0xff]
      %v3876 = vld [vmem:[#allocation3 + $0x9] sm:$0xff]
      %v3877 = vpack.c.bf16 %v3876, %v3875
      %s3878 = scalar_lea.vmem %s16, 32
      %v3879 = vld [vmem:[%s3878] sm:$0xf]
      %v3880 = vld [vmem:[%s3878 + $0x4] sm:$0xf]
      %v3881 = vld [vmem:[%s3878 + $0x8] sm:$0xf]
      %v3882 = vld [vmem:[%s3878 + $0xc] sm:$0xf]
      %v3883 = vld [vmem:[%s3878 + $0x10] sm:$0xf]
      %v3884 = vld [vmem:[%s3878 + $0x14] sm:$0xf]
      %v3885 = vld [vmem:[%s3878 + $0x18] sm:$0xf]
      %v3886 = vld [vmem:[%s3878 + $0x1c] sm:$0xf]
      %v3895 = vunpack.c.l.b16 %v3879
      %v3896 = vunpack.c.l.b16 %v3880
      %v3897 = vunpack.c.l.b16 %v3881
      %v3898 = vunpack.c.l.b16 %v3882
      %v3899 = vunpack.c.l.b16 %v3883
      %v3900 = vunpack.c.l.b16 %v3884
      %v3901 = vunpack.c.l.b16 %v3885
      %v3902 = vunpack.c.l.b16 %v3886
      %v3903 = vpack.c.b16 %v3896, %v3895
      %v3904 = vpack.c.b16 %v3898, %v3897
      %v3905 = vpack.c.b16 %v3900, %v3899
      %v3906 = vpack.c.b16 %v3902, %v3901
      %v3912 = vsel %vm696, %v3877, 0
      %3914 = vmatprep.subr.bf16.mxu0 0
      %3915 = vmatpush1.bf16.msra.mxu0 %v3903
      %3916 = vmatprep.subr.bf16.mxu0 0
      %3917 = vmatpush1.bf16.msra.mxu0 %v3904
      %3918 = vmatprep.subr.bf16.mxu0 0
      %3919 = vmatpush1.bf16.msra.mxu0 %v3905
      %3920 = vmatprep.subr.bf16.mxu0 0
      %3921 = vmatpush1.bf16.msra.mxu0 %v3906
      %3922 = vmatprep.subr.bf16.mxu0 0
      %3923 = vmatpush1.bf16.msra.mxu0 0
      %3924 = vmatprep.subr.bf16.mxu0 0
      %3925 = vmatpush1.bf16.msra.mxu0 0
      %3926 = vmatprep.subr.bf16.mxu0 0
      %3927 = vmatpush1.bf16.msra.mxu0 0
      %3928 = vmatprep.subr.bf16.mxu0 0
      %3929 = vmatpush1.bf16.msra.mxu0 0
      %3930 = vmatprep.subr.bf16.mxu0 0
      %3931 = vmatpush1.bf16.msra.mxu0 0
      %3932 = vmatprep.subr.bf16.mxu0 0
      %3933 = vmatpush1.bf16.msra.mxu0 0
      %3934 = vmatprep.subr.bf16.mxu0 0
      %3935 = vmatpush1.bf16.msra.mxu0 0
      %3936 = vmatprep.subr.bf16.mxu0 0
      %3937 = vmatpush1.bf16.msra.mxu0 0
      %3938 = vmatprep.subr.bf16.mxu0 0
      %3939 = vmatpush1.bf16.msra.mxu0 0
      %3940 = vmatprep.subr.bf16.mxu0 0
      %3941 = vmatpush1.bf16.msra.mxu0 0
      %3942 = vmatprep.subr.bf16.mxu0 0
      %3943 = vmatpush1.bf16.msra.mxu0 0
      %3944 = vmatprep.subr.bf16.mxu0 0
      %3945 = vmatpush1.bf16.msra.mxu0 0
      %3946 = vmatprep.mubr.bf16.mxu0 0
      %3947 = vmatmul.mubr.bf16.gmra.mrb[0].mxu0 %v3912
      %v3948 = vpop.f32.mrb[0].mxu0
      %v3949 = vadd.f32 0.0, %v3948
      %v3950 = vpop.f32.mrb[0].mxu0
      %v3951 = vpop.f32.mrb[0].mxu0
      %v3952 = vadd.f32 0.0, %v3951
      %v3953 = vpop.f32.mrb[0].mxu0
      %3954 = vdwg.mxu0
      %v3963 = vunpack.c.l.b16 %v3867
      %v3964 = vunpack.c.l.b16 %v3868
      %v3965 = vunpack.c.l.b16 %v3869
      %v3966 = vunpack.c.l.b16 %v3870
      %v3967 = vunpack.c.l.b16 %v3871
      %v3968 = vunpack.c.l.b16 %v3872
      %v3969 = vunpack.c.l.b16 %v3873
      %v3970 = vunpack.c.l.b16 %v3874
      %v3971 = vpack.c.b16 %v3964, %v3963
      %v3972 = vpack.c.b16 %v3966, %v3965
      %v3973 = vpack.c.b16 %v3968, %v3967
      %v3974 = vpack.c.b16 %v3970, %v3969
      %v3980 = vsel %vm696, %v3866, 0
      %3982 = vmatprep.subr.bf16.mxu0 0
      %3983 = vmatpush1.bf16.msra.mxu0 %v3971
      %3984 = vmatprep.subr.bf16.mxu0 0
      %3985 = vmatpush1.bf16.msra.mxu0 %v3972
      %3986 = vmatprep.subr.bf16.mxu0 0
      %3987 = vmatpush1.bf16.msra.mxu0 %v3973
      %3988 = vmatprep.subr.bf16.mxu0 0
      %3989 = vmatpush1.bf16.msra.mxu0 %v3974
      %3990 = vmatprep.subr.bf16.mxu0 0
      %3991 = vmatpush1.bf16.msra.mxu0 0
      %3992 = vmatprep.subr.bf16.mxu0 0
      %3993 = vmatpush1.bf16.msra.mxu0 0
      %3994 = vmatprep.subr.bf16.mxu0 0
      %3995 = vmatpush1.bf16.msra.mxu0 0
      %3996 = vmatprep.subr.bf16.mxu0 0
      %3997 = vmatpush1.bf16.msra.mxu0 0
      %3998 = vmatprep.subr.bf16.mxu0 0
      %3999 = vmatpush1.bf16.msra.mxu0 0
      %4000 = vmatprep.subr.bf16.mxu0 0
      %4001 = vmatpush1.bf16.msra.mxu0 0
      %4002 = vmatprep.subr.bf16.mxu0 0
      %4003 = vmatpush1.bf16.msra.mxu0 0
      %4004 = vmatprep.subr.bf16.mxu0 0
      %4005 = vmatpush1.bf16.msra.mxu0 0
      %4006 = vmatprep.subr.bf16.mxu0 0
      %4007 = vmatpush1.bf16.msra.mxu0 0
      %4008 = vmatprep.subr.bf16.mxu0 0
      %4009 = vmatpush1.bf16.msra.mxu0 0
      %4010 = vmatprep.subr.bf16.mxu0 0
      %4011 = vmatpush1.bf16.msra.mxu0 0
      %4012 = vmatprep.subr.bf16.mxu0 0
      %4013 = vmatpush1.bf16.msra.mxu0 0
      %4014 = vmatprep.mubr.bf16.mxu0 0
      %4015 = vmatmul.mubr.bf16.gmra.mrb[0].mxu0 %v3980
      %v4016 = vpop.f32.mrb[0].mxu0
      %v4017 = vadd.f32 %v3949, %v4016
      %v4018 = vpop.f32.mrb[0].mxu0
      %v4019 = vpop.f32.mrb[0].mxu0
      %v4020 = vadd.f32 %v3952, %v4019
      %v4021 = vpop.f32.mrb[0].mxu0
      %4022 = vdwg.mxu0
      %v4023 = vld [vmem:[#allocation3 + $0x2] sm:$0xff]
      %v4024 = vld [vmem:[#allocation3 + $0xa] sm:$0xff]
      %v4025 = vpack.c.bf16 %v4024, %v4023
      %s4026 = scalar_lea.vmem %s16, 64
      %v4027 = vld [vmem:[%s4026] sm:$0xf]
      %v4028 = vld [vmem:[%s4026 + $0x4] sm:$0xf]
      %v4029 = vld [vmem:[%s4026 + $0x8] sm:$0xf]
      %v4030 = vld [vmem:[%s4026 + $0xc] sm:$0xf]
      %v4031 = vld [vmem:[%s4026 + $0x10] sm:$0xf]
      %v4032 = vld [vmem:[%s4026 + $0x14] sm:$0xf]
      %v4033 = vld [vmem:[%s4026 + $0x18] sm:$0xf]
      %v4034 = vld [vmem:[%s4026 + $0x1c] sm:$0xf]
      %v4043 = vunpack.c.l.b16 %v4027
      %v4044 = vunpack.c.l.b16 %v4028
      %v4045 = vunpack.c.l.b16 %v4029
      %v4046 = vunpack.c.l.b16 %v4030
      %v4047 = vunpack.c.l.b16 %v4031
      %v4048 = vunpack.c.l.b16 %v4032
      %v4049 = vunpack.c.l.b16 %v4033
      %v4050 = vunpack.c.l.b16 %v4034
      %v4051 = vpack.c.b16 %v4044, %v4043
      %v4052 = vpack.c.b16 %v4046, %v4045
      %v4053 = vpack.c.b16 %v4048, %v4047
      %v4054 = vpack.c.b16 %v4050, %v4049
      %v4060 = vsel %vm696, %v4025, 0
      %4062 = vmatprep.subr.bf16.mxu0 0
      %4063 = vmatpush1.bf16.msra.mxu0 %v4051
      %4064 = vmatprep.subr.bf16.mxu0 0
      %4065 = vmatpush1.bf16.msra.mxu0 %v4052
      %4066 = vmatprep.subr.bf16.mxu0 0
      %4067 = vmatpush1.bf16.msra.mxu0 %v4053
      %4068 = vmatprep.subr.bf16.mxu0 0
      %4069 = vmatpush1.bf16.msra.mxu0 %v4054
      %4070 = vmatprep.subr.bf16.mxu0 0
      %4071 = vmatpush1.bf16.msra.mxu0 0
      %4072 = vmatprep.subr.bf16.mxu0 0
      %4073 = vmatpush1.bf16.msra.mxu0 0
      %4074 = vmatprep.subr.bf16.mxu0 0
      %4075 = vmatpush1.bf16.msra.mxu0 0
      %4076 = vmatprep.subr.bf16.mxu0 0
      %4077 = vmatpush1.bf16.msra.mxu0 0
      %4078 = vmatprep.subr.bf16.mxu0 0
      %4079 = vmatpush1.bf16.msra.mxu0 0
      %4080 = vmatprep.subr.bf16.mxu0 0
      %4081 = vmatpush1.bf16.msra.mxu0 0
      %4082 = vmatprep.subr.bf16.mxu0 0
      %4083 = vmatpush1.bf16.msra.mxu0 0
      %4084 = vmatprep.subr.bf16.mxu0 0
      %4085 = vmatpush1.bf16.msra.mxu0 0
      %4086 = vmatprep.subr.bf16.mxu0 0
      %4087 = vmatpush1.bf16.msra.mxu0 0
      %4088 = vmatprep.subr.bf16.mxu0 0
      %4089 = vmatpush1.bf16.msra.mxu0 0
      %4090 = vmatprep.subr.bf16.mxu0 0
      %4091 = vmatpush1.bf16.msra.mxu0 0
      %4092 = vmatprep.subr.bf16.mxu0 0
      %4093 = vmatpush1.bf16.msra.mxu0 0
      %4094 = vmatprep.mubr.bf16.mxu0 0
      %4095 = vmatmul.mubr.bf16.gmra.mrb[0].mxu0 %v4060
      %v4096 = vpop.f32.mrb[0].mxu0
      %v4097 = vadd.f32 0.0, %v4096
      %v4098 = vpop.f32.mrb[0].mxu0
      %v4099 = vpop.f32.mrb[0].mxu0
      %v4100 = vadd.f32 0.0, %v4099
      %v4101 = vpop.f32.mrb[0].mxu0
      %4102 = vdwg.mxu0
      %v4103 = vadd.f32 %v4017, %v4097
      %v4104 = vadd.f32 %v4020, %v4100
      %v4105 = vld [vmem:[#allocation3 + $0x3] sm:$0xff]
      %v4106 = vld [vmem:[#allocation3 + $0xb] sm:$0xff]
      %v4107 = vpack.c.bf16 %v4106, %v4105
      %s4108 = scalar_lea.vmem %s16, 96
      %v4109 = vld [vmem:[%s4108] sm:$0xf]
      %v4110 = vld [vmem:[%s4108 + $0x4] sm:$0xf]
      %v4111 = vld [vmem:[%s4108 + $0x8] sm:$0xf]
      %v4112 = vld [vmem:[%s4108 + $0xc] sm:$0xf]
      %v4113 = vld [vmem:[%s4108 + $0x10] sm:$0xf]
      %v4114 = vld [vmem:[%s4108 + $0x14] sm:$0xf]
      %v4115 = vld [vmem:[%s4108 + $0x18] sm:$0xf]
      %v4116 = vld [vmem:[%s4108 + $0x1c] sm:$0xf]
      %v4125 = vunpack.c.l.b16 %v4109
      %v4126 = vunpack.c.l.b16 %v4110
      %v4127 = vunpack.c.l.b16 %v4111
      %v4128 = vunpack.c.l.b16 %v4112
      %v4129 = vunpack.c.l.b16 %v4113
      %v4130 = vunpack.c.l.b16 %v4114
      %v4131 = vunpack.c.l.b16 %v4115
      %v4132 = vunpack.c.l.b16 %v4116
      %v4133 = vpack.c.b16 %v4126, %v4125
      %v4134 = vpack.c.b16 %v4128, %v4127
      %v4135 = vpack.c.b16 %v4130, %v4129
      %v4136 = vpack.c.b16 %v4132, %v4131
      %v4142 = vsel %vm696, %v4107, 0
      %4144 = vmatprep.subr.bf16.mxu0 0
      %4145 = vmatpush1.bf16.msra.mxu0 %v4133
      %4146 = vmatprep.subr.bf16.mxu0 0
      %4147 = vmatpush1.bf16.msra.mxu0 %v4134
      %4148 = vmatprep.subr.bf16.mxu0 0
      %4149 = vmatpush1.bf16.msra.mxu0 %v4135
      %4150 = vmatprep.subr.bf16.mxu0 0
      %4151 = vmatpush1.bf16.msra.mxu0 %v4136
      %4152 = vmatprep.subr.bf16.mxu0 0
      %4153 = vmatpush1.bf16.msra.mxu0 0
      %4154 = vmatprep.subr.bf16.mxu0 0
      %4155 = vmatpush1.bf16.msra.mxu0 0
      %4156 = vmatprep.subr.bf16.mxu0 0
      %4157 = vmatpush1.bf16.msra.mxu0 0
      %4158 = vmatprep.subr.bf16.mxu0 0
      %4159 = vmatpush1.bf16.msra.mxu0 0
      %4160 = vmatprep.subr.bf16.mxu0 0
      %4161 = vmatpush1.bf16.msra.mxu0 0
      %4162 = vmatprep.subr.bf16.mxu0 0
      %4163 = vmatpush1.bf16.msra.mxu0 0
      %4164 = vmatprep.subr.bf16.mxu0 0
      %4165 = vmatpush1.bf16.msra.mxu0 0
      %4166 = vmatprep.subr.bf16.mxu0 0
      %4167 = vmatpush1.bf16.msra.mxu0 0
      %4168 = vmatprep.subr.bf16.mxu0 0
      %4169 = vmatpush1.bf16.msra.mxu0 0
      %4170 = vmatprep.subr.bf16.mxu0 0
      %4171 = vmatpush1.bf16.msra.mxu0 0
      %4172 = vmatprep.subr.bf16.mxu0 0
      %4173 = vmatpush1.bf16.msra.mxu0 0
      %4174 = vmatprep.subr.bf16.mxu0 0
      %4175 = vmatpush1.bf16.msra.mxu0 0
      %4176 = vmatprep.mubr.bf16.mxu0 0
      %4177 = vmatmul.mubr.bf16.gmra.mrb[0].mxu0 %v4142
      %v4178 = vpop.f32.mrb[0].mxu0
      %v4179 = vadd.f32 0.0, %v4178
      %v4180 = vpop.f32.mrb[0].mxu0
      %v4181 = vpop.f32.mrb[0].mxu0
      %v4182 = vadd.f32 0.0, %v4181
      %v4183 = vpop.f32.mrb[0].mxu0
      %4184 = vdwg.mxu0
      %v4185 = vadd.f32 %v4103, %v4179
      %v4186 = vadd.f32 %v4104, %v4182
      %v4187 = vld [vmem:[#allocation3 + $0x4] sm:$0xff]
      %v4188 = vld [vmem:[#allocation3 + $0xc] sm:$0xff]
      %v4189 = vpack.c.bf16 %v4188, %v4187
      %s4190 = scalar_lea.vmem %s16, 128
      %v4191 = vld [vmem:[%s4190] sm:$0xf]
      %v4192 = vld [vmem:[%s4190 + $0x4] sm:$0xf]
      %v4193 = vld [vmem:[%s4190 + $0x8] sm:$0xf]
      %v4194 = vld [vmem:[%s4190 + $0xc] sm:$0xf]
      %v4195 = vld [vmem:[%s4190 + $0x10] sm:$0xf]
      %v4196 = vld [vmem:[%s4190 + $0x14] sm:$0xf]
      %v4197 = vld [vmem:[%s4190 + $0x18] sm:$0xf]
      %v4198 = vld [vmem:[%s4190 + $0x1c] sm:$0xf]
      %v4207 = vunpack.c.l.b16 %v4191
      %v4208 = vunpack.c.l.b16 %v4192
      %v4209 = vunpack.c.l.b16 %v4193
      %v4210 = vunpack.c.l.b16 %v4194
      %v4211 = vunpack.c.l.b16 %v4195
      %v4212 = vunpack.c.l.b16 %v4196
      %v4213 = vunpack.c.l.b16 %v4197
      %v4214 = vunpack.c.l.b16 %v4198
      %v4215 = vpack.c.b16 %v4208, %v4207
      %v4216 = vpack.c.b16 %v4210, %v4209
      %v4217 = vpack.c.b16 %v4212, %v4211
      %v4218 = vpack.c.b16 %v4214, %v4213
      %v4224 = vsel %vm696, %v4189, 0
      %4226 = vmatprep.subr.bf16.mxu0 0
      %4227 = vmatpush1.bf16.msra.mxu0 %v4215
      %4228 = vmatprep.subr.bf16.mxu0 0
      %4229 = vmatpush1.bf16.msra.mxu0 %v4216
      %4230 = vmatprep.subr.bf16.mxu0 0
      %4231 = vmatpush1.bf16.msra.mxu0 %v4217
      %4232 = vmatprep.subr.bf16.mxu0 0
      %4233 = vmatpush1.bf16.msra.mxu0 %v4218
      %4234 = vmatprep.subr.bf16.mxu0 0
      %4235 = vmatpush1.bf16.msra.mxu0 0
      %4236 = vmatprep.subr.bf16.mxu0 0
      %4237 = vmatpush1.bf16.msra.mxu0 0
      %4238 = vmatprep.subr.bf16.mxu0 0
      %4239 = vmatpush1.bf16.msra.mxu0 0
      %4240 = vmatprep.subr.bf16.mxu0 0
      %4241 = vmatpush1.bf16.msra.mxu0 0
      %4242 = vmatprep.subr.bf16.mxu0 0
      %4243 = vmatpush1.bf16.msra.mxu0 0
      %4244 = vmatprep.subr.bf16.mxu0 0
      %4245 = vmatpush1.bf16.msra.mxu0 0
      %4246 = vmatprep.subr.bf16.mxu0 0
      %4247 = vmatpush1.bf16.msra.mxu0 0
      %4248 = vmatprep.subr.bf16.mxu0 0
      %4249 = vmatpush1.bf16.msra.mxu0 0
      %4250 = vmatprep.subr.bf16.mxu0 0
      %4251 = vmatpush1.bf16.msra.mxu0 0
      %4252 = vmatprep.subr.bf16.mxu0 0
      %4253 = vmatpush1.bf16.msra.mxu0 0
      %4254 = vmatprep.subr.bf16.mxu0 0
      %4255 = vmatpush1.bf16.msra.mxu0 0
      %4256 = vmatprep.subr.bf16.mxu0 0
      %4257 = vmatpush1.bf16.msra.mxu0 0
      %4258 = vmatprep.mubr.bf16.mxu0 0
      %4259 = vmatmul.mubr.bf16.gmra.mrb[0].mxu0 %v4224
      %v4260 = vpop.f32.mrb[0].mxu0
      %v4261 = vadd.f32 0.0, %v4260
      %v4262 = vpop.f32.mrb[0].mxu0
      %v4263 = vpop.f32.mrb[0].mxu0
      %v4264 = vadd.f32 0.0, %v4263
      %v4265 = vpop.f32.mrb[0].mxu0
      %4266 = vdwg.mxu0
      %v4267 = vadd.f32 %v4185, %v4261
      %v4268 = vadd.f32 %v4186, %v4264
      %v4269 = vld [vmem:[%s17] sm:$0x1]
      %v4271 = vlaneseq
      %v4272 = vshrl.u32 %v4271, 7
      %v4273 = vsub.s32 0, %v4272
      %v4274 = vrot.slane %v4269, %v4273
      %v4276 = vadd.f32 %v4267, %v4274
      %v4277 = vadd.f32 %v4268, %v4274
      %vm4278 = vcmp.ge.f32.partialorder %v4276, 0.0
      %vm4279 = vcmp.ge.f32.partialorder %v4277, 0.0
      %v4280 = vmul.f32 %v4276, 0.01
      %v4281 = vmul.f32 %v4277, 0.01
      %v4282 = vsel %vm4278, %v4276, %v4280
      %v4283 = vsel %vm4279, %v4277, %v4281
      %4284 = vst [vmem:[#allocation5 + $0x1] sm:$0xff] %v2820
      %4285 = vst [vmem:[#allocation5 + $0x9] sm:$0xff] %v2821
      %v4286 = vld [vmem:[#allocation5] sm:$0xff]
      %v4287 = vld [vmem:[#allocation5 + $0x8] sm:$0xff]
      %v4288 = vpack.c.bf16 %v4287, %v4286
      %v4289 = vld [vmem:[%s18] sm:$0xff]
      %v4290 = vld [vmem:[%s18 + $0x8] sm:$0xf]
      %v4291 = vld [vmem:[%s18 + $0xc] sm:$0xff]
      %v4292 = vld [vmem:[%s18 + $0x14] sm:$0xf]
      %v4293 = vld [vmem:[%s18 + $0x18] sm:$0xff]
      %v4294 = vld [vmem:[%s18 + $0x20] sm:$0xf]
      %v4295 = vld [vmem:[%s18 + $0x24] sm:$0xff]
      %v4296 = vld [vmem:[%s18 + $0x2c] sm:$0xf]
      %v4297 = vld [vmem:[%s18 + $0x30] sm:$0xff]
      %v4298 = vld [vmem:[%s18 + $0x38] sm:$0xf]
      %v4299 = vld [vmem:[%s18 + $0x3c] sm:$0xff]
      %v4300 = vld [vmem:[%s18 + $0x44] sm:$0xf]
      %v4301 = vld [vmem:[%s18 + $0x48] sm:$0xff]
      %v4302 = vld [vmem:[%s18 + $0x50] sm:$0xf]
      %v4303 = vld [vmem:[%s18 + $0x54] sm:$0xff]
      %v4304 = vld [vmem:[%s18 + $0x5c] sm:$0xf]
      %v4305 = vld [vmem:[%s18 + $0x60] sm:$0xff]
      %v4306 = vld [vmem:[%s18 + $0x68] sm:$0xf]
      %v4307 = vld [vmem:[%s18 + $0x6c] sm:$0xff]
      %v4308 = vld [vmem:[%s18 + $0x74] sm:$0xf]
      %v4309 = vld [vmem:[%s18 + $0x78] sm:$0xff]
      %v4310 = vld [vmem:[%s18 + $0x80] sm:$0xf]
      %v4311 = vld [vmem:[%s18 + $0x84] sm:$0xff]
      %v4312 = vld [vmem:[%s18 + $0x8c] sm:$0xf]
      %v4313 = vld [vmem:[%s18 + $0x90] sm:$0xff]
      %v4314 = vld [vmem:[%s18 + $0x98] sm:$0xf]
      %v4315 = vld [vmem:[%s18 + $0x9c] sm:$0xff]
      %v4316 = vld [vmem:[%s18 + $0xa4] sm:$0xf]
      %v4317 = vld [vmem:[%s18 + $0xa8] sm:$0xff]
      %v4318 = vld [vmem:[%s18 + $0xb0] sm:$0xf]
      %v4319 = vld [vmem:[%s18 + $0xb4] sm:$0xff]
      %v4320 = vld [vmem:[%s18 + $0xbc] sm:$0xf]
      %v4321 = vld [vmem:[#allocation5 + $0x1] sm:$0xff]
      %v4322 = vld [vmem:[#allocation5 + $0x9] sm:$0xff]
      %v4323 = vpack.c.bf16 %v4322, %v4321
      %s4324 = scalar_lea.vmem %s18, 192
      %v4325 = vld [vmem:[%s4324] sm:$0xff]
      %v4326 = vld [vmem:[%s4324 + $0x8] sm:$0xf]
      %v4327 = vld [vmem:[%s4324 + $0xc] sm:$0xff]
      %v4328 = vld [vmem:[%s4324 + $0x14] sm:$0xf]
      %v4329 = vld [vmem:[%s4324 + $0x18] sm:$0xff]
      %v4330 = vld [vmem:[%s4324 + $0x20] sm:$0xf]
      %v4331 = vld [vmem:[%s4324 + $0x24] sm:$0xff]
      %v4332 = vld [vmem:[%s4324 + $0x2c] sm:$0xf]
      %v4333 = vld [vmem:[%s4324 + $0x30] sm:$0xff]
      %v4334 = vld [vmem:[%s4324 + $0x38] sm:$0xf]
      %v4335 = vld [vmem:[%s4324 + $0x3c] sm:$0xff]
      %v4336 = vld [vmem:[%s4324 + $0x44] sm:$0xf]
      %v4337 = vld [vmem:[%s4324 + $0x48] sm:$0xff]
      %v4338 = vld [vmem:[%s4324 + $0x50] sm:$0xf]
      %v4339 = vld [vmem:[%s4324 + $0x54] sm:$0xff]
      %v4340 = vld [vmem:[%s4324 + $0x5c] sm:$0xf]
      %v4341 = vld [vmem:[%s4324 + $0x60] sm:$0xff]
      %v4342 = vld [vmem:[%s4324 + $0x68] sm:$0xf]
      %v4343 = vld [vmem:[%s4324 + $0x6c] sm:$0xff]
      %v4344 = vld [vmem:[%s4324 + $0x74] sm:$0xf]
      %v4345 = vld [vmem:[%s4324 + $0x78] sm:$0xff]
      %v4346 = vld [vmem:[%s4324 + $0x80] sm:$0xf]
      %v4347 = vld [vmem:[%s4324 + $0x84] sm:$0xff]
      %v4348 = vld [vmem:[%s4324 + $0x8c] sm:$0xf]
      %v4349 = vld [vmem:[%s4324 + $0x90] sm:$0xff]
      %v4350 = vld [vmem:[%s4324 + $0x98] sm:$0xf]
      %v4351 = vld [vmem:[%s4324 + $0x9c] sm:$0xff]
      %v4352 = vld [vmem:[%s4324 + $0xa4] sm:$0xf]
      %v4353 = vld [vmem:[%s4324 + $0xa8] sm:$0xff]
      %v4354 = vld [vmem:[%s4324 + $0xb0] sm:$0xf]
      %v4355 = vld [vmem:[%s4324 + $0xb4] sm:$0xff]
      %v4356 = vld [vmem:[%s4324 + $0xbc] sm:$0xf]
      %v4389 = vunpack.c.l.b16 %v4325
      %v4390 = vunpack.c.h.b16 %v4325
      %v4391 = vunpack.c.l.b16 %v4326
      %v4392 = vunpack.c.l.b16 %v4327
      %v4393 = vunpack.c.h.b16 %v4327
      %v4394 = vunpack.c.l.b16 %v4328
      %v4395 = vunpack.c.l.b16 %v4329
      %v4396 = vunpack.c.h.b16 %v4329
      %v4397 = vunpack.c.l.b16 %v4330
      %v4398 = vunpack.c.l.b16 %v4331
      %v4399 = vunpack.c.h.b16 %v4331
      %v4400 = vunpack.c.l.b16 %v4332
      %v4401 = vunpack.c.l.b16 %v4333
      %v4402 = vunpack.c.h.b16 %v4333
      %v4403 = vunpack.c.l.b16 %v4334
      %v4404 = vunpack.c.l.b16 %v4335
      %v4405 = vunpack.c.h.b16 %v4335
      %v4406 = vunpack.c.l.b16 %v4336
      %v4407 = vunpack.c.l.b16 %v4337
      %v4408 = vunpack.c.h.b16 %v4337
      %v4409 = vunpack.c.l.b16 %v4338
      %v4410 = vunpack.c.l.b16 %v4339
      %v4411 = vunpack.c.h.b16 %v4339
      %v4412 = vunpack.c.l.b16 %v4340
      %v4413 = vunpack.c.l.b16 %v4341
      %v4414 = vunpack.c.h.b16 %v4341
      %v4415 = vunpack.c.l.b16 %v4342
      %v4416 = vunpack.c.l.b16 %v4343
      %v4417 = vunpack.c.h.b16 %v4343
      %v4418 = vunpack.c.l.b16 %v4344
      %v4419 = vunpack.c.l.b16 %v4345
      %v4420 = vunpack.c.h.b16 %v4345
      %v4421 = vunpack.c.l.b16 %v4346
      %v4422 = vunpack.c.l.b16 %v4347
      %v4423 = vunpack.c.h.b16 %v4347
      %v4424 = vunpack.c.l.b16 %v4348
      %v4425 = vunpack.c.l.b16 %v4349
      %v4426 = vunpack.c.h.b16 %v4349
      %v4427 = vunpack.c.l.b16 %v4350
      %v4428 = vunpack.c.l.b16 %v4351
      %v4429 = vunpack.c.h.b16 %v4351
      %v4430 = vunpack.c.l.b16 %v4352
      %v4431 = vunpack.c.l.b16 %v4353
      %v4432 = vunpack.c.h.b16 %v4353
      %v4433 = vunpack.c.l.b16 %v4354
      %v4434 = vunpack.c.l.b16 %v4355
      %v4435 = vunpack.c.h.b16 %v4355
      %v4436 = vunpack.c.l.b16 %v4356
      %v4437 = vpack.c.b16 %v4392, %v4389
      %v4438 = vpack.c.b16 %v4393, %v4390
      %v4439 = vpack.c.b16 %v4394, %v4391
      %v4440 = vpack.c.b16 %v4398, %v4395
      %v4441 = vpack.c.b16 %v4399, %v4396
      %v4442 = vpack.c.b16 %v4400, %v4397
      %v4443 = vpack.c.b16 %v4404, %v4401
      %v4444 = vpack.c.b16 %v4405, %v4402
      %v4445 = vpack.c.b16 %v4406, %v4403
      %v4446 = vpack.c.b16 %v4410, %v4407
      %v4447 = vpack.c.b16 %v4411, %v4408
      %v4448 = vpack.c.b16 %v4412, %v4409
      %v4449 = vpack.c.b16 %v4416, %v4413
      %v4450 = vpack.c.b16 %v4417, %v4414
      %v4451 = vpack.c.b16 %v4418, %v4415
      %v4452 = vpack.c.b16 %v4422, %v4419
      %v4453 = vpack.c.b16 %v4423, %v4420
      %v4454 = vpack.c.b16 %v4424, %v4421
      %v4455 = vpack.c.b16 %v4428, %v4425
      %v4456 = vpack.c.b16 %v4429, %v4426
      %v4457 = vpack.c.b16 %v4430, %v4427
      %v4458 = vpack.c.b16 %v4434, %v4431
      %v4459 = vpack.c.b16 %v4435, %v4432
      %v4460 = vpack.c.b16 %v4436, %v4433
      %4485 = vmatprep.subr.bf16.mxu0 %v4438
      %4486 = vmatpush1.bf16.msra.mxu0 %v4437
      %4487 = vmatprep.subr.bf16.mxu0 %v4441
      %4488 = vmatpush1.bf16.msra.mxu0 %v4440
      %4489 = vmatprep.subr.bf16.mxu0 %v4444
      %4490 = vmatpush1.bf16.msra.mxu0 %v4443
      %4491 = vmatprep.subr.bf16.mxu0 %v4447
      %4492 = vmatpush1.bf16.msra.mxu0 %v4446
      %4493 = vmatprep.subr.bf16.mxu0 %v4450
      %4494 = vmatpush1.bf16.msra.mxu0 %v4449
      %4495 = vmatprep.subr.bf16.mxu0 %v4453
      %4496 = vmatpush1.bf16.msra.mxu0 %v4452
      %4497 = vmatprep.subr.bf16.mxu0 %v4456
      %4498 = vmatpush1.bf16.msra.mxu0 %v4455
      %4499 = vmatprep.subr.bf16.mxu0 %v4459
      %4500 = vmatpush1.bf16.msra.mxu0 %v4458
      %4501 = vmatprep.subr.bf16.mxu0 0
      %4502 = vmatpush1.bf16.msra.mxu0 0
      %4503 = vmatprep.subr.bf16.mxu0 0
      %4504 = vmatpush1.bf16.msra.mxu0 0
      %4505 = vmatprep.subr.bf16.mxu0 0
      %4506 = vmatpush1.bf16.msra.mxu0 0
      %4507 = vmatprep.subr.bf16.mxu0 0
      %4508 = vmatpush1.bf16.msra.mxu0 0
      %4509 = vmatprep.subr.bf16.mxu0 0
      %4510 = vmatpush1.bf16.msra.mxu0 0
      %4511 = vmatprep.subr.bf16.mxu0 0
      %4512 = vmatpush1.bf16.msra.mxu0 0
      %4513 = vmatprep.subr.bf16.mxu0 0
      %4514 = vmatpush1.bf16.msra.mxu0 0
      %4515 = vmatprep.subr.bf16.mxu0 0
      %4516 = vmatpush1.bf16.msra.mxu0 0
      %4517 = vmatprep.mubr.bf16.mxu0 0
      %4518 = vmatmul.mubr.bf16.gmra.mrb[0].mxu0 %v4323
      %v4519 = vpop.f32.mrb[0].mxu0
      %v4520 = vadd.f32 0.0, %v4519
      %v4521 = vpop.f32.mrb[0].mxu0
      %v4522 = vadd.f32 0.0, %v4521
      %v4523 = vpop.f32.mrb[0].mxu0
      %v4524 = vadd.f32 0.0, %v4523
      %v4525 = vpop.f32.mrb[0].mxu0
      %v4526 = vadd.f32 0.0, %v4525
      %4527 = vdwg.mxu0
      %4528 = vmatprep.subr.bf16.mxu0 0
      %4529 = vmatpush1.bf16.msra.mxu0 %v4439
      %4530 = vmatprep.subr.bf16.mxu0 0
      %4531 = vmatpush1.bf16.msra.mxu0 %v4442
      %4532 = vmatprep.subr.bf16.mxu0 0
      %4533 = vmatpush1.bf16.msra.mxu0 %v4445
      %4534 = vmatprep.subr.bf16.mxu0 0
      %4535 = vmatpush1.bf16.msra.mxu0 %v4448
      %4536 = vmatprep.subr.bf16.mxu0 0
      %4537 = vmatpush1.bf16.msra.mxu0 %v4451
      %4538 = vmatprep.subr.bf16.mxu0 0
      %4539 = vmatpush1.bf16.msra.mxu0 %v4454
      %4540 = vmatprep.subr.bf16.mxu0 0
      %4541 = vmatpush1.bf16.msra.mxu0 %v4457
      %4542 = vmatprep.subr.bf16.mxu0 0
      %4543 = vmatpush1.bf16.msra.mxu0 %v4460
      %4544 = vmatprep.subr.bf16.mxu0 0
      %4545 = vmatpush1.bf16.msra.mxu0 0
      %4546 = vmatprep.subr.bf16.mxu0 0
      %4547 = vmatpush1.bf16.msra.mxu0 0
      %4548 = vmatprep.subr.bf16.mxu0 0
      %4549 = vmatpush1.bf16.msra.mxu0 0
      %4550 = vmatprep.subr.bf16.mxu0 0
      %4551 = vmatpush1.bf16.msra.mxu0 0
      %4552 = vmatprep.subr.bf16.mxu0 0
      %4553 = vmatpush1.bf16.msra.mxu0 0
      %4554 = vmatprep.subr.bf16.mxu0 0
      %4555 = vmatpush1.bf16.msra.mxu0 0
      %4556 = vmatprep.subr.bf16.mxu0 0
      %4557 = vmatpush1.bf16.msra.mxu0 0
      %4558 = vmatprep.subr.bf16.mxu0 0
      %4559 = vmatpush1.bf16.msra.mxu0 0
      %4560 = vmatprep.mubr.bf16.mxu0 0
      %4561 = vmatmul.mubr.bf16.gmra.mrb[0].mxu0 %v4323
      %v4562 = vpop.f32.mrb[0].mxu0
      %v4563 = vadd.f32 0.0, %v4562
      %v4564 = vpop.f32.mrb[0].mxu0
      %v4565 = vpop.f32.mrb[0].mxu0
      %v4566 = vadd.f32 0.0, %v4565
      %v4567 = vpop.f32.mrb[0].mxu0
      %4568 = vdwg.mxu0
      %v4601 = vunpack.c.l.b16 %v4289
      %v4602 = vunpack.c.h.b16 %v4289
      %v4603 = vunpack.c.l.b16 %v4290
      %v4604 = vunpack.c.l.b16 %v4291
      %v4605 = vunpack.c.h.b16 %v4291
      %v4606 = vunpack.c.l.b16 %v4292
      %v4607 = vunpack.c.l.b16 %v4293
      %v4608 = vunpack.c.h.b16 %v4293
      %v4609 = vunpack.c.l.b16 %v4294
      %v4610 = vunpack.c.l.b16 %v4295
      %v4611 = vunpack.c.h.b16 %v4295
      %v4612 = vunpack.c.l.b16 %v4296
      %v4613 = vunpack.c.l.b16 %v4297
      %v4614 = vunpack.c.h.b16 %v4297
      %v4615 = vunpack.c.l.b16 %v4298
      %v4616 = vunpack.c.l.b16 %v4299
      %v4617 = vunpack.c.h.b16 %v4299
      %v4618 = vunpack.c.l.b16 %v4300
      %v4619 = vunpack.c.l.b16 %v4301
      %v4620 = vunpack.c.h.b16 %v4301
      %v4621 = vunpack.c.l.b16 %v4302
      %v4622 = vunpack.c.l.b16 %v4303
      %v4623 = vunpack.c.h.b16 %v4303
      %v4624 = vunpack.c.l.b16 %v4304
      %v4625 = vunpack.c.l.b16 %v4305
      %v4626 = vunpack.c.h.b16 %v4305
      %v4627 = vunpack.c.l.b16 %v4306
      %v4628 = vunpack.c.l.b16 %v4307
      %v4629 = vunpack.c.h.b16 %v4307
      %v4630 = vunpack.c.l.b16 %v4308
      %v4631 = vunpack.c.l.b16 %v4309
      %v4632 = vunpack.c.h.b16 %v4309
      %v4633 = vunpack.c.l.b16 %v4310
      %v4634 = vunpack.c.l.b16 %v4311
      %v4635 = vunpack.c.h.b16 %v4311
      %v4636 = vunpack.c.l.b16 %v4312
      %v4637 = vunpack.c.l.b16 %v4313
      %v4638 = vunpack.c.h.b16 %v4313
      %v4639 = vunpack.c.l.b16 %v4314
      %v4640 = vunpack.c.l.b16 %v4315
      %v4641 = vunpack.c.h.b16 %v4315
      %v4642 = vunpack.c.l.b16 %v4316
      %v4643 = vunpack.c.l.b16 %v4317
      %v4644 = vunpack.c.h.b16 %v4317
      %v4645 = vunpack.c.l.b16 %v4318
      %v4646 = vunpack.c.l.b16 %v4319
      %v4647 = vunpack.c.h.b16 %v4319
      %v4648 = vunpack.c.l.b16 %v4320
      %v4649 = vpack.c.b16 %v4604, %v4601
      %v4650 = vpack.c.b16 %v4605, %v4602
      %v4651 = vpack.c.b16 %v4606, %v4603
      %v4652 = vpack.c.b16 %v4610, %v4607
      %v4653 = vpack.c.b16 %v4611, %v4608
      %v4654 = vpack.c.b16 %v4612, %v4609
      %v4655 = vpack.c.b16 %v4616, %v4613
      %v4656 = vpack.c.b16 %v4617, %v4614
      %v4657 = vpack.c.b16 %v4618, %v4615
      %v4658 = vpack.c.b16 %v4622, %v4619
      %v4659 = vpack.c.b16 %v4623, %v4620
      %v4660 = vpack.c.b16 %v4624, %v4621
      %v4661 = vpack.c.b16 %v4628, %v4625
      %v4662 = vpack.c.b16 %v4629, %v4626
      %v4663 = vpack.c.b16 %v4630, %v4627
      %v4664 = vpack.c.b16 %v4634, %v4631
      %v4665 = vpack.c.b16 %v4635, %v4632
      %v4666 = vpack.c.b16 %v4636, %v4633
      %v4667 = vpack.c.b16 %v4640, %v4637
      %v4668 = vpack.c.b16 %v4641, %v4638
      %v4669 = vpack.c.b16 %v4642, %v4639
      %v4670 = vpack.c.b16 %v4646, %v4643
      %v4671 = vpack.c.b16 %v4647, %v4644
      %v4672 = vpack.c.b16 %v4648, %v4645
      %4697 = vmatprep.subr.bf16.mxu0 %v4650
      %4698 = vmatpush1.bf16.msra.mxu0 %v4649
      %4699 = vmatprep.subr.bf16.mxu0 %v4653
      %4700 = vmatpush1.bf16.msra.mxu0 %v4652
      %4701 = vmatprep.subr.bf16.mxu0 %v4656
      %4702 = vmatpush1.bf16.msra.mxu0 %v4655
      %4703 = vmatprep.subr.bf16.mxu0 %v4659
      %4704 = vmatpush1.bf16.msra.mxu0 %v4658
      %4705 = vmatprep.subr.bf16.mxu0 %v4662
      %4706 = vmatpush1.bf16.msra.mxu0 %v4661
      %4707 = vmatprep.subr.bf16.mxu0 %v4665
      %4708 = vmatpush1.bf16.msra.mxu0 %v4664
      %4709 = vmatprep.subr.bf16.mxu0 %v4668
      %4710 = vmatpush1.bf16.msra.mxu0 %v4667
      %4711 = vmatprep.subr.bf16.mxu0 %v4671
      %4712 = vmatpush1.bf16.msra.mxu0 %v4670
      %4713 = vmatprep.subr.bf16.mxu0 0
      %4714 = vmatpush1.bf16.msra.mxu0 0
      %4715 = vmatprep.subr.bf16.mxu0 0
      %4716 = vmatpush1.bf16.msra.mxu0 0
      %4717 = vmatprep.subr.bf16.mxu0 0
      %4718 = vmatpush1.bf16.msra.mxu0 0
      %4719 = vmatprep.subr.bf16.mxu0 0
      %4720 = vmatpush1.bf16.msra.mxu0 0
      %4721 = vmatprep.subr.bf16.mxu0 0
      %4722 = vmatpush1.bf16.msra.mxu0 0
      %4723 = vmatprep.subr.bf16.mxu0 0
      %4724 = vmatpush1.bf16.msra.mxu0 0
      %4725 = vmatprep.subr.bf16.mxu0 0
      %4726 = vmatpush1.bf16.msra.mxu0 0
      %4727 = vmatprep.subr.bf16.mxu0 0
      %4728 = vmatpush1.bf16.msra.mxu0 0
      %4729 = vmatprep.mubr.bf16.mxu0 0
      %4730 = vmatmul.mubr.bf16.gmra.mrb[0].mxu0 %v4288
      %v4731 = vpop.f32.mrb[0].mxu0
      %v4732 = vadd.f32 %v4520, %v4731
      %v4733 = vpop.f32.mrb[0].mxu0
      %v4734 = vadd.f32 %v4522, %v4733
      %v4735 = vpop.f32.mrb[0].mxu0
      %v4736 = vadd.f32 %v4524, %v4735
      %v4737 = vpop.f32.mrb[0].mxu0
      %v4738 = vadd.f32 %v4526, %v4737
      %4739 = vdwg.mxu0
      %4740 = vmatprep.subr.bf16.mxu0 0
      %4741 = vmatpush1.bf16.msra.mxu0 %v4651
      %4742 = vmatprep.subr.bf16.mxu0 0
      %4743 = vmatpush1.bf16.msra.mxu0 %v4654
      %4744 = vmatprep.subr.bf16.mxu0 0
      %4745 = vmatpush1.bf16.msra.mxu0 %v4657
      %4746 = vmatprep.subr.bf16.mxu0 0
      %4747 = vmatpush1.bf16.msra.mxu0 %v4660
      %4748 = vmatprep.subr.bf16.mxu0 0
      %4749 = vmatpush1.bf16.msra.mxu0 %v4663
      %4750 = vmatprep.subr.bf16.mxu0 0
      %4751 = vmatpush1.bf16.msra.mxu0 %v4666
      %4752 = vmatprep.subr.bf16.mxu0 0
      %4753 = vmatpush1.bf16.msra.mxu0 %v4669
      %4754 = vmatprep.subr.bf16.mxu0 0
      %4755 = vmatpush1.bf16.msra.mxu0 %v4672
      %4756 = vmatprep.subr.bf16.mxu0 0
      %4757 = vmatpush1.bf16.msra.mxu0 0
      %4758 = vmatprep.subr.bf16.mxu0 0
      %4759 = vmatpush1.bf16.msra.mxu0 0
      %4760 = vmatprep.subr.bf16.mxu0 0
      %4761 = vmatpush1.bf16.msra.mxu0 0
      %4762 = vmatprep.subr.bf16.mxu0 0
      %4763 = vmatpush1.bf16.msra.mxu0 0
      %4764 = vmatprep.subr.bf16.mxu0 0
      %4765 = vmatpush1.bf16.msra.mxu0 0
      %4766 = vmatprep.subr.bf16.mxu0 0
      %4767 = vmatpush1.bf16.msra.mxu0 0
      %4768 = vmatprep.subr.bf16.mxu0 0
      %4769 = vmatpush1.bf16.msra.mxu0 0
      %4770 = vmatprep.subr.bf16.mxu0 0
      %4771 = vmatpush1.bf16.msra.mxu0 0
      %4772 = vmatprep.mubr.bf16.mxu0 0
      %4773 = vmatmul.mubr.bf16.gmra.mrb[0].mxu0 %v4288
      %v4774 = vpop.f32.mrb[0].mxu0
      %v4775 = vadd.f32 %v4563, %v4774
      %v4776 = vpop.f32.mrb[0].mxu0
      %v4777 = vpop.f32.mrb[0].mxu0
      %v4778 = vadd.f32 %v4566, %v4777
      %v4779 = vpop.f32.mrb[0].mxu0
      %4780 = vdwg.mxu0
      %v4781 = vld [vmem:[#allocation5 + $0x2] sm:$0xff]
      %v4782 = vld [vmem:[#allocation5 + $0xa] sm:$0xff]
      %v4783 = vpack.c.bf16 %v4782, %v4781
      %s4784 = scalar_lea.vmem %s18, 384
      %v4785 = vld [vmem:[%s4784] sm:$0xff]
      %v4786 = vld [vmem:[%s4784 + $0x8] sm:$0xf]
      %v4787 = vld [vmem:[%s4784 + $0xc] sm:$0xff]
      %v4788 = vld [vmem:[%s4784 + $0x14] sm:$0xf]
      %v4789 = vld [vmem:[%s4784 + $0x18] sm:$0xff]
      %v4790 = vld [vmem:[%s4784 + $0x20] sm:$0xf]
      %v4791 = vld [vmem:[%s4784 + $0x24] sm:$0xff]
      %v4792 = vld [vmem:[%s4784 + $0x2c] sm:$0xf]
      %v4793 = vld [vmem:[%s4784 + $0x30] sm:$0xff]
      %v4794 = vld [vmem:[%s4784 + $0x38] sm:$0xf]
      %v4795 = vld [vmem:[%s4784 + $0x3c] sm:$0xff]
      %v4796 = vld [vmem:[%s4784 + $0x44] sm:$0xf]
      %v4797 = vld [vmem:[%s4784 + $0x48] sm:$0xff]
      %v4798 = vld [vmem:[%s4784 + $0x50] sm:$0xf]
      %v4799 = vld [vmem:[%s4784 + $0x54] sm:$0xff]
      %v4800 = vld [vmem:[%s4784 + $0x5c] sm:$0xf]
      %v4801 = vld [vmem:[%s4784 + $0x60] sm:$0xff]
      %v4802 = vld [vmem:[%s4784 + $0x68] sm:$0xf]
      %v4803 = vld [vmem:[%s4784 + $0x6c] sm:$0xff]
      %v4804 = vld [vmem:[%s4784 + $0x74] sm:$0xf]
      %v4805 = vld [vmem:[%s4784 + $0x78] sm:$0xff]
      %v4806 = vld [vmem:[%s4784 + $0x80] sm:$0xf]
      %v4807 = vld [vmem:[%s4784 + $0x84] sm:$0xff]
      %v4808 = vld [vmem:[%s4784 + $0x8c] sm:$0xf]
      %v4809 = vld [vmem:[%s4784 + $0x90] sm:$0xff]
      %v4810 = vld [vmem:[%s4784 + $0x98] sm:$0xf]
      %v4811 = vld [vmem:[%s4784 + $0x9c] sm:$0xff]
      %v4812 = vld [vmem:[%s4784 + $0xa4] sm:$0xf]
      %v4813 = vld [vmem:[%s4784 + $0xa8] sm:$0xff]
      %v4814 = vld [vmem:[%s4784 + $0xb0] sm:$0xf]
      %v4815 = vld [vmem:[%s4784 + $0xb4] sm:$0xff]
      %v4816 = vld [vmem:[%s4784 + $0xbc] sm:$0xf]
      %v4849 = vunpack.c.l.b16 %v4785
      %v4850 = vunpack.c.h.b16 %v4785
      %v4851 = vunpack.c.l.b16 %v4786
      %v4852 = vunpack.c.l.b16 %v4787
      %v4853 = vunpack.c.h.b16 %v4787
      %v4854 = vunpack.c.l.b16 %v4788
      %v4855 = vunpack.c.l.b16 %v4789
      %v4856 = vunpack.c.h.b16 %v4789
      %v4857 = vunpack.c.l.b16 %v4790
      %v4858 = vunpack.c.l.b16 %v4791
      %v4859 = vunpack.c.h.b16 %v4791
      %v4860 = vunpack.c.l.b16 %v4792
      %v4861 = vunpack.c.l.b16 %v4793
      %v4862 = vunpack.c.h.b16 %v4793
      %v4863 = vunpack.c.l.b16 %v4794
      %v4864 = vunpack.c.l.b16 %v4795
      %v4865 = vunpack.c.h.b16 %v4795
      %v4866 = vunpack.c.l.b16 %v4796
      %v4867 = vunpack.c.l.b16 %v4797
      %v4868 = vunpack.c.h.b16 %v4797
      %v4869 = vunpack.c.l.b16 %v4798
      %v4870 = vunpack.c.l.b16 %v4799
      %v4871 = vunpack.c.h.b16 %v4799
      %v4872 = vunpack.c.l.b16 %v4800
      %v4873 = vunpack.c.l.b16 %v4801
      %v4874 = vunpack.c.h.b16 %v4801
      %v4875 = vunpack.c.l.b16 %v4802
      %v4876 = vunpack.c.l.b16 %v4803
      %v4877 = vunpack.c.h.b16 %v4803
      %v4878 = vunpack.c.l.b16 %v4804
      %v4879 = vunpack.c.l.b16 %v4805
      %v4880 = vunpack.c.h.b16 %v4805
      %v4881 = vunpack.c.l.b16 %v4806
      %v4882 = vunpack.c.l.b16 %v4807
      %v4883 = vunpack.c.h.b16 %v4807
      %v4884 = vunpack.c.l.b16 %v4808
      %v4885 = vunpack.c.l.b16 %v4809
      %v4886 = vunpack.c.h.b16 %v4809
      %v4887 = vunpack.c.l.b16 %v4810
      %v4888 = vunpack.c.l.b16 %v4811
      %v4889 = vunpack.c.h.b16 %v4811
      %v4890 = vunpack.c.l.b16 %v4812
      %v4891 = vunpack.c.l.b16 %v4813
      %v4892 = vunpack.c.h.b16 %v4813
      %v4893 = vunpack.c.l.b16 %v4814
      %v4894 = vunpack.c.l.b16 %v4815
      %v4895 = vunpack.c.h.b16 %v4815
      %v4896 = vunpack.c.l.b16 %v4816
      %v4897 = vpack.c.b16 %v4852, %v4849
      %v4898 = vpack.c.b16 %v4853, %v4850
      %v4899 = vpack.c.b16 %v4854, %v4851
      %v4900 = vpack.c.b16 %v4858, %v4855
      %v4901 = vpack.c.b16 %v4859, %v4856
      %v4902 = vpack.c.b16 %v4860, %v4857
      %v4903 = vpack.c.b16 %v4864, %v4861
      %v4904 = vpack.c.b16 %v4865, %v4862
      %v4905 = vpack.c.b16 %v4866, %v4863
      %v4906 = vpack.c.b16 %v4870, %v4867
      %v4907 = vpack.c.b16 %v4871, %v4868
      %v4908 = vpack.c.b16 %v4872, %v4869
      %v4909 = vpack.c.b16 %v4876, %v4873
      %v4910 = vpack.c.b16 %v4877, %v4874
      %v4911 = vpack.c.b16 %v4878, %v4875
      %v4912 = vpack.c.b16 %v4882, %v4879
      %v4913 = vpack.c.b16 %v4883, %v4880
      %v4914 = vpack.c.b16 %v4884, %v4881
      %v4915 = vpack.c.b16 %v4888, %v4885
      %v4916 = vpack.c.b16 %v4889, %v4886
      %v4917 = vpack.c.b16 %v4890, %v4887
      %v4918 = vpack.c.b16 %v4894, %v4891
      %v4919 = vpack.c.b16 %v4895, %v4892
      %v4920 = vpack.c.b16 %v4896, %v4893
      %4945 = vmatprep.subr.bf16.mxu0 %v4898
      %4946 = vmatpush1.bf16.msra.mxu0 %v4897
      %4947 = vmatprep.subr.bf16.mxu0 %v4901
      %4948 = vmatpush1.bf16.msra.mxu0 %v4900
      %4949 = vmatprep.subr.bf16.mxu0 %v4904
      %4950 = vmatpush1.bf16.msra.mxu0 %v4903
      %4951 = vmatprep.subr.bf16.mxu0 %v4907
      %4952 = vmatpush1.bf16.msra.mxu0 %v4906
      %4953 = vmatprep.subr.bf16.mxu0 %v4910
      %4954 = vmatpush1.bf16.msra.mxu0 %v4909
      %4955 = vmatprep.subr.bf16.mxu0 %v4913
      %4956 = vmatpush1.bf16.msra.mxu0 %v4912
      %4957 = vmatprep.subr.bf16.mxu0 %v4916
      %4958 = vmatpush1.bf16.msra.mxu0 %v4915
      %4959 = vmatprep.subr.bf16.mxu0 %v4919
      %4960 = vmatpush1.bf16.msra.mxu0 %v4918
      %4961 = vmatprep.subr.bf16.mxu0 0
      %4962 = vmatpush1.bf16.msra.mxu0 0
      %4963 = vmatprep.subr.bf16.mxu0 0
      %4964 = vmatpush1.bf16.msra.mxu0 0
      %4965 = vmatprep.subr.bf16.mxu0 0
      %4966 = vmatpush1.bf16.msra.mxu0 0
      %4967 = vmatprep.subr.bf16.mxu0 0
      %4968 = vmatpush1.bf16.msra.mxu0 0
      %4969 = vmatprep.subr.bf16.mxu0 0
      %4970 = vmatpush1.bf16.msra.mxu0 0
      %4971 = vmatprep.subr.bf16.mxu0 0
      %4972 = vmatpush1.bf16.msra.mxu0 0
      %4973 = vmatprep.subr.bf16.mxu0 0
      %4974 = vmatpush1.bf16.msra.mxu0 0
      %4975 = vmatprep.subr.bf16.mxu0 0
      %4976 = vmatpush1.bf16.msra.mxu0 0
      %4977 = vmatprep.mubr.bf16.mxu0 0
      %4978 = vmatmul.mubr.bf16.gmra.mrb[0].mxu0 %v4783
      %v4979 = vpop.f32.mrb[0].mxu0
      %v4980 = vadd.f32 0.0, %v4979
      %v4981 = vpop.f32.mrb[0].mxu0
      %v4982 = vadd.f32 0.0, %v4981
      %v4983 = vpop.f32.mrb[0].mxu0
      %v4984 = vadd.f32 0.0, %v4983
      %v4985 = vpop.f32.mrb[0].mxu0
      %v4986 = vadd.f32 0.0, %v4985
      %4987 = vdwg.mxu0
      %4988 = vmatprep.subr.bf16.mxu0 0
      %4989 = vmatpush1.bf16.msra.mxu0 %v4899
      %4990 = vmatprep.subr.bf16.mxu0 0
      %4991 = vmatpush1.bf16.msra.mxu0 %v4902
      %4992 = vmatprep.subr.bf16.mxu0 0
      %4993 = vmatpush1.bf16.msra.mxu0 %v4905
      %4994 = vmatprep.subr.bf16.mxu0 0
      %4995 = vmatpush1.bf16.msra.mxu0 %v4908
      %4996 = vmatprep.subr.bf16.mxu0 0
      %4997 = vmatpush1.bf16.msra.mxu0 %v4911
      %4998 = vmatprep.subr.bf16.mxu0 0
      %4999 = vmatpush1.bf16.msra.mxu0 %v4914
      %5000 = vmatprep.subr.bf16.mxu0 0
      %5001 = vmatpush1.bf16.msra.mxu0 %v4917
      %5002 = vmatprep.subr.bf16.mxu0 0
      %5003 = vmatpush1.bf16.msra.mxu0 %v4920
      %5004 = vmatprep.subr.bf16.mxu0 0
      %5005 = vmatpush1.bf16.msra.mxu0 0
      %5006 = vmatprep.subr.bf16.mxu0 0
      %5007 = vmatpush1.bf16.msra.mxu0 0
      %5008 = vmatprep.subr.bf16.mxu0 0
      %5009 = vmatpush1.bf16.msra.mxu0 0
      %5010 = vmatprep.subr.bf16.mxu0 0
      %5011 = vmatpush1.bf16.msra.mxu0 0
      %5012 = vmatprep.subr.bf16.mxu0 0
      %5013 = vmatpush1.bf16.msra.mxu0 0
      %5014 = vmatprep.subr.bf16.mxu0 0
      %5015 = vmatpush1.bf16.msra.mxu0 0
      %5016 = vmatprep.subr.bf16.mxu0 0
      %5017 = vmatpush1.bf16.msra.mxu0 0
      %5018 = vmatprep.subr.bf16.mxu0 0
      %5019 = vmatpush1.bf16.msra.mxu0 0
      %5020 = vmatprep.mubr.bf16.mxu0 0
      %5021 = vmatmul.mubr.bf16.gmra.mrb[0].mxu0 %v4783
      %v5022 = vpop.f32.mrb[0].mxu0
      %v5023 = vadd.f32 0.0, %v5022
      %v5024 = vpop.f32.mrb[0].mxu0
      %v5025 = vpop.f32.mrb[0].mxu0
      %v5026 = vadd.f32 0.0, %v5025
      %v5027 = vpop.f32.mrb[0].mxu0
      %5028 = vdwg.mxu0
      %v5029 = vadd.f32 %v4732, %v4980
      %v5030 = vadd.f32 %v4734, %v4982
      %v5031 = vadd.f32 %v4775, %v5023
      %v5032 = vadd.f32 %v4736, %v4984
      %v5033 = vadd.f32 %v4738, %v4986
      %v5034 = vadd.f32 %v4778, %v5026
      %v5035 = vld [vmem:[%s19] sm:$0x7]
      %v5037 = vlaneseq
      %v5038 = vshrl.u32 %v5037, 7
      %v5039 = vsub.s32 0, %v5038
      %v5040 = vrot.slane %v5035, %v5039
      %v5041 = vlaneseq
      %v5042 = vshrl.u32 %v5041, 7
      %v5043 = vsub.s32 1, %v5042
      %v5044 = vrot.slane %v5035, %v5043
      %v5045 = vlaneseq
      %v5046 = vshrl.u32 %v5045, 7
      %v5047 = vsub.s32 2, %v5046
      %v5048 = vrot.slane %v5035, %v5047
      %v5052 = vadd.f32 %v5029, %v5040
      %v5053 = vadd.f32 %v5030, %v5044
      %v5054 = vadd.f32 %v5031, %v5048
      %v5055 = vadd.f32 %v5032, %v5040
      %v5056 = vadd.f32 %v5033, %v5044
      %v5057 = vadd.f32 %v5034, %v5048
      %v5064 = vrot.slane %v5052, 7
      %v5065 = vrot.slane %v5053, 7
      %v5066 = vrot.slane %v5054, 7
      %v5067 = vrot.slane %v5055, 7
      %v5068 = vsel %vm2657, %v5064, %v5067
      %v5069 = vrot.slane %v5056, 7
      %v5070 = vsel %vm2657, %v5065, %v5069
      %v5071 = vrot.slane %v5057, 7
      %v5072 = vsel %vm2657, %v5066, %v5071
      %5082 = vst [vmem:[#allocation6] sm:$0xfe] %v5064
      %5083 = vst [vmem:[#allocation6 + $0x8] sm:$0xfe] %v5065
      %5084 = vst [vmem:[#allocation6 + $0x10] sm:$0xfe] %v5066
      %5085 = vst [vmem:[#allocation6 + $0x18] sm:$0xff] %v5068
      %5086 = vst [vmem:[#allocation6 + $0x20] sm:$0xff] %v5070
      %5087 = vst [vmem:[#allocation6 + $0x28] sm:$0xff] %v5072
      %5088 = vst [vmem:[#allocation6 + $0x30] sm:$0x1] %v5067
      %5089 = vst [vmem:[#allocation6 + $0x38] sm:$0x1] %v5069
      %5090 = vst [vmem:[#allocation6 + $0x40] sm:$0x1] %v5071
      %v5091 = vld [vmem:[#allocation6] sm:$0xff]
      %v5092 = vld [vmem:[#allocation6 + $0x8] sm:$0xff]
      %v5093 = vld [vmem:[#allocation6 + $0x10] sm:$0xff]
      %v5094 = vld [vmem:[#allocation6 + $0x18] sm:$0xff]
      %v5095 = vld [vmem:[#allocation6 + $0x20] sm:$0xff]
      %v5096 = vld [vmem:[#allocation6 + $0x28] sm:$0xff]
      %v5097 = vld [vmem:[#allocation7] sm:$0xff]
      %v5098 = vld [vmem:[#allocation7 + $0x48] sm:$0xff]
      %v5099 = vmul.f32 %v5097, %v5091
      %v5100 = vmul.f32 %v5098, %v5094
      %v5101 = vadd.f32 %v5099, 0.0
      %v5102 = vadd.f32 %v5100, 0.0
      %v5103 = vld [vmem:[#allocation7 + $0x8] sm:$0xff]
      %v5104 = vld [vmem:[#allocation7 + $0x50] sm:$0xff]
      %v5105 = vmul.f32 %v5103, %v5092
      %v5106 = vmul.f32 %v5104, %v5095
      %v5107 = vadd.f32 %v5101, %v5105
      %v5108 = vadd.f32 %v5102, %v5106
      %v5109 = vld [vmem:[#allocation7 + $0x10] sm:$0xff]
      %v5110 = vld [vmem:[#allocation7 + $0x58] sm:$0xff]
      %v5111 = vmul.f32 %v5109, %v5093
      %v5112 = vmul.f32 %v5110, %v5096
      %v5113 = vadd.f32 %v5107, %v5111
      %v5114 = vadd.f32 %v5108, %v5112
      %v5115 = vld [vmem:[#allocation6] sm:$0xfe]
      %v5116 = vld [vmem:[#allocation6 + $0x8] sm:$0xfe]
      %v5117 = vld [vmem:[#allocation6 + $0x10] sm:$0xfe]
      %v5118 = vld [vmem:[#allocation6 + $0x30] sm:$0x1]
      %v5119 = vld [vmem:[#allocation6 + $0x38] sm:$0x1]
      %v5120 = vld [vmem:[#allocation6 + $0x40] sm:$0x1]
      %v5121 = vld [vmem:[#allocation7 + $0x18] sm:$0xff]
      %v5122 = vld [vmem:[#allocation7 + $0x60] sm:$0xff]
      %v5126 = vrot.slane %v5115, 1
      %v5127 = vrot.slane %v5094, 1
      %v5128 = vsel %vm2720, %v5126, %v5127
      %v5129 = vrot.slane %v5118, 1
      %v5130 = vsel %vm2720, %v5127, %v5129
      %v5133 = vmul.f32 %v5121, %v5128
      %v5134 = vmul.f32 %v5122, %v5130
      %v5135 = vadd.f32 %v5113, %v5133
      %v5136 = vadd.f32 %v5114, %v5134
      %v5137 = vld [vmem:[#allocation7 + $0x20] sm:$0xff]
      %v5138 = vld [vmem:[#allocation7 + $0x68] sm:$0xff]
      %v5142 = vrot.slane %v5116, 1
      %v5143 = vrot.slane %v5095, 1
      %v5144 = vsel %vm2720, %v5142, %v5143
      %v5145 = vrot.slane %v5119, 1
      %v5146 = vsel %vm2720, %v5143, %v5145
      %v5149 = vmul.f32 %v5137, %v5144
      %v5150 = vmul.f32 %v5138, %v5146
      %v5151 = vadd.f32 %v5135, %v5149
      %v5152 = vadd.f32 %v5136, %v5150
      %v5153 = vld [vmem:[#allocation7 + $0x28] sm:$0xff]
      %v5154 = vld [vmem:[#allocation7 + $0x70] sm:$0xff]
      %v5158 = vrot.slane %v5117, 1
      %v5159 = vrot.slane %v5096, 1
      %v5160 = vsel %vm2720, %v5158, %v5159
      %v5161 = vrot.slane %v5120, 1
      %v5162 = vsel %vm2720, %v5159, %v5161
      %v5165 = vmul.f32 %v5153, %v5160
      %v5166 = vmul.f32 %v5154, %v5162
      %v5167 = vadd.f32 %v5151, %v5165
      %v5168 = vadd.f32 %v5152, %v5166
      %v5169 = vld [vmem:[#allocation6] sm:$0xfc]
      %v5170 = vld [vmem:[#allocation6 + $0x8] sm:$0xfc]
      %v5171 = vld [vmem:[#allocation6 + $0x10] sm:$0xfc]
      %v5172 = vld [vmem:[#allocation6 + $0x30] sm:$0x3]
      %v5173 = vld [vmem:[#allocation6 + $0x38] sm:$0x3]
      %v5174 = vld [vmem:[#allocation6 + $0x40] sm:$0x3]
      %v5175 = vld [vmem:[#allocation7 + $0x30] sm:$0xff]
      %v5176 = vld [vmem:[#allocation7 + $0x78] sm:$0xff]
      %v5179 = vrot.slane %v5169, 2
      %v5180 = vrot.slane %v5094, 2
      %v5181 = vsel %vm2774, %v5179, %v5180
      %v5182 = vrot.slane %v5172, 2
      %v5183 = vsel %vm2774, %v5180, %v5182
      %v5186 = vmul.f32 %v5175, %v5181
      %v5187 = vmul.f32 %v5176, %v5183
      %v5188 = vadd.f32 %v5167, %v5186
      %v5189 = vadd.f32 %v5168, %v5187
      %v5190 = vld [vmem:[#allocation7 + $0x38] sm:$0xff]
      %v5191 = vld [vmem:[#allocation7 + $0x80] sm:$0xff]
      %v5194 = vrot.slane %v5170, 2
      %v5195 = vrot.slane %v5095, 2
      %v5196 = vsel %vm2774, %v5194, %v5195
      %v5197 = vrot.slane %v5173, 2
      %v5198 = vsel %vm2774, %v5195, %v5197
      %v5201 = vmul.f32 %v5190, %v5196
      %v5202 = vmul.f32 %v5191, %v5198
      %v5203 = vadd.f32 %v5188, %v5201
      %v5204 = vadd.f32 %v5189, %v5202
      %v5205 = vld [vmem:[#allocation7 + $0x40] sm:$0xff]
      %v5206 = vld [vmem:[#allocation7 + $0x88] sm:$0xff]
      %v5209 = vrot.slane %v5171, 2
      %v5210 = vrot.slane %v5096, 2
      %v5211 = vsel %vm2774, %v5209, %v5210
      %v5212 = vrot.slane %v5174, 2
      %v5213 = vsel %vm2774, %v5210, %v5212
      %v5216 = vmul.f32 %v5205, %v5211
      %v5217 = vmul.f32 %v5206, %v5213
      %v5218 = vadd.f32 %v5203, %v5216
      %v5219 = vadd.f32 %v5204, %v5217
      %vm5220 = vcmp.ge.f32.partialorder %v5218, 0.0
      %vm5221 = vcmp.ge.f32.partialorder %v5219, 0.0
      %v5222 = vmul.f32 %v5218, 0.01
      %v5223 = vmul.f32 %v5219, 0.01
      %v5224 = vsel %vm5220, %v5218, %v5222
      %v5225 = vsel %vm5221, %v5219, %v5223
      %v5226 = vadd.f32 %v5224, %v799
      %v5227 = vadd.f32 %v5225, %v802
      %5228 = vst [vmem:[%s684] sm:$0xff] %v5226
      %5229 = vst [vmem:[%s684 + $0x8] sm:$0xff] %v5227
      %5230 = vst.msk [vmem:[%s689] sm:$0xff] %vm696, %v4282
      %5231 = vst.msk [vmem:[%s689 + $0x8] sm:$0xff] %vm696, %v4283
      %p5232 = scmp.lt.s32.totalorder %s33, 1
      %s5233 = scalar_select %p5232, %s33, 1
      %s5234 = smul.addr %s5233, 2
      %s5235 = smul.addr %s5234, 8
      %s5236 = scalar_lea.vmem %s20, %s5235
      %p5237 = scmp.lt.s32.totalorder %s33, 1
      %s5238 = scalar_select %p5237, %s33, 1
      %s5239 = smul.addr %s5238, 2
      %s5240 = smul.addr %s5239, 8
      %s5241 = scalar_lea.vmem %s21, %s5240
      // Predicated region
      $region101: #{conv_block_apply.1} parent=99 // pred_check
        %p5242 = pneg %p481
      $region102: #{conv_block_apply.1} parent=99 // pred_check_branch
        %5244 = sbr.rel (%p5242) target = $region104
      $region103: #{conv_block_apply.1} parent=99 // pred_region
        _
      $region104: #{conv_block_apply.1} parent=99 // pred_fallthru
        _
      // Predicated region
      $region105: #{conv_block_apply.1} parent=99 // pred_check
        %p5245 = pneg %p507
      $region106: #{conv_block_apply.1} parent=99 // pred_check_branch
        %5247 = sbr.rel (%p5245) target = $region108
      $region107: #{conv_block_apply.1} parent=99 // pred_region
        _
      $region108: #{conv_block_apply.1} parent=99 // pred_fallthru
        _
    $region100: #{conv_block_apply.1} parent=5 // pred_fallthru
      _
    %p5248 = scmp.le.s32.totalorder 2, %s28
    // Predicated region
    $region109: #{conv_block_apply.1} parent=5 // pred_check
      %p5249 = pneg %p5248
    $region110: #{conv_block_apply.1} parent=5 // pred_check_branch
      %5251 = sbr.rel (%p5249) target = $region112
    $region111: #{conv_block_apply.1} parent=5 // pred_region
      %s5252 = ssub.s32 %s28, 2
      // Predicated region
      $region113: #{conv_block_apply.1} parent=111 // pred_check
        %p5253 = pneg %p487
      $region114: #{conv_block_apply.1} parent=111 // pred_check_branch
        %5255 = sbr.rel (%p5253) target = $region116
      $region115: #{conv_block_apply.1} parent=111 // pred_region
        %p5256 = scmp.lt.s32.totalorder %s34, 1
        %s5257 = scalar_select %p5256, %s34, 1
        %s5258 = smul.addr %s5257, 2
        %s5259 = smul.addr %s5258, 8
        %s5260 = scalar_lea.vmem %s20, %s5259
      $region116: #{conv_block_apply.1} parent=111 // pred_fallthru
        _
      // Predicated region
      $region117: #{conv_block_apply.1} parent=111 // pred_check
        %p5261 = pneg %p513
      $region118: #{conv_block_apply.1} parent=111 // pred_check_branch
        %5263 = sbr.rel (%p5261) target = $region120
      $region119: #{conv_block_apply.1} parent=111 // pred_region
        %p5264 = scmp.lt.s32.totalorder %s34, 1
        %s5265 = scalar_select %p5264, %s34, 1
        %s5266 = smul.addr %s5265, 2
        %s5267 = smul.addr %s5266, 8
        %s5268 = scalar_lea.vmem %s21, %s5267
      $region120: #{conv_block_apply.1} parent=111 // pred_fallthru
        _
    $region112: #{conv_block_apply.1} parent=5 // pred_fallthru
      _
  $region6: #{conv_block_apply.1} parent=0 // loop_footer
    %s32 = sadd.s32 1, %s28
  $region7: #{conv_block_apply.1} parent=0 // loop_footer_branch
    %27 = sbr.rel target = $region3
  $region8: #{conv_block_apply.1} parent=0 // loop_exit
    _

</llo_original>
